<compile_context>
chip_gen: v7x
topology: tpu7x:2x2x1
jax: 0.10.0
libtpu: 0.0.40
codegen_flags: <defaults>
</compile_context>

<pallas_src>
import functools
import numpy as np
import jax
import jax.numpy as jnp
from jax.experimental import pallas as pl
from jax.experimental.pallas import tpu as pltpu


# ------------------------------- helpers -----------------------------------

def _gelu(x):
    # tanh-approx GELU  # TODO(synk): PyTorch default is exact erf GELU
    return 0.5 * x * (1.0 + jnp.tanh(0.7978845608028654 * (x + 0.044715 * x * x * x)))


def _layernorm(x, g, b, eps=1e-5):
    mean = jnp.mean(x, axis=-1, keepdims=True)
    c = x - mean
    var = jnp.mean(c * c, axis=-1, keepdims=True)
    return c * jax.lax.rsqrt(var + eps) * g + b


def _rep_spec(shape):
    """Full-array block with a grid-invariant index map (fetched once, any grid rank)."""
    nd = len(shape)
    return pl.BlockSpec(shape, lambda *_unused, _nd=nd: (0,) * _nd)


# --------------------------- kernel 1: stem ---------------------------------
# conv1(k3,pad1)+GELU -> conv2(k3,pad1)+GELU -> Linear(H,H) -> + time embedding
# All rows of the batch tile are folded into the sublane dimension (Bt*T rows).

def _stem_kernel(x_ref, kp_ref, kn_ref, c1w_ref, c1b_ref, c2w_ref, c2b_ref,
                 embw_ref, embb_ref, tc_ref, o_ref):
    x = x_ref[...]                                   # (rows, F) f32
    kp = kp_ref[...]                                 # (rows, 1) zero at segment starts
    kn = kn_ref[...]                                 # (rows, 1) zero at segment ends

    def conv3_gelu(h, w_ref, b_ref):
        # out[t] = w0·h[t-1] + w1·h[t] + w2·h[t+1] with per-batch zero padding,
        # folded into ONE matmul against the pre-reshaped (3*Cin, Cout) weight.
        n = h.shape[0]
        h_prev = kp * pltpu.roll(h, shift=1, axis=0)
        h_next = kn * pltpu.roll(h, shift=n - 1, axis=0)
        hcat = jnp.concatenate([h_prev, h, h_next], axis=-1).astype(jnp.bfloat16)
        y = jnp.dot(hcat, w_ref[...], preferred_element_type=jnp.float32) + b_ref[...]
        return _gelu(y)

    h1 = conv3_gelu(x, c1w_ref, c1b_ref)             # (rows, H/2)
    h2 = conv3_gelu(h1, c2w_ref, c2b_ref)            # (rows, H)
    emb = jnp.dot(h2.astype(jnp.bfloat16), embw_ref[...],
                  preferred_element_type=jnp.float32) + embb_ref[...]
    # batch-invariant time embedding precomputed in the wrapper
    o_ref[...] = emb + tc_ref[...]


def pallas_stem(x2, kp, kn, timecode, p, *, seq, bt, num_bt):
    BT, F = x2.shape
    H = p['emb_w'].shape[0]
    rows = bt * seq
    ins = (x2, kp, kn, p['conv1_w'], p['conv1_b'], p['conv2_w'], p['conv2_b'],
           p['emb_w'], p['emb_b'], timecode)
    in_specs = [pl.BlockSpec((rows, F), lambda b: (b, 0))]
    in_specs += [_rep_spec(a.shape) for a in ins[1:]]
    return pl.pallas_call(
        _stem_kernel,
        out_shape=jax.ShapeDtypeStruct((BT, H), jnp.float32),
        grid=(num_bt,),
        in_specs=in_specs,
        out_specs=pl.BlockSpec((rows, H), lambda b: (b, 0)),
        compiler_params=pltpu.CompilerParams(
            dimension_semantics=("parallel",),
            vmem_limit_bytes=64 * 1024 * 1024),
    )(*ins)


# -------------- kernel 2: stacked PyraFormer blocks + actor/critic heads ----
# grid = (batch_tiles [parallel], n_layers [arbitrary]).  Activation tile is kept in a
# VMEM scratch across the layer axis; per-layer weights are indexed by the layer axis so
# the pipeline prefetches layer l+1 while layer l computes.  On the last layer the final
# LayerNorm (last timestep only) and both head MLPs run and write logits/values.

def _blocks_heads_kernel(x_ref,
                         n1g_ref, n1b_ref, wqkv_ref, bqkv_ref, wo_ref, bo_ref,
                         n2g_ref, n2b_ref, f1w_ref, f1b_ref, f2w_ref, f2b_ref,
                         fng_ref, fnb_ref,
                         aw0, ab0, aw1, ab1, aw2, ab2, aw3, ab3,
                         cw0, cb0, cw1, cb1, cw2, cb2, cw3, cb3,
                         logits_ref, values_ref,
                         h_ref,
                         *, n_heads, head_dim, bt, seq):
    l = pl.program_id(1)
    n_layers = pl.num_programs(1)
    H = n_heads * head_dim

    @pl.when(l == 0)
    def _():
        h_ref[...] = x_ref[...]

    x = h_ref[...]                                    # (bt*seq, H) f32

    # ---- attention sub-layer ----
    xn = _layernorm(x, n1g_ref[0], n1b_ref[0]).astype(jnp.bfloat16)
    qkv = jnp.dot(xn, wqkv_ref[0], preferred_element_type=jnp.float32) + bqkv_ref[0]
    q = qkv[:, :H].reshape(bt, seq, H)
    k = qkv[:, H:2 * H].reshape(bt, seq, H)
    v = qkv[:, 2 * H:].reshape(bt, seq, H).astype(jnp.bfloat16)

    ii = jax.lax.broadcasted_iota(jnp.int32, (seq, seq), 0)
    jj = jax.lax.broadcasted_iota(jnp.int32, (seq, seq), 1)
    dist = jnp.abs(ii - jj)

    inv_sqrt_d = 1.0 / (head_dim ** 0.5)
    n_dil = min(5, n_heads)
    wof = wo_ref[0]                                   # (H, H) bf16

    acc = None
    for h in range(n_heads):                          # static unroll over heads
        sl = slice(h * head_dim, (h + 1) * head_dim)
        qh = q[:, :, sl].astype(jnp.bfloat16)
        kh = k[:, :, sl].astype(jnp.bfloat16)
        s = jnp.einsum('btd,bsd->bts', qh, kh,
                       preferred_element_type=jnp.float32) * inv_sqrt_d
        # log-sparse pyramidal mask generated from iota right before use
        # (at most one dense (T,T) mask live at a time -> no VMEM blow-up at large T)
        m = min(h, n_dil - 1)
        keep = (dist <= (2 ** m)) | ((dist & (2 ** (1 + m) - 1)) == 0)
        s = jnp.where(keep[None, :, :], s, -1e30)
        s = s - jnp.max(s, axis=-1, keepdims=True)
        p = jnp.exp(s)
        p = p / jnp.sum(p, axis=-1, keepdims=True)    # exact softmax normalization
        o_h = jnp.einsum('bts,bsd->btd', p.astype(jnp.bfloat16), v[:, :, sl],
                         preferred_element_type=jnp.float32)
        # block out-projection: concat(heads) @ Wo == sum_h o_h @ Wo[h*hd:(h+1)*hd, :]
        contrib = jnp.dot(o_h.reshape(bt * seq, head_dim).astype(jnp.bfloat16),
                          wof[sl, :], preferred_element_type=jnp.float32)
        acc = contrib if acc is None else acc + contrib

    x = x + acc + bo_ref[0]                           # residual (dropout = identity)

    # ---- feed-forward sub-layer ----
    xn2 = _layernorm(x, n2g_ref[0], n2b_ref[0]).astype(jnp.bfloat16)
    ffh = _gelu(jnp.dot(xn2, f1w_ref[0], preferred_element_type=jnp.float32) + f1b_ref[0])
    ff = jnp.dot(ffh.astype(jnp.bfloat16), f2w_ref[0],
                 preferred_element_type=jnp.float32) + f2b_ref[0]
    x = x + ff
    h_ref[...] = x                                    # carry to the next layer in VMEM

    # ---- fused heads on the last layer ----
    @pl.when(l == n_layers - 1)
    def _():
        last = x.reshape(bt, seq, H)[:, seq - 1, :]   # (bt, H) last timestep per batch
        z = _layernorm(last, fng_ref[...], fnb_ref[...])

        def mlp(zz, layers):
            for i, (w, b) in enumerate(layers):
                zz = jnp.dot(zz.astype(jnp.bfloat16), w[...],
                             preferred_element_type=jnp.float32) + b[...]
                if i < len(layers) - 1:
                    zz = _gelu(zz)
            return zz

        logits_ref[...] = mlp(z, [(aw0, ab0), (aw1, ab1), (aw2, ab2), (aw3, ab3)])
        values_ref[...] = mlp(z, [(cw0, cb0), (cw1, cb1), (cw2, cb2), (cw3, cb3)])


def pallas_blocks_heads(h, p, *, n_heads, seq, bt, num_bt):
    BT, H = h.shape
    L = p['wqkv'].shape[0]
    rows = bt * seq
    action_dim = p['actor_w'][-1].shape[1]

    per_layer = [p['n1_g'], p['n1_b'], p['wqkv'], p['bqkv'], p['wo'], p['bo'],
                 p['n2_g'], p['n2_b'], p['ff1_w'], p['ff1_b'], p['ff2_w'], p['ff2_b']]
    heads = [p['fn_g'], p['fn_b']]
    for w, b in zip(p['actor_w'], p['actor_b']):
        heads += [w, b]
    for w, b in zip(p['critic_w'], p['critic_b']):
        heads += [w, b]
    ins = [h] + per_layer + heads

    in_specs = [pl.BlockSpec((rows, H), lambda b, l: (b, 0))]
    # per-layer stacked weights: indexed by the layer grid axis (prefetch of layer l+1)
    for a in per_layer:
        nd = len(a.shape)
        in_specs.append(pl.BlockSpec((1,) + a.shape[1:],
                                     lambda b, l, _nd=nd: (l,) + (0,) * (_nd - 1)))
    # grid-invariant head weights: constant index map -> fetched once
    for a in heads:
        in_specs.append(_rep_spec(a.shape))

    kernel = functools.partial(_blocks_heads_kernel, n_heads=n_heads,
                               head_dim=H // n_heads, bt=bt, seq=seq)
    return pl.pallas_call(
        kernel,
        out_shape=(jax.ShapeDtypeStruct((num_bt * bt, action_dim), jnp.float32),
                   jax.ShapeDtypeStruct((num_bt * bt, 1), jnp.float32)),
        grid=(num_bt, L),
        in_specs=in_specs,
        out_specs=(pl.BlockSpec((bt, action_dim), lambda b, l: (b, 0)),
                   pl.BlockSpec((bt, 1), lambda b, l: (b, 0))),
        scratch_shapes=[pltpu.VMEM((rows, H), jnp.float32)],
        compiler_params=pltpu.CompilerParams(
            dimension_semantics=("parallel", "arbitrary"),
            vmem_limit_bytes=64 * 1024 * 1024),
    )(*ins)


# ------------------------------ params / forward ----------------------------

def init_params(key, window_size, n_features, action_dim, hidden_dim, n_heads, n_layers):
    H = hidden_dim
    L = n_layers
    keys = iter(jax.random.split(key, 1024))

    def w_init(shape, fan_in):
        # deterministic scaled-normal stand-in for orthogonal init; matmul weights in bf16
        return (jax.random.normal(next(keys), shape, jnp.float32)
                / np.sqrt(fan_in)).astype(jnp.bfloat16)

    p = {}
    # conv weights stored pre-folded as (3*Cin, Cout) for the single-matmul 3-tap conv
    p['conv1_w'] = w_init((3 * n_features, H // 2), 3 * n_features)
    p['conv1_b'] = jnp.zeros((1, H // 2), jnp.float32)
    p['conv2_w'] = w_init((3 * (H // 2), H), 3 * (H // 2))
    p['conv2_b'] = jnp.zeros((1, H), jnp.float32)
    p['emb_w'] = w_init((H, H), H)
    p['emb_b'] = jnp.zeros((1, H), jnp.float32)
    p['pos_emb'] = jnp.zeros((window_size, H), jnp.float32)       # nn.Parameter(zeros)
    # temporal encoder (evaluated once in the wrapper, f32)
    p['temp1_w'] = jax.random.normal(next(keys), (1, H // 2), jnp.float32)
    p['temp1_b'] = jnp.zeros((1, H // 2), jnp.float32)
    p['temp2_w'] = jax.random.normal(next(keys), (H // 2, H), jnp.float32) / np.sqrt(H // 2)
    p['temp2_b'] = jnp.zeros((1, H), jnp.float32)

    def stack(make):
        return jnp.stack([make() for _ in range(L)], axis=0)

    # per-layer weights stacked along a leading (L, ...) axis
    p['n1_g'] = jnp.ones((L, 1, H), jnp.float32)
    p['n1_b'] = jnp.zeros((L, 1, H), jnp.float32)
    p['wqkv'] = stack(lambda: w_init((H, 3 * H), H))              # fused Q|K|V projection
    p['bqkv'] = jnp.zeros((L, 1, 3 * H), jnp.float32)
    p['wo'] = stack(lambda: w_init((H, H), H))
    p['bo'] = jnp.zeros((L, 1, H), jnp.float32)
    p['n2_g'] = jnp.ones((L, 1, H), jnp.float32)
    p['n2_b'] = jnp.zeros((L, 1, H), jnp.float32)
    p['ff1_w'] = stack(lambda: w_init((H, 4 * H), H))
    p['ff1_b'] = jnp.zeros((L, 1, 4 * H), jnp.float32)
    p['ff2_w'] = stack(lambda: w_init((4 * H, H), 4 * H))
    p['ff2_b'] = jnp.zeros((L, 1, H), jnp.float32)

    p['fn_g'] = jnp.ones((1, H), jnp.float32)
    p['fn_b'] = jnp.zeros((1, H), jnp.float32)

    def mlp(dims):
        ws, bs = [], []
        for a, b in zip(dims[:-1], dims[1:]):
            ws.append(w_init((a, b), a))
            bs.append(jnp.zeros((1, b), jnp.float32))
        return ws, bs

    p['actor_w'], p['actor_b'] = mlp([H, 128, 256, 128, action_dim])
    p['critic_w'], p['critic_b'] = mlp([H, 128, 256, 128, 1])
    return p


def forward(params, x, *, n_heads, batch_tile=None):
    B, T, F = x.shape
    H = params['emb_w'].shape[0]

    # choose a batch tile: fold batches into rows targeting ~128 sublane rows per tile,
    # while keeping a leading "parallel" grid axis available when B is large.
    if batch_tile is None:
        bt = min(B, max(1, 128 // T))
        while B % bt:
            bt -= 1
        if (bt * T) % 8 != 0 and bt != B:
            bt = B
    else:
        bt = batch_tile
    num_bt = B // bt

    # batch-invariant time embedding: pos_emb + temporal MLP of t = 0..T-1 (computed once
    # in XLA, exact-erf GELU here since it is outside the kernel), tiled over the batch tile.
    t = jnp.arange(T, dtype=jnp.float32)[:, None]
    tcode = jax.nn.gelu(t @ params['temp1_w'] + params['temp1_b'], approximate=False)
    tcode = tcode @ params['temp2_w'] + params['temp2_b']
    timecode = params['pos_emb'][:T] + tcode                       # (T, H)
    timecode_tile = jnp.tile(timecode, (bt, 1))                    # (bt*T, H)

    # per-batch-segment zero-padding masks for the k=3 convs (rows folded as B*T)
    kp = np.ones((bt * T, 1), np.float32); kp[0::T] = 0.0          # no h[t-1] at t == 0
    kn = np.ones((bt * T, 1), np.float32); kn[T - 1::T] = 0.0      # no h[t+1] at t == T-1

    x2 = x.reshape(B * T, F)
    h = pallas_stem(x2, jnp.asarray(kp), jnp.asarray(kn), timecode_tile, params,
                    seq=T, bt=bt, num_bt=num_bt)                   # (B*T, H)
    return pallas_blocks_heads(h, params, n_heads=n_heads, seq=T, bt=bt, num_bt=num_bt)


if __name__ == "__main__":
    B, T, F = 2, 8, 4            # batch, window_size, n_features
    H, n_heads, n_layers, action_dim = 32, 4, 2, 3

    key = jax.random.PRNGKey(0)
    pkey, xkey = jax.random.split(key)
    params = init_params(pkey, T, F, action_dim, H, n_heads, n_layers)
    x = jax.random.normal(xkey, (B, T, F), dtype=jnp.float32)

    fwd = jax.jit(functools.partial(forward, n_heads=n_heads))
    logits, values = fwd(params, x)
    jax.block_until_ready((logits, values))

    assert logits.shape == (B, action_dim), logits.shape
    assert values.shape == (B, 1), values.shape
    assert bool(jnp.all(jnp.isfinite(logits))) and bool(jnp.all(jnp.isfinite(values)))
    print("KERNEL_OK")
</pallas_src>

<mosaic_0001>
module attributes {stable_mosaic.version = 11 : i64} {
  func.func @_stem_kernel(%arg0: i32, %arg1: memref<16x4xf32, #tpu.memory_space<vmem>>, %arg2: memref<16x1xf32, #tpu.memory_space<vmem>>, %arg3: memref<16x1xf32, #tpu.memory_space<vmem>>, %arg4: memref<12x16xbf16, #tpu.memory_space<vmem>>, %arg5: memref<1x16xf32, #tpu.memory_space<vmem>>, %arg6: memref<48x32xbf16, #tpu.memory_space<vmem>>, %arg7: memref<1x32xf32, #tpu.memory_space<vmem>>, %arg8: memref<32x32xbf16, #tpu.memory_space<vmem>>, %arg9: memref<1x32xf32, #tpu.memory_space<vmem>>, %arg10: memref<16x32xf32, #tpu.memory_space<vmem>>, %arg11: memref<16x32xf32, #tpu.memory_space<vmem>>) attributes {dimension_semantics = [#tpu.dimension_semantics<parallel>], iteration_bounds = array<i64: 1>, scalar_prefetch = 0 : i64, scratch_operands = 0 : i64, tpu.core_type = #tpu.core_type<tc>, window_params = [{transform_indices = @transform_0, window_bounds = array<i64: 16, 4>}, {pipeline_mode = #tpu.pipeline_mode<synchronous>, transform_indices = @transform_1, window_bounds = array<i64: 16, 1>}, {pipeline_mode = #tpu.pipeline_mode<synchronous>, transform_indices = @transform_2, window_bounds = array<i64: 16, 1>}, {pipeline_mode = #tpu.pipeline_mode<synchronous>, transform_indices = @transform_3, window_bounds = array<i64: 12, 16>}, {pipeline_mode = #tpu.pipeline_mode<synchronous>, transform_indices = @transform_4, window_bounds = array<i64: 1, 16>}, {pipeline_mode = #tpu.pipeline_mode<synchronous>, transform_indices = @transform_5, window_bounds = array<i64: 48, 32>}, {pipeline_mode = #tpu.pipeline_mode<synchronous>, transform_indices = @transform_6, window_bounds = array<i64: 1, 32>}, {pipeline_mode = #tpu.pipeline_mode<synchronous>, transform_indices = @transform_7, window_bounds = array<i64: 32, 32>}, {pipeline_mode = #tpu.pipeline_mode<synchronous>, transform_indices = @transform_8, window_bounds = array<i64: 1, 32>}, {pipeline_mode = #tpu.pipeline_mode<synchronous>, transform_indices = @transform_9, window_bounds = array<i64: 16, 32>}, {transform_indices = @transform_10, window_bounds = array<i64: 16, 32>}]} {
    %c0 = arith.constant 0 : index
    %c0_0 = arith.constant 0 : index
    %0 = vector.load %arg1[%c0, %c0_0] : memref<16x4xf32, #tpu.memory_space<vmem>>, vector<16x4xf32>
    %c0_1 = arith.constant 0 : index
    %c0_2 = arith.constant 0 : index
    %1 = vector.load %arg2[%c0_1, %c0_2] : memref<16x1xf32, #tpu.memory_space<vmem>>, vector<16x1xf32>
    %c0_3 = arith.constant 0 : index
    %c0_4 = arith.constant 0 : index
    %2 = vector.load %arg3[%c0_3, %c0_4] : memref<16x1xf32, #tpu.memory_space<vmem>>, vector<16x1xf32>
    %c1_i32 = arith.constant 1 : i32
    %3 = tpu.dynamic_rotate %0 by %c1_i32 dim 0 : vector<16x4xf32>, i32 -> vector<16x4xf32>
    %4 = vector.broadcast %1 : vector<16x1xf32> to vector<16x4xf32>
    %5 = arith.mulf %4, %3 : vector<16x4xf32>
    %c15_i32 = arith.constant 15 : i32
    %6 = tpu.dynamic_rotate %0 by %c15_i32 dim 0 : vector<16x4xf32>, i32 -> vector<16x4xf32>
    %7 = vector.broadcast %2 : vector<16x1xf32> to vector<16x4xf32>
    %8 = arith.mulf %7, %6 : vector<16x4xf32>
    %9 = tpu.concatenate %5, %0, %8 in 1 : vector<16x4xf32>, vector<16x4xf32>, vector<16x4xf32> -> vector<16x12xf32>
    %10 = arith.truncf %9 : vector<16x12xf32> to vector<16x12xbf16>
    %c0_5 = arith.constant 0 : index
    %c0_6 = arith.constant 0 : index
    %11 = vector.load %arg4[%c0_5, %c0_6] : memref<12x16xbf16, #tpu.memory_space<vmem>>, vector<12x16xbf16>
    %cst = arith.constant dense<0.000000e+00> : vector<16x16xf32>
    %12 = tpu.matmul %10, %11, %cst {dimension_numbers = #tpu.dot_dimension_numbers<[1], [0], [0], [1], [0, 0, 1, 1], [], []>} : vector<16x12xbf16>, vector<12x16xbf16>, vector<16x16xf32> -> vector<16x16xf32>
    %c0_7 = arith.constant 0 : index
    %c0_8 = arith.constant 0 : index
    %13 = vector.load %arg5[%c0_7, %c0_8] : memref<1x16xf32, #tpu.memory_space<vmem>>, vector<1x16xf32>
    %14 = vector.broadcast %13 : vector<1x16xf32> to vector<16x16xf32>
    %15 = arith.addf %12, %14 : vector<16x16xf32>
    %cst_9 = arith.constant 5.000000e-01 : f32
    %16 = vector.broadcast %cst_9 : f32 to vector<16x16xf32>
    %17 = arith.mulf %16, %15 : vector<16x16xf32>
    %cst_10 = arith.constant 4.471500e-02 : f32
    %18 = vector.broadcast %cst_10 : f32 to vector<16x16xf32>
    %19 = arith.mulf %18, %15 : vector<16x16xf32>
    %20 = arith.mulf %19, %15 : vector<16x16xf32>
    %21 = arith.mulf %20, %15 : vector<16x16xf32>
    %22 = arith.addf %15, %21 : vector<16x16xf32>
    %cst_11 = arith.constant 0.797884583 : f32
    %23 = vector.broadcast %cst_11 : f32 to vector<16x16xf32>
    %24 = arith.mulf %23, %22 : vector<16x16xf32>
    %25 = math.tanh %24 : vector<16x16xf32>
    %cst_12 = arith.constant 1.000000e+00 : f32
    %26 = vector.broadcast %cst_12 : f32 to vector<16x16xf32>
    %27 = arith.addf %26, %25 : vector<16x16xf32>
    %28 = arith.mulf %17, %27 : vector<16x16xf32>
    %c1_i32_13 = arith.constant 1 : i32
    %29 = tpu.dynamic_rotate %28 by %c1_i32_13 dim 0 : vector<16x16xf32>, i32 -> vector<16x16xf32>
    %30 = vector.broadcast %1 : vector<16x1xf32> to vector<16x16xf32>
    %31 = arith.mulf %30, %29 : vector<16x16xf32>
    %c15_i32_14 = arith.constant 15 : i32
    %32 = tpu.dynamic_rotate %28 by %c15_i32_14 dim 0 : vector<16x16xf32>, i32 -> vector<16x16xf32>
    %33 = vector.broadcast %2 : vector<16x1xf32> to vector<16x16xf32>
    %34 = arith.mulf %33, %32 : vector<16x16xf32>
    %35 = tpu.concatenate %31, %28, %34 in 1 : vector<16x16xf32>, vector<16x16xf32>, vector<16x16xf32> -> vector<16x48xf32>
    %36 = arith.truncf %35 : vector<16x48xf32> to vector<16x48xbf16>
    %c0_15 = arith.constant 0 : index
    %c0_16 = arith.constant 0 : index
    %37 = vector.load %arg6[%c0_15, %c0_16] : memref<48x32xbf16, #tpu.memory_space<vmem>>, vector<48x32xbf16>
    %cst_17 = arith.constant dense<0.000000e+00> : vector<16x32xf32>
    %38 = tpu.matmul %36, %37, %cst_17 {dimension_numbers = #tpu.dot_dimension_numbers<[1], [0], [0], [1], [0, 0, 1, 1], [], []>} : vector<16x48xbf16>, vector<48x32xbf16>, vector<16x32xf32> -> vector<16x32xf32>
    %c0_18 = arith.constant 0 : index
    %c0_19 = arith.constant 0 : index
    %39 = vector.load %arg7[%c0_18, %c0_19] : memref<1x32xf32, #tpu.memory_space<vmem>>, vector<1x32xf32>
    %40 = vector.broadcast %39 : vector<1x32xf32> to vector<16x32xf32>
    %41 = arith.addf %38, %40 : vector<16x32xf32>
    %cst_20 = arith.constant 5.000000e-01 : f32
    %42 = vector.broadcast %cst_20 : f32 to vector<16x32xf32>
    %43 = arith.mulf %42, %41 : vector<16x32xf32>
    %cst_21 = arith.constant 4.471500e-02 : f32
    %44 = vector.broadcast %cst_21 : f32 to vector<16x32xf32>
    %45 = arith.mulf %44, %41 : vector<16x32xf32>
    %46 = arith.mulf %45, %41 : vector<16x32xf32>
    %47 = arith.mulf %46, %41 : vector<16x32xf32>
    %48 = arith.addf %41, %47 : vector<16x32xf32>
    %cst_22 = arith.constant 0.797884583 : f32
    %49 = vector.broadcast %cst_22 : f32 to vector<16x32xf32>
    %50 = arith.mulf %49, %48 : vector<16x32xf32>
    %51 = math.tanh %50 : vector<16x32xf32>
    %cst_23 = arith.constant 1.000000e+00 : f32
    %52 = vector.broadcast %cst_23 : f32 to vector<16x32xf32>
    %53 = arith.addf %52, %51 : vector<16x32xf32>
    %54 = arith.mulf %43, %53 : vector<16x32xf32>
    %55 = arith.truncf %54 : vector<16x32xf32> to vector<16x32xbf16>
    %c0_24 = arith.constant 0 : index
    %c0_25 = arith.constant 0 : index
    %56 = vector.load %arg8[%c0_24, %c0_25] : memref<32x32xbf16, #tpu.memory_space<vmem>>, vector<32x32xbf16>
    %cst_26 = arith.constant dense<0.000000e+00> : vector<16x32xf32>
    %57 = tpu.matmul %55, %56, %cst_26 {dimension_numbers = #tpu.dot_dimension_numbers<[1], [0], [0], [1], [0, 0, 1, 1], [], []>} : vector<16x32xbf16>, vector<32x32xbf16>, vector<16x32xf32> -> vector<16x32xf32>
    %c0_27 = arith.constant 0 : index
    %c0_28 = arith.constant 0 : index
    %58 = vector.load %arg9[%c0_27, %c0_28] : memref<1x32xf32, #tpu.memory_space<vmem>>, vector<1x32xf32>
    %59 = vector.broadcast %58 : vector<1x32xf32> to vector<16x32xf32>
    %60 = arith.addf %57, %59 : vector<16x32xf32>
    %c0_29 = arith.constant 0 : index
    %c0_30 = arith.constant 0 : index
    %61 = vector.load %arg10[%c0_29, %c0_30] : memref<16x32xf32, #tpu.memory_space<vmem>>, vector<16x32xf32>
    %62 = arith.addf %60, %61 : vector<16x32xf32>
    %c0_31 = arith.constant 0 : index
    %c0_32 = arith.constant 0 : index
    %63 = vector.load %arg11[%c0_31, %c0_32] : memref<16x32xf32, #tpu.memory_space<vmem>>, vector<16x32xf32>
    tpu.vector_store %arg11[%c0_31, %c0_32], %62 {strides = array<i32>} : memref<16x32xf32, #tpu.memory_space<vmem>>, vector<16x32xf32>,
    return
  }
  func.func @transform_0(%arg0: i32) -> (i32, i32) {
    %c0_i32 = arith.constant 0 : i32
    %c0_i32_0 = arith.constant 0 : i32
    return %arg0, %c0_i32 : i32, i32
  }
  func.func @transform_1(%arg0: i32) -> (i32, i32) {
    %c0_i32 = arith.constant 0 : i32
    %c0_i32_0 = arith.constant 0 : i32
    %c0_i32_1 = arith.constant 0 : i32
    return %c0_i32, %c0_i32_0 : i32, i32
  }
  func.func @transform_2(%arg0: i32) -> (i32, i32) {
    %c0_i32 = arith.constant 0 : i32
    %c0_i32_0 = arith.constant 0 : i32
    %c0_i32_1 = arith.constant 0 : i32
    return %c0_i32, %c0_i32_0 : i32, i32
  }
  func.func @transform_3(%arg0: i32) -> (i32, i32) {
    %c0_i32 = arith.constant 0 : i32
    %c0_i32_0 = arith.constant 0 : i32
    %c0_i32_1 = arith.constant 0 : i32
    return %c0_i32, %c0_i32_0 : i32, i32
  }
  func.func @transform_4(%arg0: i32) -> (i32, i32) {
    %c0_i32 = arith.constant 0 : i32
    %c0_i32_0 = arith.constant 0 : i32
    %c0_i32_1 = arith.constant 0 : i32
    return %c0_i32, %c0_i32_0 : i32, i32
  }
  func.func @transform_5(%arg0: i32) -> (i32, i32) {
    %c0_i32 = arith.constant 0 : i32
    %c0_i32_0 = arith.constant 0 : i32
    %c0_i32_1 = arith.constant 0 : i32
    return %c0_i32, %c0_i32_0 : i32, i32
  }
  func.func @transform_6(%arg0: i32) -> (i32, i32) {
    %c0_i32 = arith.constant 0 : i32
    %c0_i32_0 = arith.constant 0 : i32
    %c0_i32_1 = arith.constant 0 : i32
    return %c0_i32, %c0_i32_0 : i32, i32
  }
  func.func @transform_7(%arg0: i32) -> (i32, i32) {
    %c0_i32 = arith.constant 0 : i32
    %c0_i32_0 = arith.constant 0 : i32
    %c0_i32_1 = arith.constant 0 : i32
    return %c0_i32, %c0_i32_0 : i32, i32
  }
  func.func @transform_8(%arg0: i32) -> (i32, i32) {
    %c0_i32 = arith.constant 0 : i32
    %c0_i32_0 = arith.constant 0 : i32
    %c0_i32_1 = arith.constant 0 : i32
    return %c0_i32, %c0_i32_0 : i32, i32
  }
  func.func @transform_9(%arg0: i32) -> (i32, i32) {
    %c0_i32 = arith.constant 0 : i32
    %c0_i32_0 = arith.constant 0 : i32
    %c0_i32_1 = arith.constant 0 : i32
    return %c0_i32, %c0_i32_0 : i32, i32
  }
  func.func @transform_10(%arg0: i32) -> (i32, i32) {
    %c0_i32 = arith.constant 0 : i32
    %c0_i32_0 = arith.constant 0 : i32
    return %arg0, %c0_i32 : i32, i32
  }
}

module attributes {stable_mosaic.version = 11 : i64} {
  func.func @_blocks_heads_kernel(%arg0: i32, %arg1: i32, %arg2: memref<16x32xf32, #tpu.memory_space<vmem>>, %arg3: memref<1x1x32xf32, #tpu.memory_space<vmem>>, %arg4: memref<1x1x32xf32, #tpu.memory_space<vmem>>, %arg5: memref<1x32x96xbf16, #tpu.memory_space<vmem>>, %arg6: memref<1x1x96xf32, #tpu.memory_space<vmem>>, %arg7: memref<1x32x32xbf16, #tpu.memory_space<vmem>>, %arg8: memref<1x1x32xf32, #tpu.memory_space<vmem>>, %arg9: memref<1x1x32xf32, #tpu.memory_space<vmem>>, %arg10: memref<1x1x32xf32, #tpu.memory_space<vmem>>, %arg11: memref<1x32x128xbf16, #tpu.memory_space<vmem>>, %arg12: memref<1x1x128xf32, #tpu.memory_space<vmem>>, %arg13: memref<1x128x32xbf16, #tpu.memory_space<vmem>>, %arg14: memref<1x1x32xf32, #tpu.memory_space<vmem>>, %arg15: memref<1x32xf32, #tpu.memory_space<vmem>>, %arg16: memref<1x32xf32, #tpu.memory_space<vmem>>, %arg17: memref<32x128xbf16, #tpu.memory_space<vmem>>, %arg18: memref<1x128xf32, #tpu.memory_space<vmem>>, %arg19: memref<128x256xbf16, #tpu.memory_space<vmem>>, %arg20: memref<1x256xf32, #tpu.memory_space<vmem>>, %arg21: memref<256x128xbf16, #tpu.memory_space<vmem>>, %arg22: memref<1x128xf32, #tpu.memory_space<vmem>>, %arg23: memref<128x3xbf16, #tpu.memory_space<vmem>>, %arg24: memref<1x3xf32, #tpu.memory_space<vmem>>, %arg25: memref<32x128xbf16, #tpu.memory_space<vmem>>, %arg26: memref<1x128xf32, #tpu.memory_space<vmem>>, %arg27: memref<128x256xbf16, #tpu.memory_space<vmem>>, %arg28: memref<1x256xf32, #tpu.memory_space<vmem>>, %arg29: memref<256x128xbf16, #tpu.memory_space<vmem>>, %arg30: memref<1x128xf32, #tpu.memory_space<vmem>>, %arg31: memref<128x1xbf16, #tpu.memory_space<vmem>>, %arg32: memref<1x1xf32, #tpu.memory_space<vmem>>, %arg33: memref<2x3xf32, #tpu.memory_space<vmem>>, %arg34: memref<2x1xf32, #tpu.memory_space<vmem>>, %arg35: memref<16x32xf32, #tpu.memory_space<vmem>>) attributes {dimension_semantics = [#tpu.dimension_semantics<parallel>, #tpu.dimension_semantics<arbitrary>], iteration_bounds = array<i64: 1, 2>, scalar_prefetch = 0 : i64, scratch_operands = 1 : i64, tpu.core_type = #tpu.core_type<tc>, window_params = [{transform_indices = @transform_0, window_bounds = array<i64: 16, 32>}, {transform_indices = @transform_1, window_bounds = array<i64: 1, 1, 32>}, {transform_indices = @transform_2, window_bounds = array<i64: 1, 1, 32>}, {transform_indices = @transform_3, window_bounds = array<i64: 1, 32, 96>}, {transform_indices = @transform_4, window_bounds = array<i64: 1, 1, 96>}, {transform_indices = @transform_5, window_bounds = array<i64: 1, 32, 32>}, {transform_indices = @transform_6, window_bounds = array<i64: 1, 1, 32>}, {transform_indices = @transform_7, window_bounds = array<i64: 1, 1, 32>}, {transform_indices = @transform_8, window_bounds = array<i64: 1, 1, 32>}, {transform_indices = @transform_9, window_bounds = array<i64: 1, 32, 128>}, {transform_indices = @transform_10, window_bounds = array<i64: 1, 1, 128>}, {transform_indices = @transform_11, window_bounds = array<i64: 1, 128, 32>}, {transform_indices = @transform_12, window_bounds = array<i64: 1, 1, 32>}, {pipeline_mode = #tpu.pipeline_mode<synchronous>, transform_indices = @transform_13, window_bounds = array<i64: 1, 32>}, {pipeline_mode = #tpu.pipeline_mode<synchronous>, transform_indices = @transform_14, window_bounds = array<i64: 1, 32>}, {pipeline_mode = #tpu.pipeline_mode<synchronous>, transform_indices = @transform_15, window_bounds = array<i64: 32, 128>}, {pipeline_mode = #tpu.pipeline_mode<synchronous>, transform_indices = @transform_16, window_bounds = array<i64: 1, 128>}, {pipeline_mode = #tpu.pipeline_mode<synchronous>, transform_indices = @transform_17, window_bounds = array<i64: 128, 256>}, {pipeline_mode = #tpu.pipeline_mode<synchronous>, transform_indices = @transform_18, window_bounds = array<i64: 1, 256>}, {pipeline_mode = #tpu.pipeline_mode<synchronous>, transform_indices = @transform_19, window_bounds = array<i64: 256, 128>}, {pipeline_mode = #tpu.pipeline_mode<synchronous>, transform_indices = @transform_20, window_bounds = array<i64: 1, 128>}, {pipeline_mode = #tpu.pipeline_mode<synchronous>, transform_indices = @transform_21, window_bounds = array<i64: 128, 3>}, {pipeline_mode = #tpu.pipeline_mode<synchronous>, transform_indices = @transform_22, window_bounds = array<i64: 1, 3>}, {pipeline_mode = #tpu.pipeline_mode<synchronous>, transform_indices = @transform_23, window_bounds = array<i64: 32, 128>}, {pipeline_mode = #tpu.pipeline_mode<synchronous>, transform_indices = @transform_24, window_bounds = array<i64: 1, 128>}, {pipeline_mode = #tpu.pipeline_mode<synchronous>, transform_indices = @transform_25, window_bounds = array<i64: 128, 256>}, {pipeline_mode = #tpu.pipeline_mode<synchronous>, transform_indices = @transform_26, window_bounds = array<i64: 1, 256>}, {pipeline_mode = #tpu.pipeline_mode<synchronous>, transform_indices = @transform_27, window_bounds = array<i64: 256, 128>}, {pipeline_mode = #tpu.pipeline_mode<synchronous>, transform_indices = @transform_28, window_bounds = array<i64: 1, 128>}, {pipeline_mode = #tpu.pipeline_mode<synchronous>, transform_indices = @transform_29, window_bounds = array<i64: 128, 1>}, {pipeline_mode = #tpu.pipeline_mode<synchronous>, transform_indices = @transform_30, window_bounds = array<i64: 1, 1>}, {transform_indices = @transform_31, window_bounds = array<i64: 2, 3>}, {transform_indices = @transform_32, window_bounds = array<i64: 2, 1>}]} {
    %c0_i32 = arith.constant 0 : i32
    %0 = arith.cmpi eq, %arg1, %c0_i32 : i32
    %1 = arith.extui %0 : i1 to i32
    %c0_i32_0 = arith.constant 0 : i32
    %2 = arith.cmpi ne, %1, %c0_i32_0 : i32
    scf.if %2 {
      %c0_91 = arith.constant 0 : index
      %c0_92 = arith.constant 0 : index
      %255 = vector.load %arg2[%c0_91, %c0_92] : memref<16x32xf32, #tpu.memory_space<vmem>>, vector<16x32xf32>
      %c0_93 = arith.constant 0 : index
      %c0_94 = arith.constant 0 : index
      %256 = vector.load %arg35[%c0_93, %c0_94] : memref<16x32xf32, #tpu.memory_space<vmem>>, vector<16x32xf32>
      tpu.vector_store %arg35[%c0_93, %c0_94], %255 {strides = array<i32>} : memref<16x32xf32, #tpu.memory_space<vmem>>, vector<16x32xf32>,
    } else {
    }
    %c0 = arith.constant 0 : index
    %c0_1 = arith.constant 0 : index
    %3 = vector.load %arg35[%c0, %c0_1] : memref<16x32xf32, #tpu.memory_space<vmem>>, vector<16x32xf32>
    %c0_2 = arith.constant 0 : index
    %c0_3 = arith.constant 0 : index
    %c0_4 = arith.constant 0 : index
    %4 = vector.load %arg3[%c0_2, %c0_3, %c0_4] : memref<1x1x32xf32, #tpu.memory_space<vmem>>, vector<1x1x32xf32>
    %5 = vector.shape_cast %4 : vector<1x1x32xf32> to vector<1x32xf32>
    %c0_5 = arith.constant 0 : index
    %c0_6 = arith.constant 0 : index
    %c0_7 = arith.constant 0 : index
    %6 = vector.load %arg4[%c0_5, %c0_6, %c0_7] : memref<1x1x32xf32, #tpu.memory_space<vmem>>, vector<1x1x32xf32>
    %7 = vector.shape_cast %6 : vector<1x1x32xf32> to vector<1x32xf32>
    %cst = arith.constant dense<0.000000e+00> : vector<16xf32>
    %8 = vector.multi_reduction <add>, %3, %cst [1] : vector<16x32xf32> to vector<16xf32>
    %9 = vector.shape_cast %8 : vector<16xf32> to vector<16x1xf32>
    %cst_8 = arith.constant 3.200000e+01 : f32
    %10 = vector.broadcast %cst_8 : f32 to vector<16x1xf32>
    %11 = arith.divf %9, %10 : vector<16x1xf32>
    %12 = vector.broadcast %11 : vector<16x1xf32> to vector<16x32xf32>
    %13 = arith.subf %3, %12 : vector<16x32xf32>
    %14 = arith.mulf %13, %13 : vector<16x32xf32>
    %cst_9 = arith.constant dense<0.000000e+00> : vector<16xf32>
    %15 = vector.multi_reduction <add>, %14, %cst_9 [1] : vector<16x32xf32> to vector<16xf32>
    %16 = vector.shape_cast %15 : vector<16xf32> to vector<16x1xf32>
    %cst_10 = arith.constant 3.200000e+01 : f32
    %17 = vector.broadcast %cst_10 : f32 to vector<16x1xf32>
    %18 = arith.divf %16, %17 : vector<16x1xf32>
    %cst_11 = arith.constant 9.99999974E-6 : f32
    %19 = vector.broadcast %cst_11 : f32 to vector<16x1xf32>
    %20 = arith.addf %18, %19 : vector<16x1xf32>
    %21 = math.rsqrt %20 : vector<16x1xf32>
    %22 = vector.broadcast %21 : vector<16x1xf32> to vector<16x32xf32>
    %23 = arith.mulf %13, %22 : vector<16x32xf32>
    %24 = vector.broadcast %5 : vector<1x32xf32> to vector<16x32xf32>
    %25 = arith.mulf %23, %24 : vector<16x32xf32>
    %26 = vector.broadcast %7 : vector<1x32xf32> to vector<16x32xf32>
    %27 = arith.addf %25, %26 : vector<16x32xf32>
    %28 = arith.truncf %27 : vector<16x32xf32> to vector<16x32xbf16>
    %c0_12 = arith.constant 0 : index
    %c0_13 = arith.constant 0 : index
    %c0_14 = arith.constant 0 : index
    %29 = vector.load %arg5[%c0_12, %c0_13, %c0_14] : memref<1x32x96xbf16, #tpu.memory_space<vmem>>, vector<1x32x96xbf16>
    %30 = vector.shape_cast %29 : vector<1x32x96xbf16> to vector<32x96xbf16>
    %cst_15 = arith.constant dense<0.000000e+00> : vector<16x96xf32>
    %31 = tpu.matmul %28, %30, %cst_15 {dimension_numbers = #tpu.dot_dimension_numbers<[1], [0], [0], [1], [0, 0, 1, 1], [], []>} : vector<16x32xbf16>, vector<32x96xbf16>, vector<16x96xf32> -> vector<16x96xf32>
    %c0_16 = arith.constant 0 : index
    %c0_17 = arith.constant 0 : index
    %c0_18 = arith.constant 0 : index
    %32 = vector.load %arg6[%c0_16, %c0_17, %c0_18] : memref<1x1x96xf32, #tpu.memory_space<vmem>>, vector<1x1x96xf32>
    %33 = vector.shape_cast %32 : vector<1x1x96xf32> to vector<1x96xf32>
    %34 = vector.broadcast %33 : vector<1x96xf32> to vector<16x96xf32>
    %35 = arith.addf %31, %34 : vector<16x96xf32>
    %36 = vector.extract_strided_slice %35 {offsets = [0, 0], sizes = [16, 32], strides = [1, 1]} : vector<16x96xf32> to vector<16x32xf32>
    %37 = vector.shape_cast %36 : vector<16x32xf32> to vector<2x8x32xf32>
    %38 = vector.extract_strided_slice %35 {offsets = [0, 32], sizes = [16, 32], strides = [1, 1]} : vector<16x96xf32> to vector<16x32xf32>
    %39 = vector.shape_cast %38 : vector<16x32xf32> to vector<2x8x32xf32>
    %40 = vector.extract_strided_slice %35 {offsets = [0, 64], sizes = [16, 32], strides = [1, 1]} : vector<16x96xf32> to vector<16x32xf32>
    %41 = vector.shape_cast %40 : vector<16x32xf32> to vector<2x8x32xf32>
    %42 = arith.truncf %41 : vector<2x8x32xf32> to vector<2x8x32xbf16>
    %43 = tpu.iota {dimensions = array<i32: 0>} : vector<8x8xi32>
    %44 = tpu.iota {dimensions = array<i32: 1>} : vector<8x8xi32>
    %45 = arith.subi %43, %44 : vector<8x8xi32>
    %46 = math.absi %45 : vector<8x8xi32>
    %c0_19 = arith.constant 0 : index
    %c0_20 = arith.constant 0 : index
    %c0_21 = arith.constant 0 : index
    %47 = vector.load %arg7[%c0_19, %c0_20, %c0_21] : memref<1x32x32xbf16, #tpu.memory_space<vmem>>, vector<1x32x32xbf16>
    %48 = vector.shape_cast %47 : vector<1x32x32xbf16> to vector<32x32xbf16>
    %49 = vector.extract_strided_slice %37 {offsets = [0, 0, 0], sizes = [2, 8, 8], strides = [1, 1, 1]} : vector<2x8x32xf32> to vector<2x8x8xf32>
    %50 = arith.truncf %49 : vector<2x8x8xf32> to vector<2x8x8xbf16>
    %51 = vector.extract_strided_slice %39 {offsets = [0, 0, 0], sizes = [2, 8, 8], strides = [1, 1, 1]} : vector<2x8x32xf32> to vector<2x8x8xf32>
    %52 = arith.truncf %51 : vector<2x8x8xf32> to vector<2x8x8xbf16>
    "tpu.trace_start"() <{level = 10 : i32, message = "btd,bsd->bts"}> : () -> ()
    %cst_22 = arith.constant dense<0.000000e+00> : vector<2x8x8xf32>
    %53 = tpu.matmul %50, %52, %cst_22 {dimension_numbers = #tpu.dot_dimension_numbers<[2], [2], [1], [1], [0, 0, 0, 1, 1, 1], [0], [0]>} : vector<2x8x8xbf16>, vector<2x8x8xbf16>, vector<2x8x8xf32> -> vector<2x8x8xf32>
    "tpu.trace_stop"() : () -> ()
    %cst_23 = arith.constant 0.353553385 : f32
    %54 = vector.broadcast %cst_23 : f32 to vector<2x8x8xf32>
    %55 = arith.mulf %53, %54 : vector<2x8x8xf32>
    %c1_i32 = arith.constant 1 : i32
    %56 = vector.broadcast %c1_i32 : i32 to vector<8x8xi32>
    %57 = arith.cmpi sle, %46, %56 : vector<8x8xi32>
    %c1_i32_24 = arith.constant 1 : i32
    %58 = vector.broadcast %c1_i32_24 : i32 to vector<8x8xi32>
    %59 = arith.andi %46, %58 : vector<8x8xi32>
    %c0_i32_25 = arith.constant 0 : i32
    %60 = vector.broadcast %c0_i32_25 : i32 to vector<8x8xi32>
    %61 = arith.cmpi eq, %59, %60 : vector<8x8xi32>
    %62 = arith.ori %57, %61 : vector<8x8xi1>
    %63 = vector.shape_cast %62 : vector<8x8xi1> to vector<1x8x8xi1>
    %cst_26 = arith.constant -1.000000e+30 : f32
    %64 = vector.shape_cast %63 : vector<1x8x8xi1> to vector<1x8x8xi1>
    %65 = vector.broadcast %64 : vector<1x8x8xi1> to vector<2x8x8xi1>
    %66 = vector.broadcast %cst_26 : f32 to vector<2x8x8xf32>
    %67 = arith.select %65, %55, %66 : vector<2x8x8xi1>, vector<2x8x8xf32>
    %cst_27 = arith.constant dense<0xFF800000> : vector<2x8xf32>
    %68 = vector.multi_reduction <maximumf>, %67, %cst_27 [2] : vector<2x8x8xf32> to vector<2x8xf32>
    %69 = vector.shape_cast %68 : vector<2x8xf32> to vector<2x8x1xf32>
    %70 = vector.broadcast %69 : vector<2x8x1xf32> to vector<2x8x8xf32>
    %71 = arith.subf %67, %70 : vector<2x8x8xf32>
    %72 = math.exp %71 : vector<2x8x8xf32>
    %cst_28 = arith.constant dense<0.000000e+00> : vector<2x8xf32>
    %73 = vector.multi_reduction <add>, %72, %cst_28 [2] : vector<2x8x8xf32> to vector<2x8xf32>
    %74 = vector.shape_cast %73 : vector<2x8xf32> to vector<2x8x1xf32>
    %75 = vector.broadcast %74 : vector<2x8x1xf32> to vector<2x8x8xf32>
    %76 = arith.divf %72, %75 : vector<2x8x8xf32>
    %77 = arith.truncf %76 : vector<2x8x8xf32> to vector<2x8x8xbf16>
    %78 = vector.extract_strided_slice %42 {offsets = [0, 0, 0], sizes = [2, 8, 8], strides = [1, 1, 1]} : vector<2x8x32xbf16> to vector<2x8x8xbf16>
    "tpu.trace_start"() <{level = 10 : i32, message = "bts,bsd->btd"}> : () -> ()
    %cst_29 = arith.constant dense<0.000000e+00> : vector<2x8x8xf32>
    %79 = tpu.matmul %77, %78, %cst_29 {dimension_numbers = #tpu.dot_dimension_numbers<[2], [1], [1], [2], [0, 0, 0, 1, 1, 2], [0], [0]>} : vector<2x8x8xbf16>, vector<2x8x8xbf16>, vector<2x8x8xf32> -> vector<2x8x8xf32>
    "tpu.trace_stop"() : () -> ()
    %80 = vector.shape_cast %79 : vector<2x8x8xf32> to vector<16x8xf32>
    %81 = arith.truncf %80 : vector<16x8xf32> to vector<16x8xbf16>
    %82 = vector.extract_strided_slice %48 {offsets = [0, 0], sizes = [8, 32], strides = [1, 1]} : vector<32x32xbf16> to vector<8x32xbf16>
    %cst_30 = arith.constant dense<0.000000e+00> : vector<16x32xf32>
    %83 = tpu.matmul %81, %82, %cst_30 {dimension_numbers = #tpu.dot_dimension_numbers<[1], [0], [0], [1], [0, 0, 1, 1], [], []>} : vector<16x8xbf16>, vector<8x32xbf16>, vector<16x32xf32> -> vector<16x32xf32>
    %84 = vector.extract_strided_slice %37 {offsets = [0, 0, 8], sizes = [2, 8, 8], strides = [1, 1, 1]} : vector<2x8x32xf32> to vector<2x8x8xf32>
    %85 = arith.truncf %84 : vector<2x8x8xf32> to vector<2x8x8xbf16>
    %86 = vector.extract_strided_slice %39 {offsets = [0, 0, 8], sizes = [2, 8, 8], strides = [1, 1, 1]} : vector<2x8x32xf32> to vector<2x8x8xf32>
    %87 = arith.truncf %86 : vector<2x8x8xf32> to vector<2x8x8xbf16>
    "tpu.trace_start"() <{level = 10 : i32, message = "btd,bsd->bts"}> : () -> ()
    %cst_31 = arith.constant dense<0.000000e+00> : vector<2x8x8xf32>
    %88 = tpu.matmul %85, %87, %cst_31 {dimension_numbers = #tpu.dot_dimension_numbers<[2], [2], [1], [1], [0, 0, 0, 1, 1, 1], [0], [0]>} : vector<2x8x8xbf16>, vector<2x8x8xbf16>, vector<2x8x8xf32> -> vector<2x8x8xf32>
    "tpu.trace_stop"() : () -> ()
    %cst_32 = arith.constant 0.353553385 : f32
    %89 = vector.broadcast %cst_32 : f32 to vector<2x8x8xf32>
    %90 = arith.mulf %88, %89 : vector<2x8x8xf32>
    %c2_i32 = arith.constant 2 : i32
    %91 = vector.broadcast %c2_i32 : i32 to vector<8x8xi32>
    %92 = arith.cmpi sle, %46, %91 : vector<8x8xi32>
    %c3_i32 = arith.constant 3 : i32
    %93 = vector.broadcast %c3_i32 : i32 to vector<8x8xi32>
    %94 = arith.andi %46, %93 : vector<8x8xi32>
    %c0_i32_33 = arith.constant 0 : i32
    %95 = vector.broadcast %c0_i32_33 : i32 to vector<8x8xi32>
    %96 = arith.cmpi eq, %94, %95 : vector<8x8xi32>
    %97 = arith.ori %92, %96 : vector<8x8xi1>
    %98 = vector.shape_cast %97 : vector<8x8xi1> to vector<1x8x8xi1>
    %cst_34 = arith.constant -1.000000e+30 : f32
    %99 = vector.shape_cast %98 : vector<1x8x8xi1> to vector<1x8x8xi1>
    %100 = vector.broadcast %99 : vector<1x8x8xi1> to vector<2x8x8xi1>
    %101 = vector.broadcast %cst_34 : f32 to vector<2x8x8xf32>
    %102 = arith.select %100, %90, %101 : vector<2x8x8xi1>, vector<2x8x8xf32>
    %cst_35 = arith.constant dense<0xFF800000> : vector<2x8xf32>
    %103 = vector.multi_reduction <maximumf>, %102, %cst_35 [2] : vector<2x8x8xf32> to vector<2x8xf32>
    %104 = vector.shape_cast %103 : vector<2x8xf32> to vector<2x8x1xf32>
    %105 = vector.broadcast %104 : vector<2x8x1xf32> to vector<2x8x8xf32>
    %106 = arith.subf %102, %105 : vector<2x8x8xf32>
    %107 = math.exp %106 : vector<2x8x8xf32>
    %cst_36 = arith.constant dense<0.000000e+00> : vector<2x8xf32>
    %108 = vector.multi_reduction <add>, %107, %cst_36 [2] : vector<2x8x8xf32> to vector<2x8xf32>
    %109 = vector.shape_cast %108 : vector<2x8xf32> to vector<2x8x1xf32>
    %110 = vector.broadcast %109 : vector<2x8x1xf32> to vector<2x8x8xf32>
    %111 = arith.divf %107, %110 : vector<2x8x8xf32>
    %112 = arith.truncf %111 : vector<2x8x8xf32> to vector<2x8x8xbf16>
    %113 = vector.extract_strided_slice %42 {offsets = [0, 0, 8], sizes = [2, 8, 8], strides = [1, 1, 1]} : vector<2x8x32xbf16> to vector<2x8x8xbf16>
    "tpu.trace_start"() <{level = 10 : i32, message = "bts,bsd->btd"}> : () -> ()
    %cst_37 = arith.constant dense<0.000000e+00> : vector<2x8x8xf32>
    %114 = tpu.matmul %112, %113, %cst_37 {dimension_numbers = #tpu.dot_dimension_numbers<[2], [1], [1], [2], [0, 0, 0, 1, 1, 2], [0], [0]>} : vector<2x8x8xbf16>, vector<2x8x8xbf16>, vector<2x8x8xf32> -> vector<2x8x8xf32>
    "tpu.trace_stop"() : () -> ()
    %115 = vector.shape_cast %114 : vector<2x8x8xf32> to vector<16x8xf32>
    %116 = arith.truncf %115 : vector<16x8xf32> to vector<16x8xbf16>
    %117 = vector.extract_strided_slice %48 {offsets = [8, 0], sizes = [8, 32], strides = [1, 1]} : vector<32x32xbf16> to vector<8x32xbf16>
    %cst_38 = arith.constant dense<0.000000e+00> : vector<16x32xf32>
    %118 = tpu.matmul %116, %117, %cst_38 {dimension_numbers = #tpu.dot_dimension_numbers<[1], [0], [0], [1], [0, 0, 1, 1], [], []>} : vector<16x8xbf16>, vector<8x32xbf16>, vector<16x32xf32> -> vector<16x32xf32>
    %119 = arith.addf %83, %118 : vector<16x32xf32>
    %120 = vector.extract_strided_slice %37 {offsets = [0, 0, 16], sizes = [2, 8, 8], strides = [1, 1, 1]} : vector<2x8x32xf32> to vector<2x8x8xf32>
    %121 = arith.truncf %120 : vector<2x8x8xf32> to vector<2x8x8xbf16>
    %122 = vector.extract_strided_slice %39 {offsets = [0, 0, 16], sizes = [2, 8, 8], strides = [1, 1, 1]} : vector<2x8x32xf32> to vector<2x8x8xf32>
    %123 = arith.truncf %122 : vector<2x8x8xf32> to vector<2x8x8xbf16>
    "tpu.trace_start"() <{level = 10 : i32, message = "btd,bsd->bts"}> : () -> ()
    %cst_39 = arith.constant dense<0.000000e+00> : vector<2x8x8xf32>
    %124 = tpu.matmul %121, %123, %cst_39 {dimension_numbers = #tpu.dot_dimension_numbers<[2], [2], [1], [1], [0, 0, 0, 1, 1, 1], [0], [0]>} : vector<2x8x8xbf16>, vector<2x8x8xbf16>, vector<2x8x8xf32> -> vector<2x8x8xf32>
    "tpu.trace_stop"() : () -> ()
    %cst_40 = arith.constant 0.353553385 : f32
    %125 = vector.broadcast %cst_40 : f32 to vector<2x8x8xf32>
    %126 = arith.mulf %124, %125 : vector<2x8x8xf32>
    %c4_i32 = arith.constant 4 : i32
    %127 = vector.broadcast %c4_i32 : i32 to vector<8x8xi32>
    %128 = arith.cmpi sle, %46, %127 : vector<8x8xi32>
    %c7_i32 = arith.constant 7 : i32
    %129 = vector.broadcast %c7_i32 : i32 to vector<8x8xi32>
    %130 = arith.andi %46, %129 : vector<8x8xi32>
    %c0_i32_41 = arith.constant 0 : i32
    %131 = vector.broadcast %c0_i32_41 : i32 to vector<8x8xi32>
    %132 = arith.cmpi eq, %130, %131 : vector<8x8xi32>
    %133 = arith.ori %128, %132 : vector<8x8xi1>
    %134 = vector.shape_cast %133 : vector<8x8xi1> to vector<1x8x8xi1>
    %cst_42 = arith.constant -1.000000e+30 : f32
    %135 = vector.shape_cast %134 : vector<1x8x8xi1> to vector<1x8x8xi1>
    %136 = vector.broadcast %135 : vector<1x8x8xi1> to vector<2x8x8xi1>
    %137 = vector.broadcast %cst_42 : f32 to vector<2x8x8xf32>
    %138 = arith.select %136, %126, %137 : vector<2x8x8xi1>, vector<2x8x8xf32>
    %cst_43 = arith.constant dense<0xFF800000> : vector<2x8xf32>
    %139 = vector.multi_reduction <maximumf>, %138, %cst_43 [2] : vector<2x8x8xf32> to vector<2x8xf32>
    %140 = vector.shape_cast %139 : vector<2x8xf32> to vector<2x8x1xf32>
    %141 = vector.broadcast %140 : vector<2x8x1xf32> to vector<2x8x8xf32>
    %142 = arith.subf %138, %141 : vector<2x8x8xf32>
    %143 = math.exp %142 : vector<2x8x8xf32>
    %cst_44 = arith.constant dense<0.000000e+00> : vector<2x8xf32>
    %144 = vector.multi_reduction <add>, %143, %cst_44 [2] : vector<2x8x8xf32> to vector<2x8xf32>
    %145 = vector.shape_cast %144 : vector<2x8xf32> to vector<2x8x1xf32>
    %146 = vector.broadcast %145 : vector<2x8x1xf32> to vector<2x8x8xf32>
    %147 = arith.divf %143, %146 : vector<2x8x8xf32>
    %148 = arith.truncf %147 : vector<2x8x8xf32> to vector<2x8x8xbf16>
    %149 = vector.extract_strided_slice %42 {offsets = [0, 0, 16], sizes = [2, 8, 8], strides = [1, 1, 1]} : vector<2x8x32xbf16> to vector<2x8x8xbf16>
    "tpu.trace_start"() <{level = 10 : i32, message = "bts,bsd->btd"}> : () -> ()
    %cst_45 = arith.constant dense<0.000000e+00> : vector<2x8x8xf32>
    %150 = tpu.matmul %148, %149, %cst_45 {dimension_numbers = #tpu.dot_dimension_numbers<[2], [1], [1], [2], [0, 0, 0, 1, 1, 2], [0], [0]>} : vector<2x8x8xbf16>, vector<2x8x8xbf16>, vector<2x8x8xf32> -> vector<2x8x8xf32>
    "tpu.trace_stop"() : () -> ()
    %151 = vector.shape_cast %150 : vector<2x8x8xf32> to vector<16x8xf32>
    %152 = arith.truncf %151 : vector<16x8xf32> to vector<16x8xbf16>
    %153 = vector.extract_strided_slice %48 {offsets = [16, 0], sizes = [8, 32], strides = [1, 1]} : vector<32x32xbf16> to vector<8x32xbf16>
    %cst_46 = arith.constant dense<0.000000e+00> : vector<16x32xf32>
    %154 = tpu.matmul %152, %153, %cst_46 {dimension_numbers = #tpu.dot_dimension_numbers<[1], [0], [0], [1], [0, 0, 1, 1], [], []>} : vector<16x8xbf16>, vector<8x32xbf16>, vector<16x32xf32> -> vector<16x32xf32>
    %155 = arith.addf %119, %154 : vector<16x32xf32>
    %156 = vector.extract_strided_slice %37 {offsets = [0, 0, 24], sizes = [2, 8, 8], strides = [1, 1, 1]} : vector<2x8x32xf32> to vector<2x8x8xf32>
    %157 = arith.truncf %156 : vector<2x8x8xf32> to vector<2x8x8xbf16>
    %158 = vector.extract_strided_slice %39 {offsets = [0, 0, 24], sizes = [2, 8, 8], strides = [1, 1, 1]} : vector<2x8x32xf32> to vector<2x8x8xf32>
    %159 = arith.truncf %158 : vector<2x8x8xf32> to vector<2x8x8xbf16>
    "tpu.trace_start"() <{level = 10 : i32, message = "btd,bsd->bts"}> : () -> ()
    %cst_47 = arith.constant dense<0.000000e+00> : vector<2x8x8xf32>
    %160 = tpu.matmul %157, %159, %cst_47 {dimension_numbers = #tpu.dot_dimension_numbers<[2], [2], [1], [1], [0, 0, 0, 1, 1, 1], [0], [0]>} : vector<2x8x8xbf16>, vector<2x8x8xbf16>, vector<2x8x8xf32> -> vector<2x8x8xf32>
    "tpu.trace_stop"() : () -> ()
    %cst_48 = arith.constant 0.353553385 : f32
    %161 = vector.broadcast %cst_48 : f32 to vector<2x8x8xf32>
    %162 = arith.mulf %160, %161 : vector<2x8x8xf32>
    %c8_i32 = arith.constant 8 : i32
    %163 = vector.broadcast %c8_i32 : i32 to vector<8x8xi32>
    %164 = arith.cmpi sle, %46, %163 : vector<8x8xi32>
    %c15_i32 = arith.constant 15 : i32
    %165 = vector.broadcast %c15_i32 : i32 to vector<8x8xi32>
    %166 = arith.andi %46, %165 : vector<8x8xi32>
    %c0_i32_49 = arith.constant 0 : i32
    %167 = vector.broadcast %c0_i32_49 : i32 to vector<8x8xi32>
    %168 = arith.cmpi eq, %166, %167 : vector<8x8xi32>
    %169 = arith.ori %164, %168 : vector<8x8xi1>
    %170 = vector.shape_cast %169 : vector<8x8xi1> to vector<1x8x8xi1>
    %cst_50 = arith.constant -1.000000e+30 : f32
    %171 = vector.shape_cast %170 : vector<1x8x8xi1> to vector<1x8x8xi1>
    %172 = vector.broadcast %171 : vector<1x8x8xi1> to vector<2x8x8xi1>
    %173 = vector.broadcast %cst_50 : f32 to vector<2x8x8xf32>
    %174 = arith.select %172, %162, %173 : vector<2x8x8xi1>, vector<2x8x8xf32>
    %cst_51 = arith.constant dense<0xFF800000> : vector<2x8xf32>
    %175 = vector.multi_reduction <maximumf>, %174, %cst_51 [2] : vector<2x8x8xf32> to vector<2x8xf32>
    %176 = vector.shape_cast %175 : vector<2x8xf32> to vector<2x8x1xf32>
    %177 = vector.broadcast %176 : vector<2x8x1xf32> to vector<2x8x8xf32>
    %178 = arith.subf %174, %177 : vector<2x8x8xf32>
    %179 = math.exp %178 : vector<2x8x8xf32>
    %cst_52 = arith.constant dense<0.000000e+00> : vector<2x8xf32>
    %180 = vector.multi_reduction <add>, %179, %cst_52 [2] : vector<2x8x8xf32> to vector<2x8xf32>
    %181 = vector.shape_cast %180 : vector<2x8xf32> to vector<2x8x1xf32>
    %182 = vector.broadcast %181 : vector<2x8x1xf32> to vector<2x8x8xf32>
    %183 = arith.divf %179, %182 : vector<2x8x8xf32>
    %184 = arith.truncf %183 : vector<2x8x8xf32> to vector<2x8x8xbf16>
    %185 = vector.extract_strided_slice %42 {offsets = [0, 0, 24], sizes = [2, 8, 8], strides = [1, 1, 1]} : vector<2x8x32xbf16> to vector<2x8x8xbf16>
    "tpu.trace_start"() <{level = 10 : i32, message = "bts,bsd->btd"}> : () -> ()
    %cst_53 = arith.constant dense<0.000000e+00> : vector<2x8x8xf32>
    %186 = tpu.matmul %184, %185, %cst_53 {dimension_numbers = #tpu.dot_dimension_numbers<[2], [1], [1], [2], [0, 0, 0, 1, 1, 2], [0], [0]>} : vector<2x8x8xbf16>, vector<2x8x8xbf16>, vector<2x8x8xf32> -> vector<2x8x8xf32>
    "tpu.trace_stop"() : () -> ()
    %187 = vector.shape_cast %186 : vector<2x8x8xf32> to vector<16x8xf32>
    %188 = arith.truncf %187 : vector<16x8xf32> to vector<16x8xbf16>
    %189 = vector.extract_strided_slice %48 {offsets = [24, 0], sizes = [8, 32], strides = [1, 1]} : vector<32x32xbf16> to vector<8x32xbf16>
    %cst_54 = arith.constant dense<0.000000e+00> : vector<16x32xf32>
    %190 = tpu.matmul %188, %189, %cst_54 {dimension_numbers = #tpu.dot_dimension_numbers<[1], [0], [0], [1], [0, 0, 1, 1], [], []>} : vector<16x8xbf16>, vector<8x32xbf16>, vector<16x32xf32> -> vector<16x32xf32>
    %191 = arith.addf %155, %190 : vector<16x32xf32>
    %192 = arith.addf %3, %191 : vector<16x32xf32>
    %c0_55 = arith.constant 0 : index
    %c0_56 = arith.constant 0 : index
    %c0_57 = arith.constant 0 : index
    %193 = vector.load %arg8[%c0_55, %c0_56, %c0_57] : memref<1x1x32xf32, #tpu.memory_space<vmem>>, vector<1x1x32xf32>
    %194 = vector.shape_cast %193 : vector<1x1x32xf32> to vector<1x32xf32>
    %195 = vector.broadcast %194 : vector<1x32xf32> to vector<16x32xf32>
    %196 = arith.addf %192, %195 : vector<16x32xf32>
    %c0_58 = arith.constant 0 : index
    %c0_59 = arith.constant 0 : index
    %c0_60 = arith.constant 0 : index
    %197 = vector.load %arg9[%c0_58, %c0_59, %c0_60] : memref<1x1x32xf32, #tpu.memory_space<vmem>>, vector<1x1x32xf32>
    %198 = vector.shape_cast %197 : vector<1x1x32xf32> to vector<1x32xf32>
    %c0_61 = arith.constant 0 : index
    %c0_62 = arith.constant 0 : index
    %c0_63 = arith.constant 0 : index
    %199 = vector.load %arg10[%c0_61, %c0_62, %c0_63] : memref<1x1x32xf32, #tpu.memory_space<vmem>>, vector<1x1x32xf32>
    %200 = vector.shape_cast %199 : vector<1x1x32xf32> to vector<1x32xf32>
    %cst_64 = arith.constant dense<0.000000e+00> : vector<16xf32>
    %201 = vector.multi_reduction <add>, %196, %cst_64 [1] : vector<16x32xf32> to vector<16xf32>
    %202 = vector.shape_cast %201 : vector<16xf32> to vector<16x1xf32>
    %cst_65 = arith.constant 3.200000e+01 : f32
    %203 = vector.broadcast %cst_65 : f32 to vector<16x1xf32>
    %204 = arith.divf %202, %203 : vector<16x1xf32>
    %205 = vector.broadcast %204 : vector<16x1xf32> to vector<16x32xf32>
    %206 = arith.subf %196, %205 : vector<16x32xf32>
    %207 = arith.mulf %206, %206 : vector<16x32xf32>
    %cst_66 = arith.constant dense<0.000000e+00> : vector<16xf32>
    %208 = vector.multi_reduction <add>, %207, %cst_66 [1] : vector<16x32xf32> to vector<16xf32>
    %209 = vector.shape_cast %208 : vector<16xf32> to vector<16x1xf32>
    %cst_67 = arith.constant 3.200000e+01 : f32
    %210 = vector.broadcast %cst_67 : f32 to vector<16x1xf32>
    %211 = arith.divf %209, %210 : vector<16x1xf32>
    %cst_68 = arith.constant 9.99999974E-6 : f32
    %212 = vector.broadcast %cst_68 : f32 to vector<16x1xf32>
    %213 = arith.addf %211, %212 : vector<16x1xf32>
    %214 = math.rsqrt %213 : vector<16x1xf32>
    %215 = vector.broadcast %214 : vector<16x1xf32> to vector<16x32xf32>
    %216 = arith.mulf %206, %215 : vector<16x32xf32>
    %217 = vector.broadcast %198 : vector<1x32xf32> to vector<16x32xf32>
    %218 = arith.mulf %216, %217 : vector<16x32xf32>
    %219 = vector.broadcast %200 : vector<1x32xf32> to vector<16x32xf32>
    %220 = arith.addf %218, %219 : vector<16x32xf32>
    %221 = arith.truncf %220 : vector<16x32xf32> to vector<16x32xbf16>
    %c0_69 = arith.constant 0 : index
    %c0_70 = arith.constant 0 : index
    %c0_71 = arith.constant 0 : index
    %222 = vector.load %arg11[%c0_69, %c0_70, %c0_71] : memref<1x32x128xbf16, #tpu.memory_space<vmem>>, vector<1x32x128xbf16>
    %223 = vector.shape_cast %222 : vector<1x32x128xbf16> to vector<32x128xbf16>
    %cst_72 = arith.constant dense<0.000000e+00> : vector<16x128xf32>
    %224 = tpu.matmul %221, %223, %cst_72 {dimension_numbers = #tpu.dot_dimension_numbers<[1], [0], [0], [1], [0, 0, 1, 1], [], []>} : vector<16x32xbf16>, vector<32x128xbf16>, vector<16x128xf32> -> vector<16x128xf32>
    %c0_73 = arith.constant 0 : index
    %c0_74 = arith.constant 0 : index
    %c0_75 = arith.constant 0 : index
    %225 = vector.load %arg12[%c0_73, %c0_74, %c0_75] : memref<1x1x128xf32, #tpu.memory_space<vmem>>, vector<1x1x128xf32>
    %226 = vector.shape_cast %225 : vector<1x1x128xf32> to vector<1x128xf32>
    %227 = vector.broadcast %226 : vector<1x128xf32> to vector<16x128xf32>
    %228 = arith.addf %224, %227 : vector<16x128xf32>
    %cst_76 = arith.constant 5.000000e-01 : f32
    %229 = vector.broadcast %cst_76 : f32 to vector<16x128xf32>
    %230 = arith.mulf %229, %228 : vector<16x128xf32>
    %cst_77 = arith.constant 4.471500e-02 : f32
    %231 = vector.broadcast %cst_77 : f32 to vector<16x128xf32>
    %232 = arith.mulf %231, %228 : vector<16x128xf32>
    %233 = arith.mulf %232, %228 : vector<16x128xf32>
    %234 = arith.mulf %233, %228 : vector<16x128xf32>
    %235 = arith.addf %228, %234 : vector<16x128xf32>
    %cst_78 = arith.constant 0.797884583 : f32
    %236 = vector.broadcast %cst_78 : f32 to vector<16x128xf32>
    %237 = arith.mulf %236, %235 : vector<16x128xf32>
    %238 = math.tanh %237 : vector<16x128xf32>
    %cst_79 = arith.constant 1.000000e+00 : f32
    %239 = vector.broadcast %cst_79 : f32 to vector<16x128xf32>
    %240 = arith.addf %239, %238 : vector<16x128xf32>
    %241 = arith.mulf %230, %240 : vector<16x128xf32>
    %242 = arith.truncf %241 : vector<16x128xf32> to vector<16x128xbf16>
    %c0_80 = arith.constant 0 : index
    %c0_81 = arith.constant 0 : index
    %c0_82 = arith.constant 0 : index
    %243 = vector.load %arg13[%c0_80, %c0_81, %c0_82] : memref<1x128x32xbf16, #tpu.memory_space<vmem>>, vector<1x128x32xbf16>
    %244 = vector.shape_cast %243 : vector<1x128x32xbf16> to vector<128x32xbf16>
    %cst_83 = arith.constant dense<0.000000e+00> : vector<16x32xf32>
    %245 = tpu.matmul %242, %244, %cst_83 {dimension_numbers = #tpu.dot_dimension_numbers<[1], [0], [0], [1], [0, 0, 1, 1], [], []>} : vector<16x128xbf16>, vector<128x32xbf16>, vector<16x32xf32> -> vector<16x32xf32>
    %c0_84 = arith.constant 0 : index
    %c0_85 = arith.constant 0 : index
    %c0_86 = arith.constant 0 : index
    %246 = vector.load %arg14[%c0_84, %c0_85, %c0_86] : memref<1x1x32xf32, #tpu.memory_space<vmem>>, vector<1x1x32xf32>
    %247 = vector.shape_cast %246 : vector<1x1x32xf32> to vector<1x32xf32>
    %248 = vector.broadcast %247 : vector<1x32xf32> to vector<16x32xf32>
    %249 = arith.addf %245, %248 : vector<16x32xf32>
    %250 = arith.addf %196, %249 : vector<16x32xf32>
    %c0_87 = arith.constant 0 : index
    %c0_88 = arith.constant 0 : index
    %251 = vector.load %arg35[%c0_87, %c0_88] : memref<16x32xf32, #tpu.memory_space<vmem>>, vector<16x32xf32>
    tpu.vector_store %arg35[%c0_87, %c0_88], %250 {strides = array<i32>} : memref<16x32xf32, #tpu.memory_space<vmem>>, vector<16x32xf32>,
    %c1_i32_89 = arith.constant 1 : i32
    %252 = arith.cmpi eq, %arg1, %c1_i32_89 : i32
    %253 = arith.extui %252 : i1 to i32
    %c0_i32_90 = arith.constant 0 : i32
    %254 = arith.cmpi ne, %253, %c0_i32_90 : i32
    scf.if %254 {
      %255 = vector.shape_cast %250 : vector<16x32xf32> to vector<2x8x32xf32>
      %256 = vector.extract_strided_slice %255 {offsets = [0, 7, 0], sizes = [2, 1, 32], strides = [1, 1, 1]} : vector<2x8x32xf32> to vector<2x1x32xf32>
      %257 = vector.shape_cast %256 : vector<2x1x32xf32> to vector<2x32xf32>
      %c0_91 = arith.constant 0 : index
      %c0_92 = arith.constant 0 : index
      %258 = vector.load %arg15[%c0_91, %c0_92] : memref<1x32xf32, #tpu.memory_space<vmem>>, vector<1x32xf32>
      %c0_93 = arith.constant 0 : index
      %c0_94 = arith.constant 0 : index
      %259 = vector.load %arg16[%c0_93, %c0_94] : memref<1x32xf32, #tpu.memory_space<vmem>>, vector<1x32xf32>
      %cst_95 = arith.constant dense<0.000000e+00> : vector<2xf32>
      %260 = vector.multi_reduction <add>, %257, %cst_95 [1] : vector<2x32xf32> to vector<2xf32>
      %261 = vector.shape_cast %260 : vector<2xf32> to vector<2x1xf32>
      %cst_96 = arith.constant 3.200000e+01 : f32
      %262 = vector.broadcast %cst_96 : f32 to vector<2x1xf32>
      %263 = arith.divf %261, %262 : vector<2x1xf32>
      %264 = vector.broadcast %263 : vector<2x1xf32> to vector<2x32xf32>
      %265 = arith.subf %257, %264 : vector<2x32xf32>
      %266 = arith.mulf %265, %265 : vector<2x32xf32>
      %cst_97 = arith.constant dense<0.000000e+00> : vector<2xf32>
      %267 = vector.multi_reduction <add>, %266, %cst_97 [1] : vector<2x32xf32> to vector<2xf32>
      %268 = vector.shape_cast %267 : vector<2xf32> to vector<2x1xf32>
      %cst_98 = arith.constant 3.200000e+01 : f32
      %269 = vector.broadcast %cst_98 : f32 to vector<2x1xf32>
      %270 = arith.divf %268, %269 : vector<2x1xf32>
      %cst_99 = arith.constant 9.99999974E-6 : f32
      %271 = vector.broadcast %cst_99 : f32 to vector<2x1xf32>
      %272 = arith.addf %270, %271 : vector<2x1xf32>
      %273 = math.rsqrt %272 : vector<2x1xf32>
      %274 = vector.broadcast %273 : vector<2x1xf32> to vector<2x32xf32>
      %275 = arith.mulf %265, %274 : vector<2x32xf32>
      %276 = vector.broadcast %258 : vector<1x32xf32> to vector<2x32xf32>
      %277 = arith.mulf %275, %276 : vector<2x32xf32>
      %278 = vector.broadcast %259 : vector<1x32xf32> to vector<2x32xf32>
      %279 = arith.addf %277, %278 : vector<2x32xf32>
      %280 = arith.truncf %279 : vector<2x32xf32> to vector<2x32xbf16>
      %c0_100 = arith.constant 0 : index
      %c0_101 = arith.constant 0 : index
      %281 = vector.load %arg17[%c0_100, %c0_101] : memref<32x128xbf16, #tpu.memory_space<vmem>>, vector<32x128xbf16>
      %cst_102 = arith.constant dense<0.000000e+00> : vector<2x128xf32>
      %282 = tpu.matmul %280, %281, %cst_102 {dimension_numbers = #tpu.dot_dimension_numbers<[1], [0], [0], [1], [0, 0, 1, 1], [], []>} : vector<2x32xbf16>, vector<32x128xbf16>, vector<2x128xf32> -> vector<2x128xf32>
      %c0_103 = arith.constant 0 : index
      %c0_104 = arith.constant 0 : index
      %283 = vector.load %arg18[%c0_103, %c0_104] : memref<1x128xf32, #tpu.memory_space<vmem>>, vector<1x128xf32>
      %284 = vector.broadcast %283 : vector<1x128xf32> to vector<2x128xf32>
      %285 = arith.addf %282, %284 : vector<2x128xf32>
      %cst_105 = arith.constant 5.000000e-01 : f32
      %286 = vector.broadcast %cst_105 : f32 to vector<2x128xf32>
      %287 = arith.mulf %286, %285 : vector<2x128xf32>
      %cst_106 = arith.constant 4.471500e-02 : f32
      %288 = vector.broadcast %cst_106 : f32 to vector<2x128xf32>
      %289 = arith.mulf %288, %285 : vector<2x128xf32>
      %290 = arith.mulf %289, %285 : vector<2x128xf32>
      %291 = arith.mulf %290, %285 : vector<2x128xf32>
      %292 = arith.addf %285, %291 : vector<2x128xf32>
      %cst_107 = arith.constant 0.797884583 : f32
      %293 = vector.broadcast %cst_107 : f32 to vector<2x128xf32>
      %294 = arith.mulf %293, %292 : vector<2x128xf32>
      %295 = math.tanh %294 : vector<2x128xf32>
      %cst_108 = arith.constant 1.000000e+00 : f32
      %296 = vector.broadcast %cst_108 : f32 to vector<2x128xf32>
      %297 = arith.addf %296, %295 : vector<2x128xf32>
      %298 = arith.mulf %287, %297 : vector<2x128xf32>
      %299 = arith.truncf %298 : vector<2x128xf32> to vector<2x128xbf16>
      %c0_109 = arith.constant 0 : index
      %c0_110 = arith.constant 0 : index
      %300 = vector.load %arg19[%c0_109, %c0_110] : memref<128x256xbf16, #tpu.memory_space<vmem>>, vector<128x256xbf16>
      %cst_111 = arith.constant dense<0.000000e+00> : vector<2x256xf32>
      %301 = tpu.matmul %299, %300, %cst_111 {dimension_numbers = #tpu.dot_dimension_numbers<[1], [0], [0], [1], [0, 0, 1, 1], [], []>} : vector<2x128xbf16>, vector<128x256xbf16>, vector<2x256xf32> -> vector<2x256xf32>
      %c0_112 = arith.constant 0 : index
      %c0_113 = arith.constant 0 : index
      %302 = vector.load %arg20[%c0_112, %c0_113] : memref<1x256xf32, #tpu.memory_space<vmem>>, vector<1x256xf32>
      %303 = vector.broadcast %302 : vector<1x256xf32> to vector<2x256xf32>
      %304 = arith.addf %301, %303 : vector<2x256xf32>
      %cst_114 = arith.constant 5.000000e-01 : f32
      %305 = vector.broadcast %cst_114 : f32 to vector<2x256xf32>
      %306 = arith.mulf %305, %304 : vector<2x256xf32>
      %cst_115 = arith.constant 4.471500e-02 : f32
      %307 = vector.broadcast %cst_115 : f32 to vector<2x256xf32>
      %308 = arith.mulf %307, %304 : vector<2x256xf32>
      %309 = arith.mulf %308, %304 : vector<2x256xf32>
      %310 = arith.mulf %309, %304 : vector<2x256xf32>
      %311 = arith.addf %304, %310 : vector<2x256xf32>
      %cst_116 = arith.constant 0.797884583 : f32
      %312 = vector.broadcast %cst_116 : f32 to vector<2x256xf32>
      %313 = arith.mulf %312, %311 : vector<2x256xf32>
      %314 = math.tanh %313 : vector<2x256xf32>
      %cst_117 = arith.constant 1.000000e+00 : f32
      %315 = vector.broadcast %cst_117 : f32 to vector<2x256xf32>
      %316 = arith.addf %315, %314 : vector<2x256xf32>
      %317 = arith.mulf %306, %316 : vector<2x256xf32>
      %318 = arith.truncf %317 : vector<2x256xf32> to vector<2x256xbf16>
      %c0_118 = arith.constant 0 : index
      %c0_119 = arith.constant 0 : index
      %319 = vector.load %arg21[%c0_118, %c0_119] : memref<256x128xbf16, #tpu.memory_space<vmem>>, vector<256x128xbf16>
      %cst_120 = arith.constant dense<0.000000e+00> : vector<2x128xf32>
      %320 = tpu.matmul %318, %319, %cst_120 {dimension_numbers = #tpu.dot_dimension_numbers<[1], [0], [0], [1], [0, 0, 1, 1], [], []>} : vector<2x256xbf16>, vector<256x128xbf16>, vector<2x128xf32> -> vector<2x128xf32>
      %c0_121 = arith.constant 0 : index
      %c0_122 = arith.constant 0 : index
      %321 = vector.load %arg22[%c0_121, %c0_122] : memref<1x128xf32, #tpu.memory_space<vmem>>, vector<1x128xf32>
      %322 = vector.broadcast %321 : vector<1x128xf32> to vector<2x128xf32>
      %323 = arith.addf %320, %322 : vector<2x128xf32>
      %cst_123 = arith.constant 5.000000e-01 : f32
      %324 = vector.broadcast %cst_123 : f32 to vector<2x128xf32>
      %325 = arith.mulf %324, %323 : vector<2x128xf32>
      %cst_124 = arith.constant 4.471500e-02 : f32
      %326 = vector.broadcast %cst_124 : f32 to vector<2x128xf32>
      %327 = arith.mulf %326, %323 : vector<2x128xf32>
      %328 = arith.mulf %327, %323 : vector<2x128xf32>
      %329 = arith.mulf %328, %323 : vector<2x128xf32>
      %330 = arith.addf %323, %329 : vector<2x128xf32>
      %cst_125 = arith.constant 0.797884583 : f32
      %331 = vector.broadcast %cst_125 : f32 to vector<2x128xf32>
      %332 = arith.mulf %331, %330 : vector<2x128xf32>
      %333 = math.tanh %332 : vector<2x128xf32>
      %cst_126 = arith.constant 1.000000e+00 : f32
      %334 = vector.broadcast %cst_126 : f32 to vector<2x128xf32>
      %335 = arith.addf %334, %333 : vector<2x128xf32>
      %336 = arith.mulf %325, %335 : vector<2x128xf32>
      %337 = arith.truncf %336 : vector<2x128xf32> to vector<2x128xbf16>
      %c0_127 = arith.constant 0 : index
      %c0_128 = arith.constant 0 : index
      %338 = vector.load %arg23[%c0_127, %c0_128] : memref<128x3xbf16, #tpu.memory_space<vmem>>, vector<128x3xbf16>
      %cst_129 = arith.constant dense<0.000000e+00> : vector<2x3xf32>
      %339 = tpu.matmul %337, %338, %cst_129 {dimension_numbers = #tpu.dot_dimension_numbers<[1], [0], [0], [1], [0, 0, 1, 1], [], []>} : vector<2x128xbf16>, vector<128x3xbf16>, vector<2x3xf32> -> vector<2x3xf32>
      %c0_130 = arith.constant 0 : index
      %c0_131 = arith.constant 0 : index
      %340 = vector.load %arg24[%c0_130, %c0_131] : memref<1x3xf32, #tpu.memory_space<vmem>>, vector<1x3xf32>
      %341 = vector.broadcast %340 : vector<1x3xf32> to vector<2x3xf32>
      %342 = arith.addf %339, %341 : vector<2x3xf32>
      %c0_132 = arith.constant 0 : index
      %c0_133 = arith.constant 0 : index
      %343 = vector.load %arg33[%c0_132, %c0_133] : memref<2x3xf32, #tpu.memory_space<vmem>>, vector<2x3xf32>
      tpu.vector_store %arg33[%c0_132, %c0_133], %342 {strides = array<i32>} : memref<2x3xf32, #tpu.memory_space<vmem>>, vector<2x3xf32>,
      %344 = arith.truncf %279 : vector<2x32xf32> to vector<2x32xbf16>
      %c0_134 = arith.constant 0 : index
      %c0_135 = arith.constant 0 : index
      %345 = vector.load %arg25[%c0_134, %c0_135] : memref<32x128xbf16, #tpu.memory_space<vmem>>, vector<32x128xbf16>
      %cst_136 = arith.constant dense<0.000000e+00> : vector<2x128xf32>
      %346 = tpu.matmul %344, %345, %cst_136 {dimension_numbers = #tpu.dot_dimension_numbers<[1], [0], [0], [1], [0, 0, 1, 1], [], []>} : vector<2x32xbf16>, vector<32x128xbf16>, vector<2x128xf32> -> vector<2x128xf32>
      %c0_137 = arith.constant 0 : index
      %c0_138 = arith.constant 0 : index
      %347 = vector.load %arg26[%c0_137, %c0_138] : memref<1x128xf32, #tpu.memory_space<vmem>>, vector<1x128xf32>
      %348 = vector.broadcast %347 : vector<1x128xf32> to vector<2x128xf32>
      %349 = arith.addf %346, %348 : vector<2x128xf32>
      %cst_139 = arith.constant 5.000000e-01 : f32
      %350 = vector.broadcast %cst_139 : f32 to vector<2x128xf32>
      %351 = arith.mulf %350, %349 : vector<2x128xf32>
      %cst_140 = arith.constant 4.471500e-02 : f32
      %352 = vector.broadcast %cst_140 : f32 to vector<2x128xf32>
      %353 = arith.mulf %352, %349 : vector<2x128xf32>
      %354 = arith.mulf %353, %349 : vector<2x128xf32>
      %355 = arith.mulf %354, %349 : vector<2x128xf32>
      %356 = arith.addf %349, %355 : vector<2x128xf32>
      %cst_141 = arith.constant 0.797884583 : f32
      %357 = vector.broadcast %cst_141 : f32 to vector<2x128xf32>
      %358 = arith.mulf %357, %356 : vector<2x128xf32>
      %359 = math.tanh %358 : vector<2x128xf32>
      %cst_142 = arith.constant 1.000000e+00 : f32
      %360 = vector.broadcast %cst_142 : f32 to vector<2x128xf32>
      %361 = arith.addf %360, %359 : vector<2x128xf32>
      %362 = arith.mulf %351, %361 : vector<2x128xf32>
      %363 = arith.truncf %362 : vector<2x128xf32> to vector<2x128xbf16>
      %c0_143 = arith.constant 0 : index
      %c0_144 = arith.constant 0 : index
      %364 = vector.load %arg27[%c0_143, %c0_144] : memref<128x256xbf16, #tpu.memory_space<vmem>>, vector<128x256xbf16>
      %cst_145 = arith.constant dense<0.000000e+00> : vector<2x256xf32>
      %365 = tpu.matmul %363, %364, %cst_145 {dimension_numbers = #tpu.dot_dimension_numbers<[1], [0], [0], [1], [0, 0, 1, 1], [], []>} : vector<2x128xbf16>, vector<128x256xbf16>, vector<2x256xf32> -> vector<2x256xf32>
      %c0_146 = arith.constant 0 : index
      %c0_147 = arith.constant 0 : index
      %366 = vector.load %arg28[%c0_146, %c0_147] : memref<1x256xf32, #tpu.memory_space<vmem>>, vector<1x256xf32>
      %367 = vector.broadcast %366 : vector<1x256xf32> to vector<2x256xf32>
      %368 = arith.addf %365, %367 : vector<2x256xf32>
      %cst_148 = arith.constant 5.000000e-01 : f32
      %369 = vector.broadcast %cst_148 : f32 to vector<2x256xf32>
      %370 = arith.mulf %369, %368 : vector<2x256xf32>
      %cst_149 = arith.constant 4.471500e-02 : f32
      %371 = vector.broadcast %cst_149 : f32 to vector<2x256xf32>
      %372 = arith.mulf %371, %368 : vector<2x256xf32>
      %373 = arith.mulf %372, %368 : vector<2x256xf32>
      %374 = arith.mulf %373, %368 : vector<2x256xf32>
      %375 = arith.addf %368, %374 : vector<2x256xf32>
      %cst_150 = arith.constant 0.797884583 : f32
      %376 = vector.broadcast %cst_150 : f32 to vector<2x256xf32>
      %377 = arith.mulf %376, %375 : vector<2x256xf32>
      %378 = math.tanh %377 : vector<2x256xf32>
      %cst_151 = arith.constant 1.000000e+00 : f32
      %379 = vector.broadcast %cst_151 : f32 to vector<2x256xf32>
      %380 = arith.addf %379, %378 : vector<2x256xf32>
      %381 = arith.mulf %370, %380 : vector<2x256xf32>
      %382 = arith.truncf %381 : vector<2x256xf32> to vector<2x256xbf16>
      %c0_152 = arith.constant 0 : index
      %c0_153 = arith.constant 0 : index
      %383 = vector.load %arg29[%c0_152, %c0_153] : memref<256x128xbf16, #tpu.memory_space<vmem>>, vector<256x128xbf16>
      %cst_154 = arith.constant dense<0.000000e+00> : vector<2x128xf32>
      %384 = tpu.matmul %382, %383, %cst_154 {dimension_numbers = #tpu.dot_dimension_numbers<[1], [0], [0], [1], [0, 0, 1, 1], [], []>} : vector<2x256xbf16>, vector<256x128xbf16>, vector<2x128xf32> -> vector<2x128xf32>
      %c0_155 = arith.constant 0 : index
      %c0_156 = arith.constant 0 : index
      %385 = vector.load %arg30[%c0_155, %c0_156] : memref<1x128xf32, #tpu.memory_space<vmem>>, vector<1x128xf32>
      %386 = vector.broadcast %385 : vector<1x128xf32> to vector<2x128xf32>
      %387 = arith.addf %384, %386 : vector<2x128xf32>
      %cst_157 = arith.constant 5.000000e-01 : f32
      %388 = vector.broadcast %cst_157 : f32 to vector<2x128xf32>
      %389 = arith.mulf %388, %387 : vector<2x128xf32>
      %cst_158 = arith.constant 4.471500e-02 : f32
      %390 = vector.broadcast %cst_158 : f32 to vector<2x128xf32>
      %391 = arith.mulf %390, %387 : vector<2x128xf32>
      %392 = arith.mulf %391, %387 : vector<2x128xf32>
      %393 = arith.mulf %392, %387 : vector<2x128xf32>
      %394 = arith.addf %387, %393 : vector<2x128xf32>
      %cst_159 = arith.constant 0.797884583 : f32
      %395 = vector.broadcast %cst_159 : f32 to vector<2x128xf32>
      %396 = arith.mulf %395, %394 : vector<2x128xf32>
      %397 = math.tanh %396 : vector<2x128xf32>
      %cst_160 = arith.constant 1.000000e+00 : f32
      %398 = vector.broadcast %cst_160 : f32 to vector<2x128xf32>
      %399 = arith.addf %398, %397 : vector<2x128xf32>
      %400 = arith.mulf %389, %399 : vector<2x128xf32>
      %401 = arith.truncf %400 : vector<2x128xf32> to vector<2x128xbf16>
      %c0_161 = arith.constant 0 : index
      %c0_162 = arith.constant 0 : index
      %402 = vector.load %arg31[%c0_161, %c0_162] : memref<128x1xbf16, #tpu.memory_space<vmem>>, vector<128x1xbf16>
      %cst_163 = arith.constant dense<0.000000e+00> : vector<2x1xf32>
      %403 = tpu.matmul %401, %402, %cst_163 {dimension_numbers = #tpu.dot_dimension_numbers<[1], [0], [0], [1], [0, 0, 1, 1], [], []>} : vector<2x128xbf16>, vector<128x1xbf16>, vector<2x1xf32> -> vector<2x1xf32>
      %c0_164 = arith.constant 0 : index
      %c0_165 = arith.constant 0 : index
      %404 = vector.load %arg32[%c0_164, %c0_165] : memref<1x1xf32, #tpu.memory_space<vmem>>, vector<1x1xf32>
      %405 = vector.broadcast %404 : vector<1x1xf32> to vector<2x1xf32>
      %406 = arith.addf %403, %405 : vector<2x1xf32>
      %c0_166 = arith.constant 0 : index
      %c0_167 = arith.constant 0 : index
      %407 = vector.load %arg34[%c0_166, %c0_167] : memref<2x1xf32, #tpu.memory_space<vmem>>, vector<2x1xf32>
      tpu.vector_store %arg34[%c0_166, %c0_167], %406 {strides = array<i32>} : memref<2x1xf32, #tpu.memory_space<vmem>>, vector<2x1xf32>,
    } else {
    }
    return
  }
  func.func @transform_0(%arg0: i32, %arg1: i32) -> (i32, i32) {
    %c0_i32 = arith.constant 0 : i32
    %c0_i32_0 = arith.constant 0 : i32
    return %arg0, %c0_i32 : i32, i32
  }
  func.func @transform_1(%arg0: i32, %arg1: i32) -> (i32, i32, i32) {
    %c0_i32 = arith.constant 0 : i32
    %c0_i32_0 = arith.constant 0 : i32
    %c0_i32_1 = arith.constant 0 : i32
    return %arg1, %c0_i32, %c0_i32_0 : i32, i32, i32
  }
  func.func @transform_2(%arg0: i32, %arg1: i32) -> (i32, i32, i32) {
    %c0_i32 = arith.constant 0 : i32
    %c0_i32_0 = arith.constant 0 : i32
    %c0_i32_1 = arith.constant 0 : i32
    return %arg1, %c0_i32, %c0_i32_0 : i32, i32, i32
  }
  func.func @transform_3(%arg0: i32, %arg1: i32) -> (i32, i32, i32) {
    %c0_i32 = arith.constant 0 : i32
    %c0_i32_0 = arith.constant 0 : i32
    %c0_i32_1 = arith.constant 0 : i32
    return %arg1, %c0_i32, %c0_i32_0 : i32, i32, i32
  }
  func.func @transform_4(%arg0: i32, %arg1: i32) -> (i32, i32, i32) {
    %c0_i32 = arith.constant 0 : i32
    %c0_i32_0 = arith.constant 0 : i32
    %c0_i32_1 = arith.constant 0 : i32
    return %arg1, %c0_i32, %c0_i32_0 : i32, i32, i32
  }
  func.func @transform_5(%arg0: i32, %arg1: i32) -> (i32, i32, i32) {
    %c0_i32 = arith.constant 0 : i32
    %c0_i32_0 = arith.constant 0 : i32
    %c0_i32_1 = arith.constant 0 : i32
    return %arg1, %c0_i32, %c0_i32_0 : i32, i32, i32
  }
  func.func @transform_6(%arg0: i32, %arg1: i32) -> (i32, i32, i32) {
    %c0_i32 = arith.constant 0 : i32
    %c0_i32_0 = arith.constant 0 : i32
    %c0_i32_1 = arith.constant 0 : i32
    return %arg1, %c0_i32, %c0_i32_0 : i32, i32, i32
  }
  func.func @transform_7(%arg0: i32, %arg1: i32) -> (i32, i32, i32) {
    %c0_i32 = arith.constant 0 : i32
    %c0_i32_0 = arith.constant 0 : i32
    %c0_i32_1 = arith.constant 0 : i32
    return %arg1, %c0_i32, %c0_i32_0 : i32, i32, i32
  }
  func.func @transform_8(%arg0: i32, %arg1: i32) -> (i32, i32, i32) {
    %c0_i32 = arith.constant 0 : i32
    %c0_i32_0 = arith.constant 0 : i32
    %c0_i32_1 = arith.constant 0 : i32
    return %arg1, %c0_i32, %c0_i32_0 : i32, i32, i32
  }
  func.func @transform_9(%arg0: i32, %arg1: i32) -> (i32, i32, i32) {
    %c0_i32 = arith.constant 0 : i32
    %c0_i32_0 = arith.constant 0 : i32
    %c0_i32_1 = arith.constant 0 : i32
    return %arg1, %c0_i32, %c0_i32_0 : i32, i32, i32
  }
  func.func @transform_10(%arg0: i32, %arg1: i32) -> (i32, i32, i32) {
    %c0_i32 = arith.constant 0 : i32
    %c0_i32_0 = arith.constant 0 : i32
    %c0_i32_1 = arith.constant 0 : i32
    return %arg1, %c0_i32, %c0_i32_0 : i32, i32, i32
  }
  func.func @transform_11(%arg0: i32, %arg1: i32) -> (i32, i32, i32) {
    %c0_i32 = arith.constant 0 : i32
    %c0_i32_0 = arith.constant 0 : i32
    %c0_i32_1 = arith.constant 0 : i32
    return %arg1, %c0_i32, %c0_i32_0 : i32, i32, i32
  }
  func.func @transform_12(%arg0: i32, %arg1: i32) -> (i32, i32, i32) {
    %c0_i32 = arith.constant 0 : i32
    %c0_i32_0 = arith.constant 0 : i32
    %c0_i32_1 = arith.constant 0 : i32
    return %arg1, %c0_i32, %c0_i32_0 : i32, i32, i32
  }
  func.func @transform_13(%arg0: i32, %arg1: i32) -> (i32, i32) {
    %c0_i32 = arith.constant 0 : i32
    %c0_i32_0 = arith.constant 0 : i32
    %c0_i32_1 = arith.constant 0 : i32
    return %c0_i32, %c0_i32_0 : i32, i32
  }
  func.func @transform_14(%arg0: i32, %arg1: i32) -> (i32, i32) {
    %c0_i32 = arith.constant 0 : i32
    %c0_i32_0 = arith.constant 0 : i32
    %c0_i32_1 = arith.constant 0 : i32
    return %c0_i32, %c0_i32_0 : i32, i32
  }
  func.func @transform_15(%arg0: i32, %arg1: i32) -> (i32, i32) {
    %c0_i32 = arith.constant 0 : i32
    %c0_i32_0 = arith.constant 0 : i32
    %c0_i32_1 = arith.constant 0 : i32
    return %c0_i32, %c0_i32_0 : i32, i32
  }
  func.func @transform_16(%arg0: i32, %arg1: i32) -> (i32, i32) {
    %c0_i32 = arith.constant 0 : i32
    %c0_i32_0 = arith.constant 0 : i32
    %c0_i32_1 = arith.constant 0 : i32
    return %c0_i32, %c0_i32_0 : i32, i32
  }
  func.func @transform_17(%arg0: i32, %arg1: i32) -> (i32, i32) {
    %c0_i32 = arith.constant 0 : i32
    %c0_i32_0 = arith.constant 0 : i32
    %c0_i32_1 = arith.constant 0 : i32
    return %c0_i32, %c0_i32_0 : i32, i32
  }
  func.func @transform_18(%arg0: i32, %arg1: i32) -> (i32, i32) {
    %c0_i32 = arith.constant 0 : i32
    %c0_i32_0 = arith.constant 0 : i32
    %c0_i32_1 = arith.constant 0 : i32
    return %c0_i32, %c0_i32_0 : i32, i32
  }
  func.func @transform_19(%arg0: i32, %arg1: i32) -> (i32, i32) {
    %c0_i32 = arith.constant 0 : i32
    %c0_i32_0 = arith.constant 0 : i32
    %c0_i32_1 = arith.constant 0 : i32
    return %c0_i32, %c0_i32_0 : i32, i32
  }
  func.func @transform_20(%arg0: i32, %arg1: i32) -> (i32, i32) {
    %c0_i32 = arith.constant 0 : i32
    %c0_i32_0 = arith.constant 0 : i32
    %c0_i32_1 = arith.constant 0 : i32
    return %c0_i32, %c0_i32_0 : i32, i32
  }
  func.func @transform_21(%arg0: i32, %arg1: i32) -> (i32, i32) {
    %c0_i32 = arith.constant 0 : i32
    %c0_i32_0 = arith.constant 0 : i32
    %c0_i32_1 = arith.constant 0 : i32
    return %c0_i32, %c0_i32_0 : i32, i32
  }
  func.func @transform_22(%arg0: i32, %arg1: i32) -> (i32, i32) {
    %c0_i32 = arith.constant 0 : i32
    %c0_i32_0 = arith.constant 0 : i32
    %c0_i32_1 = arith.constant 0 : i32
    return %c0_i32, %c0_i32_0 : i32, i32
  }
  func.func @transform_23(%arg0: i32, %arg1: i32) -> (i32, i32) {
    %c0_i32 = arith.constant 0 : i32
    %c0_i32_0 = arith.constant 0 : i32
    %c0_i32_1 = arith.constant 0 : i32
    return %c0_i32, %c0_i32_0 : i32, i32
  }
  func.func @transform_24(%arg0: i32, %arg1: i32) -> (i32, i32) {
    %c0_i32 = arith.constant 0 : i32
    %c0_i32_0 = arith.constant 0 : i32
    %c0_i32_1 = arith.constant 0 : i32
    return %c0_i32, %c0_i32_0 : i32, i32
  }
  func.func @transform_25(%arg0: i32, %arg1: i32) -> (i32, i32) {
    %c0_i32 = arith.constant 0 : i32
    %c0_i32_0 = arith.constant 0 : i32
    %c0_i32_1 = arith.constant 0 : i32
    return %c0_i32, %c0_i32_0 : i32, i32
  }
  func.func @transform_26(%arg0: i32, %arg1: i32) -> (i32, i32) {
    %c0_i32 = arith.constant 0 : i32
    %c0_i32_0 = arith.constant 0 : i32
    %c0_i32_1 = arith.constant 0 : i32
    return %c0_i32, %c0_i32_0 : i32, i32
  }
  func.func @transform_27(%arg0: i32, %arg1: i32) -> (i32, i32) {
    %c0_i32 = arith.constant 0 : i32
    %c0_i32_0 = arith.constant 0 : i32
    %c0_i32_1 = arith.constant 0 : i32
    return %c0_i32, %c0_i32_0 : i32, i32
  }
  func.func @transform_28(%arg0: i32, %arg1: i32) -> (i32, i32) {
    %c0_i32 = arith.constant 0 : i32
    %c0_i32_0 = arith.constant 0 : i32
    %c0_i32_1 = arith.constant 0 : i32
    return %c0_i32, %c0_i32_0 : i32, i32
  }
  func.func @transform_29(%arg0: i32, %arg1: i32) -> (i32, i32) {
    %c0_i32 = arith.constant 0 : i32
    %c0_i32_0 = arith.constant 0 : i32
    %c0_i32_1 = arith.constant 0 : i32
    return %c0_i32, %c0_i32_0 : i32, i32
  }
  func.func @transform_30(%arg0: i32, %arg1: i32) -> (i32, i32) {
    %c0_i32 = arith.constant 0 : i32
    %c0_i32_0 = arith.constant 0 : i32
    %c0_i32_1 = arith.constant 0 : i32
    return %c0_i32, %c0_i32_0 : i32, i32
  }
  func.func @transform_31(%arg0: i32, %arg1: i32) -> (i32, i32) {
    %c0_i32 = arith.constant 0 : i32
    %c0_i32_0 = arith.constant 0 : i32
    return %arg0, %c0_i32 : i32, i32
  }
  func.func @transform_32(%arg0: i32, %arg1: i32) -> (i32, i32) {
    %c0_i32 = arith.constant 0 : i32
    %c0_i32_0 = arith.constant 0 : i32
    return %arg0, %c0_i32 : i32, i32
  }
}

</mosaic_0001>

<llo_original>
// kernel: forward.2
$region0: #{forward.2}
  #allocation0 [shape = 'u32[]', space=smem, size = 0x4, offset = 0x4, fixed_abs, tag = 'smem constant byte address 0x4 - core index']
  #allocation1 [shape = 'u32[144,128]{1,0:T(1,128)}', space=vmem, size = 0x12000, scoped, tag = 'internal scratch']
  %s0 = inlined_call_operand.hbm [shape: f32[16,4], index: 0, kind: input, shape index: {}]
  %s1 = inlined_call_operand.hbm [shape: f32[16,1], index: 1, kind: input, shape index: {}]
  %s2 = inlined_call_operand.hbm [shape: f32[16,1], index: 2, kind: input, shape index: {}]
  %s3 = inlined_call_operand.hbm [shape: bf16[12,16], index: 3, kind: input, shape index: {}]
  %s4 = inlined_call_operand.hbm [shape: f32[1,16], index: 4, kind: input, shape index: {}]
  %s5 = inlined_call_operand.hbm [shape: bf16[48,32], index: 5, kind: input, shape index: {}]
  %s6 = inlined_call_operand.hbm [shape: f32[1,32], index: 6, kind: input, shape index: {}]
  %s7 = inlined_call_operand.hbm [shape: bf16[32,32], index: 7, kind: input, shape index: {}]
  %s8 = inlined_call_operand.hbm [shape: f32[1,32], index: 8, kind: input, shape index: {}]
  %s9 = inlined_call_operand.hbm [shape: f32[16,32], index: 9, kind: input, shape index: {}]
  %s10 = inlined_call_operand.hbm [shape: f32[16,32], index: 10, kind: output, shape index: {}]
  %s11 = sld [smem:[#allocation0]]
  $region90: #{forward.2} parent=0
    _
  %s13 = ssub.s32 1, %s11
  %s14 = scalar_select 0, %s13, %s11
  $region1: #{forward.2} parent=0
    #allocation2 [shape = 'u8[8192]{0}', space=vmem, size = 0x2000, scoped, tag = 'input window, operand 0, single buffered']
    #allocation3 [shape = 's32[1]{0}', space=sflag, size = 0x4, scoped, tag = 'scoped memory for forward.2']
    #allocation4 [shape = 's32[1]{0}', space=sflag, size = 0x4, scoped, tag = 'scoped memory for forward.2']
    #allocation5 [shape = 'u8[8192]{0}', space=vmem, size = 0x2000, scoped, tag = 'input window, operand 1, single buffered']
    #allocation6 [shape = 's32[1]{0}', space=sflag, size = 0x4, scoped, tag = 'scoped memory for forward.2']
    #allocation7 [shape = 'u8[8192]{0}', space=vmem, size = 0x2000, scoped, tag = 'input window, operand 2, single buffered']
    #allocation8 [shape = 'u8[4096]{0}', space=vmem, size = 0x1000, scoped, tag = 'input window, operand 3, single buffered']
    #allocation9 [shape = 's32[1]{0}', space=sflag, size = 0x4, scoped, tag = 'scoped memory for forward.2']
    #allocation10 [shape = 'u8[512]{0}', space=vmem, size = 0x400, scoped, tag = 'input window, operand 4, single buffered']
    #allocation11 [shape = 'u8[12288]{0}', space=vmem, size = 0x3000, scoped, tag = 'input window, operand 5, single buffered']
    #allocation12 [shape = 's32[1]{0}', space=sflag, size = 0x4, scoped, tag = 'scoped memory for forward.2']
    #allocation13 [shape = 'u8[512]{0}', space=vmem, size = 0x400, scoped, tag = 'input window, operand 6, single buffered']
    #allocation14 [shape = 'u8[8192]{0}', space=vmem, size = 0x2000, scoped, tag = 'input window, operand 7, single buffered']
    #allocation15 [shape = 's32[1]{0}', space=sflag, size = 0x4, scoped, tag = 'scoped memory for forward.2']
    #allocation16 [shape = 'u8[512]{0}', space=vmem, size = 0x400, scoped, tag = 'input window, operand 8, single buffered']
    #allocation17 [shape = 'u8[8192]{0}', space=vmem, size = 0x2000, scoped, tag = 'input window, operand 9, single buffered']
    #allocation18 [shape = 's32[1]{0}', space=sflag, size = 0x4, scoped, tag = 'scoped memory for forward.2']
    #allocation19 [shape = 'u8[8192]{0}', space=vmem, size = 0x2000, scoped, tag = 'output window, operand 0, single buffered']
    %15 = vsyncpa [#allocation3], 0
    %16 = vsyncpa [#allocation6], 0
    %17 = vsyncpa [#allocation9], 0
    %18 = vsyncpa [#allocation12], 0
    %19 = vsyncpa [#allocation15], 0
    %20 = vsyncpa [#allocation18], 0
    %21 = vsyncpa [#allocation4], 0
    // Predicated region
    $region2: #{forward.2} parent=1 // pred_check
      _
    $region3: #{forward.2} parent=1 // pred_check_branch
      %23 = sbr.rel (0) target = $region5
    $region4: #{forward.2} parent=1 // pred_region
      %s25 = ssub.s32 256, 256
      %26 = vsyncadd [#allocation3], %s25
      %s27 = sshll.u32 [#allocation2], 4
      %s28 = int_to_ptr.vmem [resolvable:$true] %s27
      %33 = dma.hbm_to_vmem [thread:$0]  %s0, 256, %s28, [#allocation3], 128, 128, 8
    $region5: #{forward.2} parent=1 // pred_fallthru
      _
    // Predicated region
    $region6: #{forward.2} parent=1 // pred_check
      _
    $region7: #{forward.2} parent=1 // pred_check_branch
      %35 = sbr.rel (0) target = $region9
    $region8: #{forward.2} parent=1 // pred_region
      %s37 = ssub.s32 256, 256
      %38 = vsyncadd [#allocation6], %s37
      %s39 = sshll.u32 [#allocation5], 4
      %s40 = int_to_ptr.vmem [resolvable:$true] %s39
      %45 = dma.hbm_to_vmem [thread:$0]  %s1, 256, %s40, [#allocation6], 128, 128, 8
    $region9: #{forward.2} parent=1 // pred_fallthru
      _
    // Predicated region
    $region10: #{forward.2} parent=1 // pred_check
      _
    $region11: #{forward.2} parent=1 // pred_check_branch
      %47 = sbr.rel (0) target = $region13
    $region12: #{forward.2} parent=1 // pred_region
      %s49 = ssub.s32 256, 256
      %50 = vsyncadd [#allocation6], %s49
      %s51 = sshll.u32 [#allocation7], 4
      %s52 = int_to_ptr.vmem [resolvable:$true] %s51
      %57 = dma.hbm_to_vmem [thread:$0]  %s2, 256, %s52, [#allocation6], 128, 128, 8
    $region13: #{forward.2} parent=1 // pred_fallthru
      _
    // Predicated region
    $region14: #{forward.2} parent=1 // pred_check
      _
    $region15: #{forward.2} parent=1 // pred_check_branch
      %59 = sbr.rel (0) target = $region17
    $region16: #{forward.2} parent=1 // pred_region
      %s61 = ssub.s32 128, 128
      %62 = vsyncadd [#allocation9], %s61
      %s63 = sshll.u32 [#allocation8], 4
      %s64 = int_to_ptr.vmem [resolvable:$true] %s63
      %69 = dma.hbm_to_vmem [thread:$0]  %s3, 128, %s64, [#allocation9], 64, 64, 4
    $region17: #{forward.2} parent=1 // pred_fallthru
      _
    // Predicated region
    $region18: #{forward.2} parent=1 // pred_check
      _
    $region19: #{forward.2} parent=1 // pred_check_branch
      %71 = sbr.rel (0) target = $region21
    $region20: #{forward.2} parent=1 // pred_region
      %s73 = ssub.s32 16, 16
      %74 = vsyncadd [#allocation9], %s73
      %s76 = sshll.u32 [#allocation10], 4
      %s77 = int_to_ptr.vmem [resolvable:$true] %s76
      %79 = dma.hbm_to_vmem [thread:$0]  %s4, 16, %s77, [#allocation9]
    $region21: #{forward.2} parent=1 // pred_fallthru
      _
    // Predicated region
    $region22: #{forward.2} parent=1 // pred_check
      _
    $region23: #{forward.2} parent=1 // pred_check_branch
      %81 = sbr.rel (0) target = $region25
    $region24: #{forward.2} parent=1 // pred_region
      %s83 = ssub.s32 384, 384
      %84 = vsyncadd [#allocation12], %s83
      %s85 = sshll.u32 [#allocation11], 4
      %s86 = int_to_ptr.vmem [resolvable:$true] %s85
      %91 = dma.hbm_to_vmem [thread:$0]  %s5, 384, %s86, [#allocation12], 64, 64, 4
    $region25: #{forward.2} parent=1 // pred_fallthru
      _
    // Predicated region
    $region26: #{forward.2} parent=1 // pred_check
      _
    $region27: #{forward.2} parent=1 // pred_check_branch
      %93 = sbr.rel (0) target = $region29
    $region28: #{forward.2} parent=1 // pred_region
      %s95 = ssub.s32 16, 16
      %96 = vsyncadd [#allocation12], %s95
      %s98 = sshll.u32 [#allocation13], 4
      %s99 = int_to_ptr.vmem [resolvable:$true] %s98
      %101 = dma.hbm_to_vmem [thread:$0]  %s6, 16, %s99, [#allocation12]
    $region29: #{forward.2} parent=1 // pred_fallthru
      _
    // Predicated region
    $region30: #{forward.2} parent=1 // pred_check
      _
    $region31: #{forward.2} parent=1 // pred_check_branch
      %103 = sbr.rel (0) target = $region33
    $region32: #{forward.2} parent=1 // pred_region
      %s105 = ssub.s32 256, 256
      %106 = vsyncadd [#allocation15], %s105
      %s107 = sshll.u32 [#allocation14], 4
      %s108 = int_to_ptr.vmem [resolvable:$true] %s107
      %113 = dma.hbm_to_vmem [thread:$0]  %s7, 256, %s108, [#allocation15], 64, 64, 4
    $region33: #{forward.2} parent=1 // pred_fallthru
      _
    // Predicated region
    $region34: #{forward.2} parent=1 // pred_check
      _
    $region35: #{forward.2} parent=1 // pred_check_branch
      %115 = sbr.rel (0) target = $region37
    $region36: #{forward.2} parent=1 // pred_region
      %s117 = ssub.s32 16, 16
      %118 = vsyncadd [#allocation15], %s117
      %s120 = sshll.u32 [#allocation16], 4
      %s121 = int_to_ptr.vmem [resolvable:$true] %s120
      %123 = dma.hbm_to_vmem [thread:$0]  %s8, 16, %s121, [#allocation15]
    $region37: #{forward.2} parent=1 // pred_fallthru
      _
    // Predicated region
    $region38: #{forward.2} parent=1 // pred_check
      _
    $region39: #{forward.2} parent=1 // pred_check_branch
      %125 = sbr.rel (0) target = $region41
    $region40: #{forward.2} parent=1 // pred_region
      %s127 = ssub.s32 256, 256
      %128 = vsyncadd [#allocation18], %s127
      %s129 = sshll.u32 [#allocation17], 4
      %s130 = int_to_ptr.vmem [resolvable:$true] %s129
      %135 = dma.hbm_to_vmem [thread:$0]  %s9, 256, %s130, [#allocation18], 128, 128, 8
    $region41: #{forward.2} parent=1 // pred_fallthru
      _
    // Predicated region
    $region42: #{forward.2} parent=1 // pred_check
      _
    $region43: #{forward.2} parent=1 // pred_check_branch
      %137 = sbr.rel (0) target = $region45
    $region44: #{forward.2} parent=1 // pred_region
      %138 = dma.done [#allocation3], 256
    $region45: #{forward.2} parent=1 // pred_fallthru
      _
    // Predicated region
    $region46: #{forward.2} parent=1 // pred_check
      _
    $region47: #{forward.2} parent=1 // pred_check_branch
      %140 = sbr.rel (0) target = $region49
    $region48: #{forward.2} parent=1 // pred_region
      %141 = dma.done [#allocation6], 256
    $region49: #{forward.2} parent=1 // pred_fallthru
      _
    // Predicated region
    $region50: #{forward.2} parent=1 // pred_check
      _
    $region51: #{forward.2} parent=1 // pred_check_branch
      %143 = sbr.rel (0) target = $region53
    $region52: #{forward.2} parent=1 // pred_region
      %144 = dma.done [#allocation6], 256
    $region53: #{forward.2} parent=1 // pred_fallthru
      _
    // Predicated region
    $region54: #{forward.2} parent=1 // pred_check
      _
    $region55: #{forward.2} parent=1 // pred_check_branch
      %146 = sbr.rel (0) target = $region57
    $region56: #{forward.2} parent=1 // pred_region
      %147 = dma.done [#allocation9], 128
    $region57: #{forward.2} parent=1 // pred_fallthru
      _
    // Predicated region
    $region58: #{forward.2} parent=1 // pred_check
      _
    $region59: #{forward.2} parent=1 // pred_check_branch
      %149 = sbr.rel (0) target = $region61
    $region60: #{forward.2} parent=1 // pred_region
      %150 = dma.done [#allocation9], 16
    $region61: #{forward.2} parent=1 // pred_fallthru
      _
    // Predicated region
    $region62: #{forward.2} parent=1 // pred_check
      _
    $region63: #{forward.2} parent=1 // pred_check_branch
      %152 = sbr.rel (0) target = $region65
    $region64: #{forward.2} parent=1 // pred_region
      %153 = dma.done [#allocation12], 384
    $region65: #{forward.2} parent=1 // pred_fallthru
      _
    // Predicated region
    $region66: #{forward.2} parent=1 // pred_check
      _
    $region67: #{forward.2} parent=1 // pred_check_branch
      %155 = sbr.rel (0) target = $region69
    $region68: #{forward.2} parent=1 // pred_region
      %156 = dma.done [#allocation12], 16
    $region69: #{forward.2} parent=1 // pred_fallthru
      _
    // Predicated region
    $region70: #{forward.2} parent=1 // pred_check
      _
    $region71: #{forward.2} parent=1 // pred_check_branch
      %158 = sbr.rel (0) target = $region73
    $region72: #{forward.2} parent=1 // pred_region
      %159 = dma.done [#allocation15], 256
    $region73: #{forward.2} parent=1 // pred_fallthru
      _
    // Predicated region
    $region74: #{forward.2} parent=1 // pred_check
      _
    $region75: #{forward.2} parent=1 // pred_check_branch
      %161 = sbr.rel (0) target = $region77
    $region76: #{forward.2} parent=1 // pred_region
      %162 = dma.done [#allocation15], 16
    $region77: #{forward.2} parent=1 // pred_fallthru
      _
    // Predicated region
    $region78: #{forward.2} parent=1 // pred_check
      _
    $region79: #{forward.2} parent=1 // pred_check_branch
      %164 = sbr.rel (0) target = $region81
    $region80: #{forward.2} parent=1 // pred_region
      %165 = dma.done [#allocation18], 256
    $region81: #{forward.2} parent=1 // pred_fallthru
      _
    %v167 = vld [vmem:[#allocation2] sm:$0xff]
    %v168 = vld [vmem:[#allocation2 + $0x8] sm:$0xff]
    %v169 = vld [vmem:[#allocation5] sm:$0xff]
    %v170 = vld [vmem:[#allocation5 + $0x8] sm:$0xff]
    %v171 = vld [vmem:[#allocation7] sm:$0xff]
    %v172 = vld [vmem:[#allocation7 + $0x8] sm:$0xff]
    %v173 = vrot.slane %v167, 7
    %v174 = vrot.slane %v168, 7
    %v175 = vlaneseq
    %v176 = vshrl.u32 %v175, 7
    %vm177 = vcmp.lt.s32.totalorder %v176, 1
    %v178 = vsel %vm177, %v173, %v174
    %v179 = vsel %vm177, %v174, %v173
    %181 = vset.pattern.permute.xlu0 0
    %182 = vperm.xlu0 %181, %v169
    %v183 = vpop.permute.xlu0 %182
    %186 = vset.pattern.permute.xlu0 0
    %187 = vperm.xlu0 %186, %v170
    %v188 = vpop.permute.xlu0 %187
    %v190 = vmul.f32 %v183, %v179
    %v191 = vmul.f32 %v188, %v178
    %v192 = vrot.slane %v167, 1
    %v193 = vrot.slane %v168, 1
    %vm194 = vcmp.lt.s32.totalorder %v176, 7
    %v195 = vsel %vm194, %v192, %v193
    %v196 = vsel %vm194, %v193, %v192
    %198 = vset.pattern.permute.xlu0 0
    %199 = vperm.xlu0 %198, %v171
    %v200 = vpop.permute.xlu0 %199
    %203 = vset.pattern.permute.xlu0 0
    %204 = vperm.xlu0 %203, %v172
    %v205 = vpop.permute.xlu0 %204
    %v207 = vmul.f32 %v200, %v195
    %v208 = vmul.f32 %v205, %v196
    %211 = vrot.lane.b32.xlu0 %v167, 4
    %v212 = vpop.permute.xlu0 %211
    %213 = vrot.lane.b32.xlu0 %v168, 4
    %v214 = vpop.permute.xlu0 %213
    %219 = vrot.lane.b32.xlu0 %v207, 8
    %v220 = vpop.permute.xlu0 %219
    %221 = vrot.lane.b32.xlu0 %v208, 8
    %v222 = vpop.permute.xlu0 %221
    %vm225 = vcmask 31744
    %v226 = vsel %vm225, %v190, %v212
    %v227 = vsel %vm225, %v191, %v214
    %vm228 = vcmask 64512
    %v229 = vsel %vm228, %v226, %v220
    %v230 = vsel %vm228, %v227, %v222
    %v231 = vpack.c.bf16 %v230, %v229
    %v232 = vld [vmem:[#allocation8] sm:$0xf]
    %v233 = vld [vmem:[#allocation8 + $0x4] sm:$0x3]
    %v234 = vld [vmem:[#allocation10] sm:$0x1]
    %v236 = vlaneseq
    %v237 = vshrl.u32 %v236, 7
    %v238 = vsub.s32 0, %v237
    %v239 = vrot.slane %v234, %v238
    %v243 = vunpack.c.l.b16 %v232
    %v244 = vunpack.c.l.b16 %v233
    %v245 = vpack.c.b16 %v244, %v243
    %vm246 = vcmask 97280
    %v248 = vsel %vm246, %v231, 0
    %vm250 = vcmask 1045504
    %v252 = vsel %vm250, %v245, 0
    %254 = vmatprep.subr.bf16.mxu0 0
    %255 = vmatpush1.bf16.msra.mxu0 %v252
    %256 = vmatprep.subr.bf16.mxu0 0
    %257 = vmatpush1.bf16.msra.mxu0 0
    %258 = vmatprep.subr.bf16.mxu0 0
    %259 = vmatpush1.bf16.msra.mxu0 0
    %260 = vmatprep.subr.bf16.mxu0 0
    %261 = vmatpush1.bf16.msra.mxu0 0
    %262 = vmatprep.subr.bf16.mxu0 0
    %263 = vmatpush1.bf16.msra.mxu0 0
    %264 = vmatprep.subr.bf16.mxu0 0
    %265 = vmatpush1.bf16.msra.mxu0 0
    %266 = vmatprep.subr.bf16.mxu0 0
    %267 = vmatpush1.bf16.msra.mxu0 0
    %268 = vmatprep.subr.bf16.mxu0 0
    %269 = vmatpush1.bf16.msra.mxu0 0
    %270 = vmatprep.subr.bf16.mxu0 0
    %271 = vmatpush1.bf16.msra.mxu0 0
    %272 = vmatprep.subr.bf16.mxu0 0
    %273 = vmatpush1.bf16.msra.mxu0 0
    %274 = vmatprep.subr.bf16.mxu0 0
    %275 = vmatpush1.bf16.msra.mxu0 0
    %276 = vmatprep.subr.bf16.mxu0 0
    %277 = vmatpush1.bf16.msra.mxu0 0
    %278 = vmatprep.subr.bf16.mxu0 0
    %279 = vmatpush1.bf16.msra.mxu0 0
    %280 = vmatprep.subr.bf16.mxu0 0
    %281 = vmatpush1.bf16.msra.mxu0 0
    %282 = vmatprep.subr.bf16.mxu0 0
    %283 = vmatpush1.bf16.msra.mxu0 0
    %284 = vmatprep.subr.bf16.mxu0 0
    %285 = vmatpush1.bf16.msra.mxu0 0
    %286 = vmatprep.mubr.bf16.mxu0 0
    %287 = vmatmul.mubr.bf16.gmra.mrb[0].mxu0 %v248
    %v288 = vpop.f32.mrb[0].mxu0
    %v289 = vadd.f32 %v239, %v288
    %v290 = vpop.f32.mrb[0].mxu0
    %v291 = vpop.f32.mrb[0].mxu0
    %v292 = vadd.f32 %v239, %v291
    %v293 = vpop.f32.mrb[0].mxu0
    %294 = vdwg.mxu0
    %v295 = vmul.f32 %v289, 0.5
    %v296 = vmul.f32 %v292, 0.5
    %v297 = vmul.f32 %v289, 0.044715
    %v298 = vmul.f32 %v292, 0.044715
    %v299 = vmul.f32 %v297, %v289
    %v300 = vmul.f32 %v298, %v292
    %v301 = vmul.f32 %v299, %v289
    %v302 = vmul.f32 %v300, %v292
    %v303 = vadd.f32 %v289, %v301
    %v304 = vadd.f32 %v292, %v302
    %v305 = vmul.f32 %v303, 0.7978846
    %v306 = vmul.f32 %v304, 0.7978846
    %v307 = vtanh.pop %v305
    %v308 = vtanh.pop %v306
    %v309 = vadd.f32 %v307, 1.0
    %v310 = vadd.f32 %v308, 1.0
    %v311 = vmul.f32 %v295, %v309
    %v312 = vmul.f32 %v296, %v310
    %v313 = vrot.slane %v311, 7
    %v314 = vrot.slane %v312, 7
    %v315 = vsel %vm177, %v313, %v314
    %v316 = vsel %vm177, %v314, %v313
    %v317 = vmul.f32 %v183, %v316
    %v318 = vmul.f32 %v188, %v315
    %v319 = vrot.slane %v311, 1
    %v320 = vrot.slane %v312, 1
    %v321 = vsel %vm194, %v319, %v320
    %v322 = vsel %vm194, %v320, %v319
    %v323 = vmul.f32 %v200, %v321
    %v324 = vmul.f32 %v205, %v322
    %327 = vrot.lane.b32.xlu0 %v311, 16
    %v328 = vpop.permute.xlu0 %327
    %329 = vrot.lane.b32.xlu0 %v312, 16
    %v330 = vpop.permute.xlu0 %329
    %335 = vrot.lane.b32.xlu0 %v323, 32
    %v336 = vpop.permute.xlu0 %335
    %337 = vrot.lane.b32.xlu0 %v324, 32
    %v338 = vpop.permute.xlu0 %337
    %vm341 = vcmask 130048
    %v342 = vsel %vm341, %v317, %v328
    %v343 = vsel %vm341, %v318, %v330
    %vm344 = vcmask 261120
    %v345 = vsel %vm344, %v342, %v336
    %v346 = vsel %vm344, %v343, %v338
    %v347 = vpack.c.bf16 %v346, %v345
    %v348 = vld [vmem:[#allocation11] sm:$0xf]
    %v349 = vld [vmem:[#allocation11 + $0x4] sm:$0xf]
    %v350 = vld [vmem:[#allocation11 + $0x8] sm:$0xf]
    %v351 = vld [vmem:[#allocation11 + $0xc] sm:$0xf]
    %v352 = vld [vmem:[#allocation11 + $0x10] sm:$0xf]
    %v353 = vld [vmem:[#allocation11 + $0x14] sm:$0xf]
    %v354 = vld [vmem:[#allocation13] sm:$0x1]
    %v356 = vlaneseq
    %v357 = vshrl.u32 %v356, 7
    %v358 = vsub.s32 0, %v357
    %v359 = vrot.slane %v354, %v358
    %v367 = vunpack.c.l.b16 %v348
    %v368 = vunpack.c.l.b16 %v349
    %v369 = vunpack.c.l.b16 %v350
    %v370 = vunpack.c.l.b16 %v351
    %v371 = vunpack.c.l.b16 %v352
    %v372 = vunpack.c.l.b16 %v353
    %v373 = vpack.c.b16 %v368, %v367
    %v374 = vpack.c.b16 %v370, %v369
    %v375 = vpack.c.b16 %v372, %v371
    %vm379 = vcmask 392192
    %v381 = vsel %vm379, %v347, 0
    %383 = vmatprep.subr.bf16.mxu0 0
    %384 = vmatpush1.bf16.msra.mxu0 %v373
    %385 = vmatprep.subr.bf16.mxu0 0
    %386 = vmatpush1.bf16.msra.mxu0 %v374
    %387 = vmatprep.subr.bf16.mxu0 0
    %388 = vmatpush1.bf16.msra.mxu0 %v375
    %389 = vmatprep.subr.bf16.mxu0 0
    %390 = vmatpush1.bf16.msra.mxu0 0
    %391 = vmatprep.subr.bf16.mxu0 0
    %392 = vmatpush1.bf16.msra.mxu0 0
    %393 = vmatprep.subr.bf16.mxu0 0
    %394 = vmatpush1.bf16.msra.mxu0 0
    %395 = vmatprep.subr.bf16.mxu0 0
    %396 = vmatpush1.bf16.msra.mxu0 0
    %397 = vmatprep.subr.bf16.mxu0 0
    %398 = vmatpush1.bf16.msra.mxu0 0
    %399 = vmatprep.subr.bf16.mxu0 0
    %400 = vmatpush1.bf16.msra.mxu0 0
    %401 = vmatprep.subr.bf16.mxu0 0
    %402 = vmatpush1.bf16.msra.mxu0 0
    %403 = vmatprep.subr.bf16.mxu0 0
    %404 = vmatpush1.bf16.msra.mxu0 0
    %405 = vmatprep.subr.bf16.mxu0 0
    %406 = vmatpush1.bf16.msra.mxu0 0
    %407 = vmatprep.subr.bf16.mxu0 0
    %408 = vmatpush1.bf16.msra.mxu0 0
    %409 = vmatprep.subr.bf16.mxu0 0
    %410 = vmatpush1.bf16.msra.mxu0 0
    %411 = vmatprep.subr.bf16.mxu0 0
    %412 = vmatpush1.bf16.msra.mxu0 0
    %413 = vmatprep.subr.bf16.mxu0 0
    %414 = vmatpush1.bf16.msra.mxu0 0
    %415 = vmatprep.mubr.bf16.mxu0 0
    %416 = vmatmul.mubr.bf16.gmra.mrb[0].mxu0 %v381
    %v417 = vpop.f32.mrb[0].mxu0
    %v418 = vadd.f32 %v359, %v417
    %v419 = vpop.f32.mrb[0].mxu0
    %v420 = vpop.f32.mrb[0].mxu0
    %v421 = vadd.f32 %v359, %v420
    %v422 = vpop.f32.mrb[0].mxu0
    %423 = vdwg.mxu0
    %v424 = vmul.f32 %v418, 0.5
    %v425 = vmul.f32 %v421, 0.5
    %v426 = vmul.f32 %v418, 0.044715
    %v427 = vmul.f32 %v421, 0.044715
    %v428 = vmul.f32 %v426, %v418
    %v429 = vmul.f32 %v427, %v421
    %v430 = vmul.f32 %v428, %v418
    %v431 = vmul.f32 %v429, %v421
    %v432 = vadd.f32 %v418, %v430
    %v433 = vadd.f32 %v421, %v431
    %v434 = vmul.f32 %v432, 0.7978846
    %v435 = vmul.f32 %v433, 0.7978846
    %v436 = vtanh.pop %v434
    %v437 = vtanh.pop %v435
    %v438 = vadd.f32 %v436, 1.0
    %v439 = vadd.f32 %v437, 1.0
    %v440 = vmul.f32 %v424, %v438
    %v441 = vmul.f32 %v425, %v439
    %v442 = vpack.c.bf16 %v441, %v440
    %v443 = vld [vmem:[#allocation14] sm:$0xf]
    %v444 = vld [vmem:[#allocation14 + $0x4] sm:$0xf]
    %v445 = vld [vmem:[#allocation14 + $0x8] sm:$0xf]
    %v446 = vld [vmem:[#allocation14 + $0xc] sm:$0xf]
    %v447 = vld [vmem:[#allocation16] sm:$0x1]
    %v449 = vlaneseq
    %v450 = vshrl.u32 %v449, 7
    %v451 = vsub.s32 0, %v450
    %v452 = vrot.slane %v447, %v451
    %v458 = vunpack.c.l.b16 %v443
    %v459 = vunpack.c.l.b16 %v444
    %v460 = vunpack.c.l.b16 %v445
    %v461 = vunpack.c.l.b16 %v446
    %v462 = vpack.c.b16 %v459, %v458
    %v463 = vpack.c.b16 %v461, %v460
    %v467 = vsel %vm344, %v442, 0
    %469 = vmatprep.subr.bf16.mxu0 0
    %470 = vmatpush1.bf16.msra.mxu0 %v462
    %471 = vmatprep.subr.bf16.mxu0 0
    %472 = vmatpush1.bf16.msra.mxu0 %v463
    %473 = vmatprep.subr.bf16.mxu0 0
    %474 = vmatpush1.bf16.msra.mxu0 0
    %475 = vmatprep.subr.bf16.mxu0 0
    %476 = vmatpush1.bf16.msra.mxu0 0
    %477 = vmatprep.subr.bf16.mxu0 0
    %478 = vmatpush1.bf16.msra.mxu0 0
    %479 = vmatprep.subr.bf16.mxu0 0
    %480 = vmatpush1.bf16.msra.mxu0 0
    %481 = vmatprep.subr.bf16.mxu0 0
    %482 = vmatpush1.bf16.msra.mxu0 0
    %483 = vmatprep.subr.bf16.mxu0 0
    %484 = vmatpush1.bf16.msra.mxu0 0
    %485 = vmatprep.subr.bf16.mxu0 0
    %486 = vmatpush1.bf16.msra.mxu0 0
    %487 = vmatprep.subr.bf16.mxu0 0
    %488 = vmatpush1.bf16.msra.mxu0 0
    %489 = vmatprep.subr.bf16.mxu0 0
    %490 = vmatpush1.bf16.msra.mxu0 0
    %491 = vmatprep.subr.bf16.mxu0 0
    %492 = vmatpush1.bf16.msra.mxu0 0
    %493 = vmatprep.subr.bf16.mxu0 0
    %494 = vmatpush1.bf16.msra.mxu0 0
    %495 = vmatprep.subr.bf16.mxu0 0
    %496 = vmatpush1.bf16.msra.mxu0 0
    %497 = vmatprep.subr.bf16.mxu0 0
    %498 = vmatpush1.bf16.msra.mxu0 0
    %499 = vmatprep.subr.bf16.mxu0 0
    %500 = vmatpush1.bf16.msra.mxu0 0
    %501 = vmatprep.mubr.bf16.mxu0 0
    %502 = vmatmul.mubr.bf16.gmra.mrb[0].mxu0 %v467
    %v503 = vpop.f32.mrb[0].mxu0
    %v504 = vadd.f32 %v452, %v503
    %v505 = vpop.f32.mrb[0].mxu0
    %v506 = vpop.f32.mrb[0].mxu0
    %v507 = vadd.f32 %v452, %v506
    %v508 = vpop.f32.mrb[0].mxu0
    %509 = vdwg.mxu0
    %v510 = vld [vmem:[#allocation17] sm:$0xff]
    %v511 = vld [vmem:[#allocation17 + $0x8] sm:$0xff]
    %v512 = vadd.f32 %v504, %v510
    %v513 = vadd.f32 %v507, %v511
    %514 = vst.msk [vmem:[#allocation19] sm:$0xff] %vm344, %v512
    %515 = vst.msk [vmem:[#allocation19 + $0x8] sm:$0xff] %vm344, %v513
    // Predicated region
    $region82: #{forward.2} parent=1 // pred_check
      _
    $region83: #{forward.2} parent=1 // pred_check_branch
      %517 = sbr.rel (0) target = $region85
    $region84: #{forward.2} parent=1 // pred_region
      %s519 = ssub.s32 256, 256
      %520 = vsyncadd [#allocation4], %s519
      %s521 = sshll.u32 [#allocation19], 4
      %s522 = int_to_ptr.vmem [resolvable:$true] %s521
      %527 = dma.vmem_to_hbm [thread:$0]  %s522, 256, %s10, [#allocation4], 128, 128, 8
    $region85: #{forward.2} parent=1 // pred_fallthru
      _
    // Predicated region
    $region86: #{forward.2} parent=1 // pred_check
      _
    $region87: #{forward.2} parent=1 // pred_check_branch
      %529 = sbr.rel (0) target = $region89
    $region88: #{forward.2} parent=1 // pred_region
      %530 = dma.done [#allocation4], 256
    $region89: #{forward.2} parent=1 // pred_fallthru
      _
    %531 = vsyncpa [#allocation3], 1
    %532 = vsyncpa [#allocation6], 1
    %533 = vsyncpa [#allocation9], 1
    %534 = vsyncpa [#allocation12], 1
    %535 = vsyncpa [#allocation15], 1
    %536 = vsyncpa [#allocation18], 1
    %537 = vsyncpa [#allocation4], 1

// kernel: forward.3
$region0: #{forward.3}
  #allocation0 [shape = 'u32[]', space=smem, size = 0x4, offset = 0x4, fixed_abs, tag = 'smem constant byte address 0x4 - core index']
  #allocation1 [shape = 'u32[144,128]{1,0:T(1,128)}', space=vmem, size = 0x12000, scoped, tag = 'internal scratch']
  #allocation2 [shape = 'f32[16,32]{1,0:T(8,128)}', space=vmem, size = 0x2000, scoped, tag = 'scratch operand']
  #allocation3 [shape = 'f32[1,1]{1,0:T(1,128)S(1)}', space=vmem, size = 0x200, scoped, tag = 'scoped memory for forward.3']
  %s0 = inlined_call_operand.smem [shape: u32[33], index: -1, kind: input, shape index: {}]
  %s1 = sld [smem:[%s0]]
  %s2 = scalar_lea.smem %s0, 1
  %s3 = sld [smem:[%s2]]
  %s4 = scalar_lea.smem %s0, 2
  %s5 = sld [smem:[%s4]]
  %s6 = scalar_lea.smem %s0, 3
  %s7 = sld [smem:[%s6]]
  %s8 = scalar_lea.smem %s0, 4
  %s9 = sld [smem:[%s8]]
  %s10 = scalar_lea.smem %s0, 5
  %s11 = sld [smem:[%s10]]
  %s12 = scalar_lea.smem %s0, 6
  %s13 = sld [smem:[%s12]]
  %s14 = scalar_lea.smem %s0, 7
  %s15 = sld [smem:[%s14]]
  %s16 = scalar_lea.smem %s0, 8
  %s17 = sld [smem:[%s16]]
  %s18 = scalar_lea.smem %s0, 9
  %s19 = sld [smem:[%s18]]
  %s20 = scalar_lea.smem %s0, 10
  %s21 = sld [smem:[%s20]]
  %s22 = scalar_lea.smem %s0, 11
  %s23 = sld [smem:[%s22]]
  %s24 = scalar_lea.smem %s0, 12
  %s25 = sld [smem:[%s24]]
  %s26 = scalar_lea.smem %s0, 13
  %s27 = sld [smem:[%s26]]
  %s28 = scalar_lea.smem %s0, 14
  %s29 = sld [smem:[%s28]]
  %s30 = scalar_lea.smem %s0, 15
  %s31 = sld [smem:[%s30]]
  %s32 = scalar_lea.smem %s0, 16
  %s33 = sld [smem:[%s32]]
  %s34 = scalar_lea.smem %s0, 17
  %s35 = sld [smem:[%s34]]
  %s36 = scalar_lea.smem %s0, 18
  %s37 = sld [smem:[%s36]]
  %s38 = scalar_lea.smem %s0, 19
  %s39 = sld [smem:[%s38]]
  %s40 = scalar_lea.smem %s0, 20
  %s41 = sld [smem:[%s40]]
  %s42 = scalar_lea.smem %s0, 21
  %s43 = sld [smem:[%s42]]
  %s44 = scalar_lea.smem %s0, 22
  %s45 = sld [smem:[%s44]]
  %s46 = scalar_lea.smem %s0, 23
  %s47 = sld [smem:[%s46]]
  %s48 = scalar_lea.smem %s0, 24
  %s49 = sld [smem:[%s48]]
  %s50 = scalar_lea.smem %s0, 25
  %s51 = sld [smem:[%s50]]
  %s52 = scalar_lea.smem %s0, 26
  %s53 = sld [smem:[%s52]]
  %s54 = scalar_lea.smem %s0, 27
  %s55 = sld [smem:[%s54]]
  %s56 = scalar_lea.smem %s0, 28
  %s57 = sld [smem:[%s56]]
  %s58 = scalar_lea.smem %s0, 29
  %s59 = sld [smem:[%s58]]
  %s60 = scalar_lea.smem %s0, 30
  %s61 = sld [smem:[%s60]]
  %s62 = scalar_lea.smem %s0, 31
  %s63 = sld [smem:[%s62]]
  %s64 = scalar_lea.smem %s0, 32
  %s65 = sld [smem:[%s64]]
  %66 = xla_tuple %s63, %s65
  %s67 = sld [smem:[#allocation0]]
  $region293: #{forward.3} parent=0
    _
  %s69 = ssub.s32 1, %s67
  %s70 = scalar_select 0, %s69, %s67
  %v71 = vstv %s61
  %72 = vst [vmem:[#allocation3] sm:$0x1] %v71
  $region1: #{forward.3} parent=0
    #allocation4 [shape = 'u8[8192]{0}', space=vmem, size = 0x2000, scoped, tag = 'input window, operand 0, single buffered']
    #allocation5 [shape = 's32[2]{0}', space=sflag, size = 0x8, scoped, tag = 'scoped memory for forward.3']
    #allocation6 [shape = 's32[2]{0}', space=sflag, size = 0x8, scoped, tag = 'scoped memory for forward.3']
    #allocation7 [shape = 'u8[1024]{0}', space=vmem, size = 0x400, scoped, tag = 'input window, operand 1']
    #allocation8 [shape = 's32[2]{0}', space=sflag, size = 0x8, scoped, tag = 'scoped memory for forward.3']
    #allocation9 [shape = 'u8[1024]{0}', space=vmem, size = 0x400, scoped, tag = 'input window, operand 2']
    #allocation10 [shape = 'u8[16384]{0}', space=vmem, size = 0x4000, scoped, tag = 'input window, operand 3']
    #allocation11 [shape = 's32[2]{0}', space=sflag, size = 0x8, scoped, tag = 'scoped memory for forward.3']
    #allocation12 [shape = 'u8[1024]{0}', space=vmem, size = 0x400, scoped, tag = 'input window, operand 4']
    #allocation13 [shape = 'u8[16384]{0}', space=vmem, size = 0x4000, scoped, tag = 'input window, operand 5']
    #allocation14 [shape = 's32[2]{0}', space=sflag, size = 0x8, scoped, tag = 'scoped memory for forward.3']
    #allocation15 [shape = 'u8[1024]{0}', space=vmem, size = 0x400, scoped, tag = 'input window, operand 6']
    #allocation16 [shape = 'u8[1024]{0}', space=vmem, size = 0x400, scoped, tag = 'input window, operand 7']
    #allocation17 [shape = 's32[2]{0}', space=sflag, size = 0x8, scoped, tag = 'scoped memory for forward.3']
    #allocation18 [shape = 'u8[1024]{0}', space=vmem, size = 0x400, scoped, tag = 'input window, operand 8']
    #allocation19 [shape = 'u8[16384]{0}', space=vmem, size = 0x4000, scoped, tag = 'input window, operand 9']
    #allocation20 [shape = 's32[2]{0}', space=sflag, size = 0x8, scoped, tag = 'scoped memory for forward.3']
    #allocation21 [shape = 'u8[1024]{0}', space=vmem, size = 0x400, scoped, tag = 'input window, operand 10']
    #allocation22 [shape = 'u8[65536]{0}', space=vmem, size = 0x10000, scoped, tag = 'input window, operand 11']
    #allocation23 [shape = 's32[2]{0}', space=sflag, size = 0x8, scoped, tag = 'scoped memory for forward.3']
    #allocation24 [shape = 'u8[1024]{0}', space=vmem, size = 0x400, scoped, tag = 'input window, operand 12']
    #allocation25 [shape = 'u8[512]{0}', space=vmem, size = 0x400, scoped, tag = 'input window, operand 13, single buffered']
    #allocation26 [shape = 's32[1]{0}', space=sflag, size = 0x4, scoped, tag = 'scoped memory for forward.3']
    #allocation27 [shape = 'u8[512]{0}', space=vmem, size = 0x400, scoped, tag = 'input window, operand 14, single buffered']
    #allocation28 [shape = 'u8[8192]{0}', space=vmem, size = 0x2000, scoped, tag = 'input window, operand 15, single buffered']
    #allocation29 [shape = 's32[1]{0}', space=sflag, size = 0x4, scoped, tag = 'scoped memory for forward.3']
    #allocation30 [shape = 'u8[512]{0}', space=vmem, size = 0x400, scoped, tag = 'input window, operand 16, single buffered']
    #allocation31 [shape = 'u8[65536]{0}', space=vmem, size = 0x10000, scoped, tag = 'input window, operand 17, single buffered']
    #allocation32 [shape = 's32[1]{0}', space=sflag, size = 0x4, scoped, tag = 'scoped memory for forward.3']
    #allocation33 [shape = 'u8[1024]{0}', space=vmem, size = 0x400, scoped, tag = 'input window, operand 18, single buffered']
    #allocation34 [shape = 'u8[65536]{0}', space=vmem, size = 0x10000, scoped, tag = 'input window, operand 19, single buffered']
    #allocation35 [shape = 's32[1]{0}', space=sflag, size = 0x4, scoped, tag = 'scoped memory for forward.3']
    #allocation36 [shape = 'u8[512]{0}', space=vmem, size = 0x400, scoped, tag = 'input window, operand 20, single buffered']
    #allocation37 [shape = 'u8[32768]{0}', space=vmem, size = 0x8000, scoped, tag = 'input window, operand 21, single buffered']
    #allocation38 [shape = 's32[1]{0}', space=sflag, size = 0x4, scoped, tag = 'scoped memory for forward.3']
    #allocation39 [shape = 'u8[512]{0}', space=vmem, size = 0x400, scoped, tag = 'input window, operand 22, single buffered']
    #allocation40 [shape = 'u8[8192]{0}', space=vmem, size = 0x2000, scoped, tag = 'input window, operand 23, single buffered']
    #allocation41 [shape = 's32[1]{0}', space=sflag, size = 0x4, scoped, tag = 'scoped memory for forward.3']
    #allocation42 [shape = 'u8[512]{0}', space=vmem, size = 0x400, scoped, tag = 'input window, operand 24, single buffered']
    #allocation43 [shape = 'u8[65536]{0}', space=vmem, size = 0x10000, scoped, tag = 'input window, operand 25, single buffered']
    #allocation44 [shape = 's32[1]{0}', space=sflag, size = 0x4, scoped, tag = 'scoped memory for forward.3']
    #allocation45 [shape = 'u8[1024]{0}', space=vmem, size = 0x400, scoped, tag = 'input window, operand 26, single buffered']
    #allocation46 [shape = 'u8[65536]{0}', space=vmem, size = 0x10000, scoped, tag = 'input window, operand 27, single buffered']
    #allocation47 [shape = 's32[1]{0}', space=sflag, size = 0x4, scoped, tag = 'scoped memory for forward.3']
    #allocation48 [shape = 'u8[512]{0}', space=vmem, size = 0x400, scoped, tag = 'input window, operand 28, single buffered']
    #allocation49 [shape = 'u8[32768]{0}', space=vmem, size = 0x8000, scoped, tag = 'input window, operand 29, single buffered']
    #allocation50 [shape = 's32[1]{0}', space=sflag, size = 0x4, scoped, tag = 'scoped memory for forward.3']
    #allocation51 [shape = 'u8[1024]{0}', space=vmem, size = 0x400, scoped, tag = 'output window, operand 0, single buffered']
    #allocation52 [shape = 'u8[1024]{0}', space=vmem, size = 0x400, scoped, tag = 'output window, operand 1, single buffered']
    #allocation53 [shape = 's32[1]{0}', space=sflag, size = 0x4, scoped, tag = 'scoped memory for forward.3']
    %73 = vsyncpa [#allocation5], 0
    %74 = vsyncpa [#allocation8], 0
    %s75 = scalar_lea.sflag [#allocation8], 1
    %76 = vsyncpa %s75, 0
    %77 = vsyncpa [#allocation11], 0
    %s78 = scalar_lea.sflag [#allocation11], 1
    %79 = vsyncpa %s78, 0
    %80 = vsyncpa [#allocation14], 0
    %s81 = scalar_lea.sflag [#allocation14], 1
    %82 = vsyncpa %s81, 0
    %83 = vsyncpa [#allocation17], 0
    %s84 = scalar_lea.sflag [#allocation17], 1
    %85 = vsyncpa %s84, 0
    %86 = vsyncpa [#allocation20], 0
    %s87 = scalar_lea.sflag [#allocation20], 1
    %88 = vsyncpa %s87, 0
    %89 = vsyncpa [#allocation23], 0
    %s90 = scalar_lea.sflag [#allocation23], 1
    %91 = vsyncpa %s90, 0
    %92 = vsyncpa [#allocation26], 0
    %93 = vsyncpa [#allocation29], 0
    %94 = vsyncpa [#allocation32], 0
    %95 = vsyncpa [#allocation35], 0
    %96 = vsyncpa [#allocation38], 0
    %97 = vsyncpa [#allocation41], 0
    %98 = vsyncpa [#allocation44], 0
    %99 = vsyncpa [#allocation47], 0
    %100 = vsyncpa [#allocation50], 0
    %101 = vsyncpa [#allocation6], 0
    %102 = vsyncpa [#allocation53], 0
    loop: start=0, step=1, limit=4
    $region2: #{forward.3} parent=1 // loop_pre_header
      _
    $region3: #{forward.3} parent=1 // loop_header
      %s104 = sphi 0, %s108
      %p105 = scmp.ge.s32.totalorder %s104, 4
      %s111 = sphi 0, %s123
      %s112 = sphi 0, %s119
      %s113 = sphi 0, %s111
      %s114 = sphi 0, %s112
      %s115 = sphi 0, %s113
      %s116 = sphi 0, %s114
      %s126 = sphi 0, %s128
      %s129 = sphi 0, %s126
      %s130 = sphi 0, %s129
      %s146 = sphi 0, %s130
      %s152 = sphi 0, %s154
      %s155 = sphi 0, %s152
      %s156 = sphi 0, %s155
      %s172 = sphi 0, %s156
      %s178 = sphi 0, %s180
      %s181 = sphi 0, %s178
      %s182 = sphi 0, %s181
      %s198 = sphi 0, %s182
      %s204 = sphi 0, %s206
      %s207 = sphi 0, %s204
      %s208 = sphi 0, %s207
      %s224 = sphi 0, %s208
      %s230 = sphi 0, %s232
      %s233 = sphi 0, %s230
      %s234 = sphi 0, %s233
      %s250 = sphi 0, %s234
      %s256 = sphi 0, %s258
      %s259 = sphi 0, %s256
      %s260 = sphi 0, %s259
      %s276 = sphi 0, %s260
      %s282 = sphi 0, %s284
      %s285 = sphi 0, %s282
      %s286 = sphi 0, %s285
      %s302 = sphi 0, %s286
      %s308 = sphi 0, %s310
      %s311 = sphi 0, %s308
      %s312 = sphi 0, %s311
      %s328 = sphi 0, %s312
      %s334 = sphi 0, %s336
      %s337 = sphi 0, %s334
      %s338 = sphi 0, %s337
      %s354 = sphi 0, %s338
      %s360 = sphi 0, %s362
      %s363 = sphi 0, %s360
      %s364 = sphi 0, %s363
      %s380 = sphi 0, %s364
      %s386 = sphi 0, %s388
      %s389 = sphi 0, %s386
      %s390 = sphi 0, %s389
      %s406 = sphi 0, %s390
      %s412 = sphi 0, %s414
      %s415 = sphi 0, %s412
      %s416 = sphi 0, %s415
      %s432 = sphi 0, %s416
      %s438 = sphi 0, %s440
      %s441 = sphi 0, %s438
      %s442 = sphi 0, %s441
      %s458 = sphi 0, %s442
      %s462 = sphi 0, %s462
      %s464 = sphi 0, %s462
      %s465 = sphi 0, %s464
      %s479 = sphi 0, %s465
      %s483 = sphi 0, %s483
      %s485 = sphi 0, %s483
      %s486 = sphi 0, %s485
      %s500 = sphi 0, %s486
      %s504 = sphi 0, %s504
      %s506 = sphi 0, %s504
      %s507 = sphi 0, %s506
      %s521 = sphi 0, %s507
      %s525 = sphi 0, %s525
      %s527 = sphi 0, %s525
      %s528 = sphi 0, %s527
      %s542 = sphi 0, %s528
      %s546 = sphi 0, %s546
      %s548 = sphi 0, %s546
      %s549 = sphi 0, %s548
      %s563 = sphi 0, %s549
      %s567 = sphi 0, %s567
      %s569 = sphi 0, %s567
      %s570 = sphi 0, %s569
      %s584 = sphi 0, %s570
      %s588 = sphi 0, %s588
      %s590 = sphi 0, %s588
      %s591 = sphi 0, %s590
      %s605 = sphi 0, %s591
      %s609 = sphi 0, %s609
      %s611 = sphi 0, %s609
      %s612 = sphi 0, %s611
      %s626 = sphi 0, %s612
      %s630 = sphi 0, %s630
      %s632 = sphi 0, %s630
      %s633 = sphi 0, %s632
      %s647 = sphi 0, %s633
      %s651 = sphi 0, %s651
      %s653 = sphi 0, %s651
      %s654 = sphi 0, %s653
      %s668 = sphi 0, %s654
      %s672 = sphi 0, %s672
      %s674 = sphi 0, %s672
      %s675 = sphi 0, %s674
      %s689 = sphi 0, %s675
      %s693 = sphi 0, %s693
      %s695 = sphi 0, %s693
      %s696 = sphi 0, %s695
      %s710 = sphi 0, %s696
      %s714 = sphi 0, %s714
      %s716 = sphi 0, %s714
      %s717 = sphi 0, %s716
      %s731 = sphi 0, %s717
      %s735 = sphi 0, %s735
      %s737 = sphi 0, %s735
      %s738 = sphi 0, %s737
      %s752 = sphi 0, %s738
      %s756 = sphi 0, %s756
      %s758 = sphi 0, %s756
      %s759 = sphi 0, %s758
      %s773 = sphi 0, %s759
      %s777 = sphi 0, %s777
      %s779 = sphi 0, %s777
      %s780 = sphi 0, %s779
      %s794 = sphi 0, %s780
      %s798 = sphi 0, %s798
      %s800 = sphi 0, %s798
      %s801 = sphi 0, %s800
      %s815 = sphi 0, %s801
      %s819 = sphi 0, %s819
      %s821 = sphi 0, %s819
      %s822 = sphi 0, %s821
      %s836 = sphi 0, %s822
      %s842 = sphi 0, %s844
      %s845 = sphi 0, %s842
      %s846 = sphi 0, %s845
      %s862 = sphi 0, %s846
      %s868 = sphi 0, %s870
      %s871 = sphi 0, %s868
      %s872 = sphi 0, %s871
      %s888 = sphi 0, %s872
    $region4: #{forward.3} parent=1 // loop_header_branch
      %107 = sbr.rel (%p105) target = $region8
    $region5: #{forward.3} parent=1 // loop_body
      %s109 = ssub.s32 %s104, 1
      %s110 = ssub.s32 %s104, 2
      %s117 = sadd.s32 1, %s112
      %p118 = scmp.ge.s32.totalorder %s117, 2
      %s119 = scalar_select %p118, 0, %s117
      %s120 = sadd.s32 1, %s111
      %s121 = scalar_select %p118, %s120, %s111
      %p122 = scmp.ge.s32.totalorder %s121, 1
      %s123 = scalar_select %p122, 0, %s121
      %s124 = ssub.s32 %s111, %s123
      %p125 = scmp.eq.s32.totalorder %s124, 0
      %s127 = sadd.s32 %s126, 1
      %s128 = scalar_select %p125, %s126, %s127
      %p131 = pneg %p125
      %p132 = scmp.eq.s32.totalorder %s104, 1
      %p133 = por %p131, %p132
      %p134 = scmp.ne.s32.totalorder %s126, %s129
      %p135 = scmp.eq.s32.totalorder %s104, 0
      %p136 = por %p134, %p135
      %p137 = scmp.ne.s32.totalorder %s126, %s129
      %p138 = scmp.eq.s32.totalorder %s109, 1
      %p139 = por %p137, %p138
      %p140 = scmp.ne.s32.totalorder %s129, %s130
      %p141 = scmp.eq.s32.totalorder %s109, 0
      %p142 = por %p140, %p141
      %p143 = scmp.ne.s32.totalorder %s129, %s130
      %p144 = scmp.eq.s32.totalorder %s110, 1
      %p145 = por %p143, %p144
      %p147 = scmp.ne.s32.totalorder %s130, %s146
      %p148 = scmp.eq.s32.totalorder %s110, 0
      %p149 = por %p147, %p148
      %s150 = ssub.s32 %s112, %s119
      %p151 = scmp.eq.s32.totalorder %s150, 0
      %s153 = sadd.s32 %s152, 1
      %s154 = scalar_select %p151, %s152, %s153
      %p157 = pneg %p151
      %p158 = scmp.eq.s32.totalorder %s104, 1
      %p159 = por %p157, %p158
      %p160 = scmp.ne.s32.totalorder %s152, %s155
      %p161 = scmp.eq.s32.totalorder %s104, 0
      %p162 = por %p160, %p161
      %p163 = scmp.ne.s32.totalorder %s152, %s155
      %p164 = scmp.eq.s32.totalorder %s109, 1
      %p165 = por %p163, %p164
      %p166 = scmp.ne.s32.totalorder %s155, %s156
      %p167 = scmp.eq.s32.totalorder %s109, 0
      %p168 = por %p166, %p167
      %p169 = scmp.ne.s32.totalorder %s155, %s156
      %p170 = scmp.eq.s32.totalorder %s110, 1
      %p171 = por %p169, %p170
      %p173 = scmp.ne.s32.totalorder %s156, %s172
      %p174 = scmp.eq.s32.totalorder %s110, 0
      %p175 = por %p173, %p174
      %s176 = ssub.s32 %s112, %s119
      %p177 = scmp.eq.s32.totalorder %s176, 0
      %s179 = sadd.s32 %s178, 1
      %s180 = scalar_select %p177, %s178, %s179
      %p183 = pneg %p177
      %p184 = scmp.eq.s32.totalorder %s104, 1
      %p185 = por %p183, %p184
      %p186 = scmp.ne.s32.totalorder %s178, %s181
      %p187 = scmp.eq.s32.totalorder %s104, 0
      %p188 = por %p186, %p187
      %p189 = scmp.ne.s32.totalorder %s178, %s181
      %p190 = scmp.eq.s32.totalorder %s109, 1
      %p191 = por %p189, %p190
      %p192 = scmp.ne.s32.totalorder %s181, %s182
      %p193 = scmp.eq.s32.totalorder %s109, 0
      %p194 = por %p192, %p193
      %p195 = scmp.ne.s32.totalorder %s181, %s182
      %p196 = scmp.eq.s32.totalorder %s110, 1
      %p197 = por %p195, %p196
      %p199 = scmp.ne.s32.totalorder %s182, %s198
      %p200 = scmp.eq.s32.totalorder %s110, 0
      %p201 = por %p199, %p200
      %s202 = ssub.s32 %s112, %s119
      %p203 = scmp.eq.s32.totalorder %s202, 0
      %s205 = sadd.s32 %s204, 1
      %s206 = scalar_select %p203, %s204, %s205
      %p209 = pneg %p203
      %p210 = scmp.eq.s32.totalorder %s104, 1
      %p211 = por %p209, %p210
      %p212 = scmp.ne.s32.totalorder %s204, %s207
      %p213 = scmp.eq.s32.totalorder %s104, 0
      %p214 = por %p212, %p213
      %p215 = scmp.ne.s32.totalorder %s204, %s207
      %p216 = scmp.eq.s32.totalorder %s109, 1
      %p217 = por %p215, %p216
      %p218 = scmp.ne.s32.totalorder %s207, %s208
      %p219 = scmp.eq.s32.totalorder %s109, 0
      %p220 = por %p218, %p219
      %p221 = scmp.ne.s32.totalorder %s207, %s208
      %p222 = scmp.eq.s32.totalorder %s110, 1
      %p223 = por %p221, %p222
      %p225 = scmp.ne.s32.totalorder %s208, %s224
      %p226 = scmp.eq.s32.totalorder %s110, 0
      %p227 = por %p225, %p226
      %s228 = ssub.s32 %s112, %s119
      %p229 = scmp.eq.s32.totalorder %s228, 0
      %s231 = sadd.s32 %s230, 1
      %s232 = scalar_select %p229, %s230, %s231
      %p235 = pneg %p229
      %p236 = scmp.eq.s32.totalorder %s104, 1
      %p237 = por %p235, %p236
      %p238 = scmp.ne.s32.totalorder %s230, %s233
      %p239 = scmp.eq.s32.totalorder %s104, 0
      %p240 = por %p238, %p239
      %p241 = scmp.ne.s32.totalorder %s230, %s233
      %p242 = scmp.eq.s32.totalorder %s109, 1
      %p243 = por %p241, %p242
      %p244 = scmp.ne.s32.totalorder %s233, %s234
      %p245 = scmp.eq.s32.totalorder %s109, 0
      %p246 = por %p244, %p245
      %p247 = scmp.ne.s32.totalorder %s233, %s234
      %p248 = scmp.eq.s32.totalorder %s110, 1
      %p249 = por %p247, %p248
      %p251 = scmp.ne.s32.totalorder %s234, %s250
      %p252 = scmp.eq.s32.totalorder %s110, 0
      %p253 = por %p251, %p252
      %s254 = ssub.s32 %s112, %s119
      %p255 = scmp.eq.s32.totalorder %s254, 0
      %s257 = sadd.s32 %s256, 1
      %s258 = scalar_select %p255, %s256, %s257
      %p261 = pneg %p255
      %p262 = scmp.eq.s32.totalorder %s104, 1
      %p263 = por %p261, %p262
      %p264 = scmp.ne.s32.totalorder %s256, %s259
      %p265 = scmp.eq.s32.totalorder %s104, 0
      %p266 = por %p264, %p265
      %p267 = scmp.ne.s32.totalorder %s256, %s259
      %p268 = scmp.eq.s32.totalorder %s109, 1
      %p269 = por %p267, %p268
      %p270 = scmp.ne.s32.totalorder %s259, %s260
      %p271 = scmp.eq.s32.totalorder %s109, 0
      %p272 = por %p270, %p271
      %p273 = scmp.ne.s32.totalorder %s259, %s260
      %p274 = scmp.eq.s32.totalorder %s110, 1
      %p275 = por %p273, %p274
      %p277 = scmp.ne.s32.totalorder %s260, %s276
      %p278 = scmp.eq.s32.totalorder %s110, 0
      %p279 = por %p277, %p278
      %s280 = ssub.s32 %s112, %s119
      %p281 = scmp.eq.s32.totalorder %s280, 0
      %s283 = sadd.s32 %s282, 1
      %s284 = scalar_select %p281, %s282, %s283
      %p287 = pneg %p281
      %p288 = scmp.eq.s32.totalorder %s104, 1
      %p289 = por %p287, %p288
      %p290 = scmp.ne.s32.totalorder %s282, %s285
      %p291 = scmp.eq.s32.totalorder %s104, 0
      %p292 = por %p290, %p291
      %p293 = scmp.ne.s32.totalorder %s282, %s285
      %p294 = scmp.eq.s32.totalorder %s109, 1
      %p295 = por %p293, %p294
      %p296 = scmp.ne.s32.totalorder %s285, %s286
      %p297 = scmp.eq.s32.totalorder %s109, 0
      %p298 = por %p296, %p297
      %p299 = scmp.ne.s32.totalorder %s285, %s286
      %p300 = scmp.eq.s32.totalorder %s110, 1
      %p301 = por %p299, %p300
      %p303 = scmp.ne.s32.totalorder %s286, %s302
      %p304 = scmp.eq.s32.totalorder %s110, 0
      %p305 = por %p303, %p304
      %s306 = ssub.s32 %s112, %s119
      %p307 = scmp.eq.s32.totalorder %s306, 0
      %s309 = sadd.s32 %s308, 1
      %s310 = scalar_select %p307, %s308, %s309
      %p313 = pneg %p307
      %p314 = scmp.eq.s32.totalorder %s104, 1
      %p315 = por %p313, %p314
      %p316 = scmp.ne.s32.totalorder %s308, %s311
      %p317 = scmp.eq.s32.totalorder %s104, 0
      %p318 = por %p316, %p317
      %p319 = scmp.ne.s32.totalorder %s308, %s311
      %p320 = scmp.eq.s32.totalorder %s109, 1
      %p321 = por %p319, %p320
      %p322 = scmp.ne.s32.totalorder %s311, %s312
      %p323 = scmp.eq.s32.totalorder %s109, 0
      %p324 = por %p322, %p323
      %p325 = scmp.ne.s32.totalorder %s311, %s312
      %p326 = scmp.eq.s32.totalorder %s110, 1
      %p327 = por %p325, %p326
      %p329 = scmp.ne.s32.totalorder %s312, %s328
      %p330 = scmp.eq.s32.totalorder %s110, 0
      %p331 = por %p329, %p330
      %s332 = ssub.s32 %s112, %s119
      %p333 = scmp.eq.s32.totalorder %s332, 0
      %s335 = sadd.s32 %s334, 1
      %s336 = scalar_select %p333, %s334, %s335
      %p339 = pneg %p333
      %p340 = scmp.eq.s32.totalorder %s104, 1
      %p341 = por %p339, %p340
      %p342 = scmp.ne.s32.totalorder %s334, %s337
      %p343 = scmp.eq.s32.totalorder %s104, 0
      %p344 = por %p342, %p343
      %p345 = scmp.ne.s32.totalorder %s334, %s337
      %p346 = scmp.eq.s32.totalorder %s109, 1
      %p347 = por %p345, %p346
      %p348 = scmp.ne.s32.totalorder %s337, %s338
      %p349 = scmp.eq.s32.totalorder %s109, 0
      %p350 = por %p348, %p349
      %p351 = scmp.ne.s32.totalorder %s337, %s338
      %p352 = scmp.eq.s32.totalorder %s110, 1
      %p353 = por %p351, %p352
      %p355 = scmp.ne.s32.totalorder %s338, %s354
      %p356 = scmp.eq.s32.totalorder %s110, 0
      %p357 = por %p355, %p356
      %s358 = ssub.s32 %s112, %s119
      %p359 = scmp.eq.s32.totalorder %s358, 0
      %s361 = sadd.s32 %s360, 1
      %s362 = scalar_select %p359, %s360, %s361
      %p365 = pneg %p359
      %p366 = scmp.eq.s32.totalorder %s104, 1
      %p367 = por %p365, %p366
      %p368 = scmp.ne.s32.totalorder %s360, %s363
      %p369 = scmp.eq.s32.totalorder %s104, 0
      %p370 = por %p368, %p369
      %p371 = scmp.ne.s32.totalorder %s360, %s363
      %p372 = scmp.eq.s32.totalorder %s109, 1
      %p373 = por %p371, %p372
      %p374 = scmp.ne.s32.totalorder %s363, %s364
      %p375 = scmp.eq.s32.totalorder %s109, 0
      %p376 = por %p374, %p375
      %p377 = scmp.ne.s32.totalorder %s363, %s364
      %p378 = scmp.eq.s32.totalorder %s110, 1
      %p379 = por %p377, %p378
      %p381 = scmp.ne.s32.totalorder %s364, %s380
      %p382 = scmp.eq.s32.totalorder %s110, 0
      %p383 = por %p381, %p382
      %s384 = ssub.s32 %s112, %s119
      %p385 = scmp.eq.s32.totalorder %s384, 0
      %s387 = sadd.s32 %s386, 1
      %s388 = scalar_select %p385, %s386, %s387
      %p391 = pneg %p385
      %p392 = scmp.eq.s32.totalorder %s104, 1
      %p393 = por %p391, %p392
      %p394 = scmp.ne.s32.totalorder %s386, %s389
      %p395 = scmp.eq.s32.totalorder %s104, 0
      %p396 = por %p394, %p395
      %p397 = scmp.ne.s32.totalorder %s386, %s389
      %p398 = scmp.eq.s32.totalorder %s109, 1
      %p399 = por %p397, %p398
      %p400 = scmp.ne.s32.totalorder %s389, %s390
      %p401 = scmp.eq.s32.totalorder %s109, 0
      %p402 = por %p400, %p401
      %p403 = scmp.ne.s32.totalorder %s389, %s390
      %p404 = scmp.eq.s32.totalorder %s110, 1
      %p405 = por %p403, %p404
      %p407 = scmp.ne.s32.totalorder %s390, %s406
      %p408 = scmp.eq.s32.totalorder %s110, 0
      %p409 = por %p407, %p408
      %s410 = ssub.s32 %s112, %s119
      %p411 = scmp.eq.s32.totalorder %s410, 0
      %s413 = sadd.s32 %s412, 1
      %s414 = scalar_select %p411, %s412, %s413
      %p417 = pneg %p411
      %p418 = scmp.eq.s32.totalorder %s104, 1
      %p419 = por %p417, %p418
      %p420 = scmp.ne.s32.totalorder %s412, %s415
      %p421 = scmp.eq.s32.totalorder %s104, 0
      %p422 = por %p420, %p421
      %p423 = scmp.ne.s32.totalorder %s412, %s415
      %p424 = scmp.eq.s32.totalorder %s109, 1
      %p425 = por %p423, %p424
      %p426 = scmp.ne.s32.totalorder %s415, %s416
      %p427 = scmp.eq.s32.totalorder %s109, 0
      %p428 = por %p426, %p427
      %p429 = scmp.ne.s32.totalorder %s415, %s416
      %p430 = scmp.eq.s32.totalorder %s110, 1
      %p431 = por %p429, %p430
      %p433 = scmp.ne.s32.totalorder %s416, %s432
      %p434 = scmp.eq.s32.totalorder %s110, 0
      %p435 = por %p433, %p434
      %s436 = ssub.s32 %s112, %s119
      %p437 = scmp.eq.s32.totalorder %s436, 0
      %s439 = sadd.s32 %s438, 1
      %s440 = scalar_select %p437, %s438, %s439
      %p443 = pneg %p437
      %p444 = scmp.eq.s32.totalorder %s104, 1
      %p445 = por %p443, %p444
      %p446 = scmp.ne.s32.totalorder %s438, %s441
      %p447 = scmp.eq.s32.totalorder %s104, 0
      %p448 = por %p446, %p447
      %p449 = scmp.ne.s32.totalorder %s438, %s441
      %p450 = scmp.eq.s32.totalorder %s109, 1
      %p451 = por %p449, %p450
      %p452 = scmp.ne.s32.totalorder %s441, %s442
      %p453 = scmp.eq.s32.totalorder %s109, 0
      %p454 = por %p452, %p453
      %p455 = scmp.ne.s32.totalorder %s441, %s442
      %p456 = scmp.eq.s32.totalorder %s110, 1
      %p457 = por %p455, %p456
      %p459 = scmp.ne.s32.totalorder %s442, %s458
      %p460 = scmp.eq.s32.totalorder %s110, 0
      %p461 = por %p459, %p460
      %s463 = sadd.s32 %s462, 1
      %p466 = scmp.eq.s32.totalorder %s104, 1
      %p467 = scmp.ne.s32.totalorder %s462, %s464
      %p468 = scmp.eq.s32.totalorder %s104, 0
      %p469 = por %p467, %p468
      %p470 = scmp.ne.s32.totalorder %s462, %s464
      %p471 = scmp.eq.s32.totalorder %s109, 1
      %p472 = por %p470, %p471
      %p473 = scmp.ne.s32.totalorder %s464, %s465
      %p474 = scmp.eq.s32.totalorder %s109, 0
      %p475 = por %p473, %p474
      %p476 = scmp.ne.s32.totalorder %s464, %s465
      %p477 = scmp.eq.s32.totalorder %s110, 1
      %p478 = por %p476, %p477
      %p480 = scmp.ne.s32.totalorder %s465, %s479
      %p481 = scmp.eq.s32.totalorder %s110, 0
      %p482 = por %p480, %p481
      %s484 = sadd.s32 %s483, 1
      %p487 = scmp.eq.s32.totalorder %s104, 1
      %p488 = scmp.ne.s32.totalorder %s483, %s485
      %p489 = scmp.eq.s32.totalorder %s104, 0
      %p490 = por %p488, %p489
      %p491 = scmp.ne.s32.totalorder %s483, %s485
      %p492 = scmp.eq.s32.totalorder %s109, 1
      %p493 = por %p491, %p492
      %p494 = scmp.ne.s32.totalorder %s485, %s486
      %p495 = scmp.eq.s32.totalorder %s109, 0
      %p496 = por %p494, %p495
      %p497 = scmp.ne.s32.totalorder %s485, %s486
      %p498 = scmp.eq.s32.totalorder %s110, 1
      %p499 = por %p497, %p498
      %p501 = scmp.ne.s32.totalorder %s486, %s500
      %p502 = scmp.eq.s32.totalorder %s110, 0
      %p503 = por %p501, %p502
      %s505 = sadd.s32 %s504, 1
      %p508 = scmp.eq.s32.totalorder %s104, 1
      %p509 = scmp.ne.s32.totalorder %s504, %s506
      %p510 = scmp.eq.s32.totalorder %s104, 0
      %p511 = por %p509, %p510
      %p512 = scmp.ne.s32.totalorder %s504, %s506
      %p513 = scmp.eq.s32.totalorder %s109, 1
      %p514 = por %p512, %p513
      %p515 = scmp.ne.s32.totalorder %s506, %s507
      %p516 = scmp.eq.s32.totalorder %s109, 0
      %p517 = por %p515, %p516
      %p518 = scmp.ne.s32.totalorder %s506, %s507
      %p519 = scmp.eq.s32.totalorder %s110, 1
      %p520 = por %p518, %p519
      %p522 = scmp.ne.s32.totalorder %s507, %s521
      %p523 = scmp.eq.s32.totalorder %s110, 0
      %p524 = por %p522, %p523
      %s526 = sadd.s32 %s525, 1
      %p529 = scmp.eq.s32.totalorder %s104, 1
      %p530 = scmp.ne.s32.totalorder %s525, %s527
      %p531 = scmp.eq.s32.totalorder %s104, 0
      %p532 = por %p530, %p531
      %p533 = scmp.ne.s32.totalorder %s525, %s527
      %p534 = scmp.eq.s32.totalorder %s109, 1
      %p535 = por %p533, %p534
      %p536 = scmp.ne.s32.totalorder %s527, %s528
      %p537 = scmp.eq.s32.totalorder %s109, 0
      %p538 = por %p536, %p537
      %p539 = scmp.ne.s32.totalorder %s527, %s528
      %p540 = scmp.eq.s32.totalorder %s110, 1
      %p541 = por %p539, %p540
      %p543 = scmp.ne.s32.totalorder %s528, %s542
      %p544 = scmp.eq.s32.totalorder %s110, 0
      %p545 = por %p543, %p544
      %s547 = sadd.s32 %s546, 1
      %p550 = scmp.eq.s32.totalorder %s104, 1
      %p551 = scmp.ne.s32.totalorder %s546, %s548
      %p552 = scmp.eq.s32.totalorder %s104, 0
      %p553 = por %p551, %p552
      %p554 = scmp.ne.s32.totalorder %s546, %s548
      %p555 = scmp.eq.s32.totalorder %s109, 1
      %p556 = por %p554, %p555
      %p557 = scmp.ne.s32.totalorder %s548, %s549
      %p558 = scmp.eq.s32.totalorder %s109, 0
      %p559 = por %p557, %p558
      %p560 = scmp.ne.s32.totalorder %s548, %s549
      %p561 = scmp.eq.s32.totalorder %s110, 1
      %p562 = por %p560, %p561
      %p564 = scmp.ne.s32.totalorder %s549, %s563
      %p565 = scmp.eq.s32.totalorder %s110, 0
      %p566 = por %p564, %p565
      %s568 = sadd.s32 %s567, 1
      %p571 = scmp.eq.s32.totalorder %s104, 1
      %p572 = scmp.ne.s32.totalorder %s567, %s569
      %p573 = scmp.eq.s32.totalorder %s104, 0
      %p574 = por %p572, %p573
      %p575 = scmp.ne.s32.totalorder %s567, %s569
      %p576 = scmp.eq.s32.totalorder %s109, 1
      %p577 = por %p575, %p576
      %p578 = scmp.ne.s32.totalorder %s569, %s570
      %p579 = scmp.eq.s32.totalorder %s109, 0
      %p580 = por %p578, %p579
      %p581 = scmp.ne.s32.totalorder %s569, %s570
      %p582 = scmp.eq.s32.totalorder %s110, 1
      %p583 = por %p581, %p582
      %p585 = scmp.ne.s32.totalorder %s570, %s584
      %p586 = scmp.eq.s32.totalorder %s110, 0
      %p587 = por %p585, %p586
      %s589 = sadd.s32 %s588, 1
      %p592 = scmp.eq.s32.totalorder %s104, 1
      %p593 = scmp.ne.s32.totalorder %s588, %s590
      %p594 = scmp.eq.s32.totalorder %s104, 0
      %p595 = por %p593, %p594
      %p596 = scmp.ne.s32.totalorder %s588, %s590
      %p597 = scmp.eq.s32.totalorder %s109, 1
      %p598 = por %p596, %p597
      %p599 = scmp.ne.s32.totalorder %s590, %s591
      %p600 = scmp.eq.s32.totalorder %s109, 0
      %p601 = por %p599, %p600
      %p602 = scmp.ne.s32.totalorder %s590, %s591
      %p603 = scmp.eq.s32.totalorder %s110, 1
      %p604 = por %p602, %p603
      %p606 = scmp.ne.s32.totalorder %s591, %s605
      %p607 = scmp.eq.s32.totalorder %s110, 0
      %p608 = por %p606, %p607
      %s610 = sadd.s32 %s609, 1
      %p613 = scmp.eq.s32.totalorder %s104, 1
      %p614 = scmp.ne.s32.totalorder %s609, %s611
      %p615 = scmp.eq.s32.totalorder %s104, 0
      %p616 = por %p614, %p615
      %p617 = scmp.ne.s32.totalorder %s609, %s611
      %p618 = scmp.eq.s32.totalorder %s109, 1
      %p619 = por %p617, %p618
      %p620 = scmp.ne.s32.totalorder %s611, %s612
      %p621 = scmp.eq.s32.totalorder %s109, 0
      %p622 = por %p620, %p621
      %p623 = scmp.ne.s32.totalorder %s611, %s612
      %p624 = scmp.eq.s32.totalorder %s110, 1
      %p625 = por %p623, %p624
      %p627 = scmp.ne.s32.totalorder %s612, %s626
      %p628 = scmp.eq.s32.totalorder %s110, 0
      %p629 = por %p627, %p628
      %s631 = sadd.s32 %s630, 1
      %p634 = scmp.eq.s32.totalorder %s104, 1
      %p635 = scmp.ne.s32.totalorder %s630, %s632
      %p636 = scmp.eq.s32.totalorder %s104, 0
      %p637 = por %p635, %p636
      %p638 = scmp.ne.s32.totalorder %s630, %s632
      %p639 = scmp.eq.s32.totalorder %s109, 1
      %p640 = por %p638, %p639
      %p641 = scmp.ne.s32.totalorder %s632, %s633
      %p642 = scmp.eq.s32.totalorder %s109, 0
      %p643 = por %p641, %p642
      %p644 = scmp.ne.s32.totalorder %s632, %s633
      %p645 = scmp.eq.s32.totalorder %s110, 1
      %p646 = por %p644, %p645
      %p648 = scmp.ne.s32.totalorder %s633, %s647
      %p649 = scmp.eq.s32.totalorder %s110, 0
      %p650 = por %p648, %p649
      %s652 = sadd.s32 %s651, 1
      %p655 = scmp.eq.s32.totalorder %s104, 1
      %p656 = scmp.ne.s32.totalorder %s651, %s653
      %p657 = scmp.eq.s32.totalorder %s104, 0
      %p658 = por %p656, %p657
      %p659 = scmp.ne.s32.totalorder %s651, %s653
      %p660 = scmp.eq.s32.totalorder %s109, 1
      %p661 = por %p659, %p660
      %p662 = scmp.ne.s32.totalorder %s653, %s654
      %p663 = scmp.eq.s32.totalorder %s109, 0
      %p664 = por %p662, %p663
      %p665 = scmp.ne.s32.totalorder %s653, %s654
      %p666 = scmp.eq.s32.totalorder %s110, 1
      %p667 = por %p665, %p666
      %p669 = scmp.ne.s32.totalorder %s654, %s668
      %p670 = scmp.eq.s32.totalorder %s110, 0
      %p671 = por %p669, %p670
      %s673 = sadd.s32 %s672, 1
      %p676 = scmp.eq.s32.totalorder %s104, 1
      %p677 = scmp.ne.s32.totalorder %s672, %s674
      %p678 = scmp.eq.s32.totalorder %s104, 0
      %p679 = por %p677, %p678
      %p680 = scmp.ne.s32.totalorder %s672, %s674
      %p681 = scmp.eq.s32.totalorder %s109, 1
      %p682 = por %p680, %p681
      %p683 = scmp.ne.s32.totalorder %s674, %s675
      %p684 = scmp.eq.s32.totalorder %s109, 0
      %p685 = por %p683, %p684
      %p686 = scmp.ne.s32.totalorder %s674, %s675
      %p687 = scmp.eq.s32.totalorder %s110, 1
      %p688 = por %p686, %p687
      %p690 = scmp.ne.s32.totalorder %s675, %s689
      %p691 = scmp.eq.s32.totalorder %s110, 0
      %p692 = por %p690, %p691
      %s694 = sadd.s32 %s693, 1
      %p697 = scmp.eq.s32.totalorder %s104, 1
      %p698 = scmp.ne.s32.totalorder %s693, %s695
      %p699 = scmp.eq.s32.totalorder %s104, 0
      %p700 = por %p698, %p699
      %p701 = scmp.ne.s32.totalorder %s693, %s695
      %p702 = scmp.eq.s32.totalorder %s109, 1
      %p703 = por %p701, %p702
      %p704 = scmp.ne.s32.totalorder %s695, %s696
      %p705 = scmp.eq.s32.totalorder %s109, 0
      %p706 = por %p704, %p705
      %p707 = scmp.ne.s32.totalorder %s695, %s696
      %p708 = scmp.eq.s32.totalorder %s110, 1
      %p709 = por %p707, %p708
      %p711 = scmp.ne.s32.totalorder %s696, %s710
      %p712 = scmp.eq.s32.totalorder %s110, 0
      %p713 = por %p711, %p712
      %s715 = sadd.s32 %s714, 1
      %p718 = scmp.eq.s32.totalorder %s104, 1
      %p719 = scmp.ne.s32.totalorder %s714, %s716
      %p720 = scmp.eq.s32.totalorder %s104, 0
      %p721 = por %p719, %p720
      %p722 = scmp.ne.s32.totalorder %s714, %s716
      %p723 = scmp.eq.s32.totalorder %s109, 1
      %p724 = por %p722, %p723
      %p725 = scmp.ne.s32.totalorder %s716, %s717
      %p726 = scmp.eq.s32.totalorder %s109, 0
      %p727 = por %p725, %p726
      %p728 = scmp.ne.s32.totalorder %s716, %s717
      %p729 = scmp.eq.s32.totalorder %s110, 1
      %p730 = por %p728, %p729
      %p732 = scmp.ne.s32.totalorder %s717, %s731
      %p733 = scmp.eq.s32.totalorder %s110, 0
      %p734 = por %p732, %p733
      %s736 = sadd.s32 %s735, 1
      %p739 = scmp.eq.s32.totalorder %s104, 1
      %p740 = scmp.ne.s32.totalorder %s735, %s737
      %p741 = scmp.eq.s32.totalorder %s104, 0
      %p742 = por %p740, %p741
      %p743 = scmp.ne.s32.totalorder %s735, %s737
      %p744 = scmp.eq.s32.totalorder %s109, 1
      %p745 = por %p743, %p744
      %p746 = scmp.ne.s32.totalorder %s737, %s738
      %p747 = scmp.eq.s32.totalorder %s109, 0
      %p748 = por %p746, %p747
      %p749 = scmp.ne.s32.totalorder %s737, %s738
      %p750 = scmp.eq.s32.totalorder %s110, 1
      %p751 = por %p749, %p750
      %p753 = scmp.ne.s32.totalorder %s738, %s752
      %p754 = scmp.eq.s32.totalorder %s110, 0
      %p755 = por %p753, %p754
      %s757 = sadd.s32 %s756, 1
      %p760 = scmp.eq.s32.totalorder %s104, 1
      %p761 = scmp.ne.s32.totalorder %s756, %s758
      %p762 = scmp.eq.s32.totalorder %s104, 0
      %p763 = por %p761, %p762
      %p764 = scmp.ne.s32.totalorder %s756, %s758
      %p765 = scmp.eq.s32.totalorder %s109, 1
      %p766 = por %p764, %p765
      %p767 = scmp.ne.s32.totalorder %s758, %s759
      %p768 = scmp.eq.s32.totalorder %s109, 0
      %p769 = por %p767, %p768
      %p770 = scmp.ne.s32.totalorder %s758, %s759
      %p771 = scmp.eq.s32.totalorder %s110, 1
      %p772 = por %p770, %p771
      %p774 = scmp.ne.s32.totalorder %s759, %s773
      %p775 = scmp.eq.s32.totalorder %s110, 0
      %p776 = por %p774, %p775
      %s778 = sadd.s32 %s777, 1
      %p781 = scmp.eq.s32.totalorder %s104, 1
      %p782 = scmp.ne.s32.totalorder %s777, %s779
      %p783 = scmp.eq.s32.totalorder %s104, 0
      %p784 = por %p782, %p783
      %p785 = scmp.ne.s32.totalorder %s777, %s779
      %p786 = scmp.eq.s32.totalorder %s109, 1
      %p787 = por %p785, %p786
      %p788 = scmp.ne.s32.totalorder %s779, %s780
      %p789 = scmp.eq.s32.totalorder %s109, 0
      %p790 = por %p788, %p789
      %p791 = scmp.ne.s32.totalorder %s779, %s780
      %p792 = scmp.eq.s32.totalorder %s110, 1
      %p793 = por %p791, %p792
      %p795 = scmp.ne.s32.totalorder %s780, %s794
      %p796 = scmp.eq.s32.totalorder %s110, 0
      %p797 = por %p795, %p796
      %s799 = sadd.s32 %s798, 1
      %p802 = scmp.eq.s32.totalorder %s104, 1
      %p803 = scmp.ne.s32.totalorder %s798, %s800
      %p804 = scmp.eq.s32.totalorder %s104, 0
      %p805 = por %p803, %p804
      %p806 = scmp.ne.s32.totalorder %s798, %s800
      %p807 = scmp.eq.s32.totalorder %s109, 1
      %p808 = por %p806, %p807
      %p809 = scmp.ne.s32.totalorder %s800, %s801
      %p810 = scmp.eq.s32.totalorder %s109, 0
      %p811 = por %p809, %p810
      %p812 = scmp.ne.s32.totalorder %s800, %s801
      %p813 = scmp.eq.s32.totalorder %s110, 1
      %p814 = por %p812, %p813
      %p816 = scmp.ne.s32.totalorder %s801, %s815
      %p817 = scmp.eq.s32.totalorder %s110, 0
      %p818 = por %p816, %p817
      %s820 = sadd.s32 %s819, 1
      %p823 = scmp.eq.s32.totalorder %s104, 1
      %p824 = scmp.ne.s32.totalorder %s819, %s821
      %p825 = scmp.eq.s32.totalorder %s104, 0
      %p826 = por %p824, %p825
      %p827 = scmp.ne.s32.totalorder %s819, %s821
      %p828 = scmp.eq.s32.totalorder %s109, 1
      %p829 = por %p827, %p828
      %p830 = scmp.ne.s32.totalorder %s821, %s822
      %p831 = scmp.eq.s32.totalorder %s109, 0
      %p832 = por %p830, %p831
      %p833 = scmp.ne.s32.totalorder %s821, %s822
      %p834 = scmp.eq.s32.totalorder %s110, 1
      %p835 = por %p833, %p834
      %p837 = scmp.ne.s32.totalorder %s822, %s836
      %p838 = scmp.eq.s32.totalorder %s110, 0
      %p839 = por %p837, %p838
      %s840 = ssub.s32 %s111, %s123
      %p841 = scmp.eq.s32.totalorder %s840, 0
      %s843 = sadd.s32 %s842, 1
      %s844 = scalar_select %p841, %s842, %s843
      %p847 = pneg %p841
      %p848 = scmp.eq.s32.totalorder %s104, 1
      %p849 = por %p847, %p848
      %p850 = scmp.ne.s32.totalorder %s842, %s845
      %p851 = scmp.eq.s32.totalorder %s104, 0
      %p852 = por %p850, %p851
      %p853 = scmp.ne.s32.totalorder %s842, %s845
      %p854 = scmp.eq.s32.totalorder %s109, 1
      %p855 = por %p853, %p854
      %p856 = scmp.ne.s32.totalorder %s845, %s846
      %p857 = scmp.eq.s32.totalorder %s109, 0
      %p858 = por %p856, %p857
      %p859 = scmp.ne.s32.totalorder %s845, %s846
      %p860 = scmp.eq.s32.totalorder %s110, 1
      %p861 = por %p859, %p860
      %p863 = scmp.ne.s32.totalorder %s846, %s862
      %p864 = scmp.eq.s32.totalorder %s110, 0
      %p865 = por %p863, %p864
      %s866 = ssub.s32 %s111, %s123
      %p867 = scmp.eq.s32.totalorder %s866, 0
      %s869 = sadd.s32 %s868, 1
      %s870 = scalar_select %p867, %s868, %s869
      %p873 = pneg %p867
      %p874 = scmp.eq.s32.totalorder %s104, 1
      %p875 = por %p873, %p874
      %p876 = scmp.ne.s32.totalorder %s868, %s871
      %p877 = scmp.eq.s32.totalorder %s104, 0
      %p878 = por %p876, %p877
      %p879 = scmp.ne.s32.totalorder %s868, %s871
      %p880 = scmp.eq.s32.totalorder %s109, 1
      %p881 = por %p879, %p880
      %p882 = scmp.ne.s32.totalorder %s871, %s872
      %p883 = scmp.eq.s32.totalorder %s109, 0
      %p884 = por %p882, %p883
      %p885 = scmp.ne.s32.totalorder %s871, %s872
      %p886 = scmp.eq.s32.totalorder %s110, 1
      %p887 = por %p885, %p886
      %p889 = scmp.ne.s32.totalorder %s872, %s888
      %p890 = scmp.eq.s32.totalorder %s110, 0
      %p891 = por %p889, %p890
      %p892 = scmp.le.s32.totalorder 1, %s104
      %p893 = scmp.lt.s32.totalorder %s104, 3
      %p894 = pnand %p892, %p893
      %p895 = pneg %p894
      // Predicated region
      $region9: #{forward.3} parent=5 // pred_check
        _
      $region10: #{forward.3} parent=5 // pred_check_branch
        %897 = sbr.rel (%p894) target = $region12
      $region11: #{forward.3} parent=5 // pred_region
        %s898 = ssub.s32 %s104, 1
        // Predicated region
        $region13: #{forward.3} parent=11 // pred_check
          %p899 = pneg %p142
        $region14: #{forward.3} parent=11 // pred_check_branch
          %901 = sbr.rel (%p899) target = $region16
        $region15: #{forward.3} parent=11 // pred_region
          %s902 = smul.u32 2, %s113
          %s904 = ssub.s32 256, 256
          %905 = vsyncadd [#allocation5], %s904
          %s906 = smul.addr %s902, 128
          %s907 = scalar_lea.hbm %s1, %s906
          %s908 = sshll.u32 [#allocation4], 4
          %s909 = int_to_ptr.vmem [resolvable:$true] %s908
          %914 = dma.hbm_to_vmem [thread:$0]  %s907, 256, %s909, [#allocation5], 128, 128, 8
        $region16: #{forward.3} parent=11 // pred_fallthru
          _
        // Predicated region
        $region17: #{forward.3} parent=11 // pred_check
          %p915 = pneg %p475
        $region18: #{forward.3} parent=11 // pred_check_branch
          %917 = sbr.rel (%p915) target = $region20
        $region19: #{forward.3} parent=11 // pred_region
          %s919 = ssub.s32 16, 16
          %920 = vsyncadd [#allocation26], %s919
          %s922 = sshll.u32 [#allocation25], 4
          %s923 = int_to_ptr.vmem [resolvable:$true] %s922
          %925 = dma.hbm_to_vmem [thread:$0]  %s27, 16, %s923, [#allocation26]
        $region20: #{forward.3} parent=11 // pred_fallthru
          _
        // Predicated region
        $region21: #{forward.3} parent=11 // pred_check
          %p926 = pneg %p496
        $region22: #{forward.3} parent=11 // pred_check_branch
          %928 = sbr.rel (%p926) target = $region24
        $region23: #{forward.3} parent=11 // pred_region
          %s930 = ssub.s32 16, 16
          %931 = vsyncadd [#allocation26], %s930
          %s933 = sshll.u32 [#allocation27], 4
          %s934 = int_to_ptr.vmem [resolvable:$true] %s933
          %936 = dma.hbm_to_vmem [thread:$0]  %s29, 16, %s934, [#allocation26]
        $region24: #{forward.3} parent=11 // pred_fallthru
          _
        // Predicated region
        $region25: #{forward.3} parent=11 // pred_check
          %p937 = pneg %p517
        $region26: #{forward.3} parent=11 // pred_check_branch
          %939 = sbr.rel (%p937) target = $region28
        $region27: #{forward.3} parent=11 // pred_region
          %s941 = ssub.s32 256, 256
          %942 = vsyncadd [#allocation29], %s941
          %s943 = sshll.u32 [#allocation28], 4
          %s944 = int_to_ptr.vmem [resolvable:$true] %s943
          %949 = dma.hbm_to_vmem [thread:$0]  %s31, 256, %s944, [#allocation29], 64, 64, 4
        $region28: #{forward.3} parent=11 // pred_fallthru
          _
        // Predicated region
        $region29: #{forward.3} parent=11 // pred_check
          %p950 = pneg %p538
        $region30: #{forward.3} parent=11 // pred_check_branch
          %952 = sbr.rel (%p950) target = $region32
        $region31: #{forward.3} parent=11 // pred_region
          %s954 = ssub.s32 16, 16
          %955 = vsyncadd [#allocation29], %s954
          %s957 = sshll.u32 [#allocation30], 4
          %s958 = int_to_ptr.vmem [resolvable:$true] %s957
          %960 = dma.hbm_to_vmem [thread:$0]  %s33, 16, %s958, [#allocation29]
        $region32: #{forward.3} parent=11 // pred_fallthru
          _
        // Predicated region
        $region33: #{forward.3} parent=11 // pred_check
          %p961 = pneg %p559
        $region34: #{forward.3} parent=11 // pred_check_branch
          %963 = sbr.rel (%p961) target = $region36
        $region35: #{forward.3} parent=11 // pred_region
          %s965 = ssub.s32 2048, 2048
          %966 = vsyncadd [#allocation32], %s965
          %s967 = sshll.u32 [#allocation31], 4
          %s968 = int_to_ptr.vmem [resolvable:$true] %s967
          %973 = dma.hbm_to_vmem [thread:$0]  %s35, 2048, %s968, [#allocation32], 128, 128, 8
        $region36: #{forward.3} parent=11 // pred_fallthru
          _
        // Predicated region
        $region37: #{forward.3} parent=11 // pred_check
          %p974 = pneg %p580
        $region38: #{forward.3} parent=11 // pred_check_branch
          %976 = sbr.rel (%p974) target = $region40
        $region39: #{forward.3} parent=11 // pred_region
          %s978 = ssub.s32 32, 32
          %979 = vsyncadd [#allocation32], %s978
          %s981 = sshll.u32 [#allocation33], 4
          %s982 = int_to_ptr.vmem [resolvable:$true] %s981
          %984 = dma.hbm_to_vmem [thread:$0]  %s37, 32, %s982, [#allocation32]
        $region40: #{forward.3} parent=11 // pred_fallthru
          _
        // Predicated region
        $region41: #{forward.3} parent=11 // pred_check
          %p985 = pneg %p601
        $region42: #{forward.3} parent=11 // pred_check_branch
          %987 = sbr.rel (%p985) target = $region44
        $region43: #{forward.3} parent=11 // pred_region
          %s989 = ssub.s32 2048, 2048
          %990 = vsyncadd [#allocation35], %s989
          %s991 = sshll.u32 [#allocation34], 4
          %s992 = int_to_ptr.vmem [resolvable:$true] %s991
          %997 = dma.hbm_to_vmem [thread:$0]  %s39, 2048, %s992, [#allocation35], 64, 64, 4
        $region44: #{forward.3} parent=11 // pred_fallthru
          _
        // Predicated region
        $region45: #{forward.3} parent=11 // pred_check
          %p998 = pneg %p622
        $region46: #{forward.3} parent=11 // pred_check_branch
          %1000 = sbr.rel (%p998) target = $region48
        $region47: #{forward.3} parent=11 // pred_region
          %s1002 = ssub.s32 16, 16
          %1003 = vsyncadd [#allocation35], %s1002
          %s1005 = sshll.u32 [#allocation36], 4
          %s1006 = int_to_ptr.vmem [resolvable:$true] %s1005
          %1008 = dma.hbm_to_vmem [thread:$0]  %s41, 16, %s1006, [#allocation35]
        $region48: #{forward.3} parent=11 // pred_fallthru
          _
        // Predicated region
        $region49: #{forward.3} parent=11 // pred_check
          %p1009 = pneg %p643
        $region50: #{forward.3} parent=11 // pred_check_branch
          %1011 = sbr.rel (%p1009) target = $region52
        $region51: #{forward.3} parent=11 // pred_region
          %s1013 = ssub.s32 1024, 1024
          %1014 = vsyncadd [#allocation38], %s1013
          %s1015 = sshll.u32 [#allocation37], 4
          %s1016 = int_to_ptr.vmem [resolvable:$true] %s1015
          %1021 = dma.hbm_to_vmem [thread:$0]  %s43, 1024, %s1016, [#allocation38], 64, 64, 4
        $region52: #{forward.3} parent=11 // pred_fallthru
          _
        // Predicated region
        $region53: #{forward.3} parent=11 // pred_check
          %p1022 = pneg %p664
        $region54: #{forward.3} parent=11 // pred_check_branch
          %1024 = sbr.rel (%p1022) target = $region56
        $region55: #{forward.3} parent=11 // pred_region
          %s1026 = ssub.s32 16, 16
          %1027 = vsyncadd [#allocation38], %s1026
          %s1029 = sshll.u32 [#allocation39], 4
          %s1030 = int_to_ptr.vmem [resolvable:$true] %s1029
          %1032 = dma.hbm_to_vmem [thread:$0]  %s45, 16, %s1030, [#allocation38]
        $region56: #{forward.3} parent=11 // pred_fallthru
          _
        // Predicated region
        $region57: #{forward.3} parent=11 // pred_check
          %p1033 = pneg %p685
        $region58: #{forward.3} parent=11 // pred_check_branch
          %1035 = sbr.rel (%p1033) target = $region60
        $region59: #{forward.3} parent=11 // pred_region
          %s1037 = ssub.s32 256, 256
          %1038 = vsyncadd [#allocation41], %s1037
          %s1039 = sshll.u32 [#allocation40], 4
          %s1040 = int_to_ptr.vmem [resolvable:$true] %s1039
          %1045 = dma.hbm_to_vmem [thread:$0]  %s47, 256, %s1040, [#allocation41], 64, 64, 4
        $region60: #{forward.3} parent=11 // pred_fallthru
          _
        // Predicated region
        $region61: #{forward.3} parent=11 // pred_check
          %p1046 = pneg %p706
        $region62: #{forward.3} parent=11 // pred_check_branch
          %1048 = sbr.rel (%p1046) target = $region64
        $region63: #{forward.3} parent=11 // pred_region
          %s1050 = ssub.s32 16, 16
          %1051 = vsyncadd [#allocation41], %s1050
          %s1053 = sshll.u32 [#allocation42], 4
          %s1054 = int_to_ptr.vmem [resolvable:$true] %s1053
          %1056 = dma.hbm_to_vmem [thread:$0]  %s49, 16, %s1054, [#allocation41]
        $region64: #{forward.3} parent=11 // pred_fallthru
          _
        // Predicated region
        $region65: #{forward.3} parent=11 // pred_check
          %p1057 = pneg %p727
        $region66: #{forward.3} parent=11 // pred_check_branch
          %1059 = sbr.rel (%p1057) target = $region68
        $region67: #{forward.3} parent=11 // pred_region
          %s1061 = ssub.s32 2048, 2048
          %1062 = vsyncadd [#allocation44], %s1061
          %s1063 = sshll.u32 [#allocation43], 4
          %s1064 = int_to_ptr.vmem [resolvable:$true] %s1063
          %1069 = dma.hbm_to_vmem [thread:$0]  %s51, 2048, %s1064, [#allocation44], 128, 128, 8
        $region68: #{forward.3} parent=11 // pred_fallthru
          _
        // Predicated region
        $region69: #{forward.3} parent=11 // pred_check
          %p1070 = pneg %p748
        $region70: #{forward.3} parent=11 // pred_check_branch
          %1072 = sbr.rel (%p1070) target = $region72
        $region71: #{forward.3} parent=11 // pred_region
          %s1074 = ssub.s32 32, 32
          %1075 = vsyncadd [#allocation44], %s1074
          %s1077 = sshll.u32 [#allocation45], 4
          %s1078 = int_to_ptr.vmem [resolvable:$true] %s1077
          %1080 = dma.hbm_to_vmem [thread:$0]  %s53, 32, %s1078, [#allocation44]
        $region72: #{forward.3} parent=11 // pred_fallthru
          _
        // Predicated region
        $region73: #{forward.3} parent=11 // pred_check
          %p1081 = pneg %p769
        $region74: #{forward.3} parent=11 // pred_check_branch
          %1083 = sbr.rel (%p1081) target = $region76
        $region75: #{forward.3} parent=11 // pred_region
          %s1085 = ssub.s32 2048, 2048
          %1086 = vsyncadd [#allocation47], %s1085
          %s1087 = sshll.u32 [#allocation46], 4
          %s1088 = int_to_ptr.vmem [resolvable:$true] %s1087
          %1093 = dma.hbm_to_vmem [thread:$0]  %s55, 2048, %s1088, [#allocation47], 64, 64, 4
        $region76: #{forward.3} parent=11 // pred_fallthru
          _
        // Predicated region
        $region77: #{forward.3} parent=11 // pred_check
          %p1094 = pneg %p790
        $region78: #{forward.3} parent=11 // pred_check_branch
          %1096 = sbr.rel (%p1094) target = $region80
        $region79: #{forward.3} parent=11 // pred_region
          %s1098 = ssub.s32 16, 16
          %1099 = vsyncadd [#allocation47], %s1098
          %s1101 = sshll.u32 [#allocation48], 4
          %s1102 = int_to_ptr.vmem [resolvable:$true] %s1101
          %1104 = dma.hbm_to_vmem [thread:$0]  %s57, 16, %s1102, [#allocation47]
        $region80: #{forward.3} parent=11 // pred_fallthru
          _
        // Predicated region
        $region81: #{forward.3} parent=11 // pred_check
          %p1105 = pneg %p811
        $region82: #{forward.3} parent=11 // pred_check_branch
          %1107 = sbr.rel (%p1105) target = $region84
        $region83: #{forward.3} parent=11 // pred_region
          %s1109 = ssub.s32 1024, 1024
          %1110 = vsyncadd [#allocation50], %s1109
          %s1111 = sshll.u32 [#allocation49], 4
          %s1112 = int_to_ptr.vmem [resolvable:$true] %s1111
          %1117 = dma.hbm_to_vmem [thread:$0]  %s59, 1024, %s1112, [#allocation50], 64, 64, 4
        $region84: #{forward.3} parent=11 // pred_fallthru
          _
        // Predicated region
        $region85: #{forward.3} parent=11 // pred_check
          %p1118 = pneg %p832
        $region86: #{forward.3} parent=11 // pred_check_branch
          %1120 = sbr.rel (%p1118) target = $region88
        $region87: #{forward.3} parent=11 // pred_region
          _
        $region88: #{forward.3} parent=11 // pred_fallthru
          _
      $region12: #{forward.3} parent=5 // pred_fallthru
        _
      %p1121 = scmp.lt.s32.totalorder %s104, 2
      // Predicated region
      $region89: #{forward.3} parent=5 // pred_check
        %p1122 = pneg %p1121
      $region90: #{forward.3} parent=5 // pred_check_branch
        %1124 = sbr.rel (%p1122) target = $region92
      $region91: #{forward.3} parent=5 // pred_region
        // Predicated region
        $region93: #{forward.3} parent=91 // pred_check
          %p1125 = pneg %p162
        $region94: #{forward.3} parent=91 // pred_check_branch
          %1127 = sbr.rel (%p1125) target = $region96
        $region95: #{forward.3} parent=91 // pred_region
          %s1128 = sand.u32 %s104, 1
          %s1129 = scalar_lea.sflag [#allocation8], %s1128
          %s1130 = sand.u32 %s152, 1
          %s1131 = scalar_lea.vmem [#allocation7], %s1130
          %s1133 = ssub.s32 16, 16
          %1134 = vsyncadd %s1129, %s1133
          %s1135 = smul.addr %s112, 16
          %s1136 = scalar_lea.hbm %s3, %s1135
          %s1138 = sshll.u32 %s1131, 4
          %s1139 = int_to_ptr.vmem [resolvable:$true] %s1138
          %1141 = dma.hbm_to_vmem [thread:$0]  %s1136, 16, %s1139, %s1129
        $region96: #{forward.3} parent=91 // pred_fallthru
          _
        // Predicated region
        $region97: #{forward.3} parent=91 // pred_check
          %p1142 = pneg %p188
        $region98: #{forward.3} parent=91 // pred_check_branch
          %1144 = sbr.rel (%p1142) target = $region100
        $region99: #{forward.3} parent=91 // pred_region
          %s1145 = sand.u32 %s104, 1
          %s1146 = scalar_lea.sflag [#allocation8], %s1145
          %s1147 = sand.u32 %s178, 1
          %s1148 = scalar_lea.vmem [#allocation9], %s1147
          %s1150 = ssub.s32 16, 16
          %1151 = vsyncadd %s1146, %s1150
          %s1152 = smul.addr %s112, 16
          %s1153 = scalar_lea.hbm %s5, %s1152
          %s1155 = sshll.u32 %s1148, 4
          %s1156 = int_to_ptr.vmem [resolvable:$true] %s1155
          %1158 = dma.hbm_to_vmem [thread:$0]  %s1153, 16, %s1156, %s1146
        $region100: #{forward.3} parent=91 // pred_fallthru
          _
        // Predicated region
        $region101: #{forward.3} parent=91 // pred_check
          %p1159 = pneg %p214
        $region102: #{forward.3} parent=91 // pred_check_branch
          %1161 = sbr.rel (%p1159) target = $region104
        $region103: #{forward.3} parent=91 // pred_region
          %s1162 = sand.u32 %s104, 1
          %s1163 = scalar_lea.sflag [#allocation11], %s1162
          %s1164 = sand.u32 %s204, 1
          %s1165 = smul.addr %s1164, 16
          %s1166 = scalar_lea.vmem [#allocation10], %s1165
          %s1168 = ssub.s32 256, 256
          %1169 = vsyncadd %s1163, %s1168
          %s1170 = smul.addr %s112, 4
          %s1171 = smul.addr %s1170, 64
          %s1172 = scalar_lea.hbm %s7, %s1171
          %s1173 = sshll.u32 %s1166, 4
          %s1174 = int_to_ptr.vmem [resolvable:$true] %s1173
          %1179 = dma.hbm_to_vmem [thread:$0]  %s1172, 256, %s1174, %s1163, 64, 64, 4
        $region104: #{forward.3} parent=91 // pred_fallthru
          _
        // Predicated region
        $region105: #{forward.3} parent=91 // pred_check
          %p1180 = pneg %p240
        $region106: #{forward.3} parent=91 // pred_check_branch
          %1182 = sbr.rel (%p1180) target = $region108
        $region107: #{forward.3} parent=91 // pred_region
          %s1183 = sand.u32 %s104, 1
          %s1184 = scalar_lea.sflag [#allocation11], %s1183
          %s1185 = sand.u32 %s230, 1
          %s1186 = scalar_lea.vmem [#allocation12], %s1185
          %s1188 = ssub.s32 16, 16
          %1189 = vsyncadd %s1184, %s1188
          %s1190 = smul.addr %s112, 16
          %s1191 = scalar_lea.hbm %s9, %s1190
          %s1193 = sshll.u32 %s1186, 4
          %s1194 = int_to_ptr.vmem [resolvable:$true] %s1193
          %1196 = dma.hbm_to_vmem [thread:$0]  %s1191, 16, %s1194, %s1184
        $region108: #{forward.3} parent=91 // pred_fallthru
          _
        // Predicated region
        $region109: #{forward.3} parent=91 // pred_check
          %p1197 = pneg %p266
        $region110: #{forward.3} parent=91 // pred_check_branch
          %1199 = sbr.rel (%p1197) target = $region112
        $region111: #{forward.3} parent=91 // pred_region
          %s1200 = sand.u32 %s104, 1
          %s1201 = scalar_lea.sflag [#allocation14], %s1200
          %s1202 = sand.u32 %s256, 1
          %s1203 = smul.addr %s1202, 16
          %s1204 = scalar_lea.vmem [#allocation13], %s1203
          %s1206 = ssub.s32 256, 256
          %1207 = vsyncadd %s1201, %s1206
          %s1208 = smul.addr %s112, 4
          %s1209 = smul.addr %s1208, 64
          %s1210 = scalar_lea.hbm %s11, %s1209
          %s1211 = sshll.u32 %s1204, 4
          %s1212 = int_to_ptr.vmem [resolvable:$true] %s1211
          %1217 = dma.hbm_to_vmem [thread:$0]  %s1210, 256, %s1212, %s1201, 64, 64, 4
        $region112: #{forward.3} parent=91 // pred_fallthru
          _
        // Predicated region
        $region113: #{forward.3} parent=91 // pred_check
          %p1218 = pneg %p292
        $region114: #{forward.3} parent=91 // pred_check_branch
          %1220 = sbr.rel (%p1218) target = $region116
        $region115: #{forward.3} parent=91 // pred_region
          %s1221 = sand.u32 %s104, 1
          %s1222 = scalar_lea.sflag [#allocation14], %s1221
          %s1223 = sand.u32 %s282, 1
          %s1224 = scalar_lea.vmem [#allocation15], %s1223
          %s1226 = ssub.s32 16, 16
          %1227 = vsyncadd %s1222, %s1226
          %s1228 = smul.addr %s112, 16
          %s1229 = scalar_lea.hbm %s13, %s1228
          %s1231 = sshll.u32 %s1224, 4
          %s1232 = int_to_ptr.vmem [resolvable:$true] %s1231
          %1234 = dma.hbm_to_vmem [thread:$0]  %s1229, 16, %s1232, %s1222
        $region116: #{forward.3} parent=91 // pred_fallthru
          _
        // Predicated region
        $region117: #{forward.3} parent=91 // pred_check
          %p1235 = pneg %p318
        $region118: #{forward.3} parent=91 // pred_check_branch
          %1237 = sbr.rel (%p1235) target = $region120
        $region119: #{forward.3} parent=91 // pred_region
          %s1238 = sand.u32 %s104, 1
          %s1239 = scalar_lea.sflag [#allocation17], %s1238
          %s1240 = sand.u32 %s308, 1
          %s1241 = scalar_lea.vmem [#allocation16], %s1240
          %s1243 = ssub.s32 16, 16
          %1244 = vsyncadd %s1239, %s1243
          %s1245 = smul.addr %s112, 16
          %s1246 = scalar_lea.hbm %s15, %s1245
          %s1248 = sshll.u32 %s1241, 4
          %s1249 = int_to_ptr.vmem [resolvable:$true] %s1248
          %1251 = dma.hbm_to_vmem [thread:$0]  %s1246, 16, %s1249, %s1239
        $region120: #{forward.3} parent=91 // pred_fallthru
          _
        // Predicated region
        $region121: #{forward.3} parent=91 // pred_check
          %p1252 = pneg %p344
        $region122: #{forward.3} parent=91 // pred_check_branch
          %1254 = sbr.rel (%p1252) target = $region124
        $region123: #{forward.3} parent=91 // pred_region
          %s1255 = sand.u32 %s104, 1
          %s1256 = scalar_lea.sflag [#allocation17], %s1255
          %s1257 = sand.u32 %s334, 1
          %s1258 = scalar_lea.vmem [#allocation18], %s1257
          %s1260 = ssub.s32 16, 16
          %1261 = vsyncadd %s1256, %s1260
          %s1262 = smul.addr %s112, 16
          %s1263 = scalar_lea.hbm %s17, %s1262
          %s1265 = sshll.u32 %s1258, 4
          %s1266 = int_to_ptr.vmem [resolvable:$true] %s1265
          %1268 = dma.hbm_to_vmem [thread:$0]  %s1263, 16, %s1266, %s1256
        $region124: #{forward.3} parent=91 // pred_fallthru
          _
        // Predicated region
        $region125: #{forward.3} parent=91 // pred_check
          %p1269 = pneg %p370
        $region126: #{forward.3} parent=91 // pred_check_branch
          %1271 = sbr.rel (%p1269) target = $region128
        $region127: #{forward.3} parent=91 // pred_region
          %s1272 = sand.u32 %s104, 1
          %s1273 = scalar_lea.sflag [#allocation20], %s1272
          %s1274 = sand.u32 %s360, 1
          %s1275 = smul.addr %s1274, 16
          %s1276 = scalar_lea.vmem [#allocation19], %s1275
          %s1278 = ssub.s32 256, 256
          %1279 = vsyncadd %s1273, %s1278
          %s1280 = smul.addr %s112, 4
          %s1281 = smul.addr %s1280, 64
          %s1282 = scalar_lea.hbm %s19, %s1281
          %s1283 = sshll.u32 %s1276, 4
          %s1284 = int_to_ptr.vmem [resolvable:$true] %s1283
          %1289 = dma.hbm_to_vmem [thread:$0]  %s1282, 256, %s1284, %s1273, 64, 64, 4
        $region128: #{forward.3} parent=91 // pred_fallthru
          _
        // Predicated region
        $region129: #{forward.3} parent=91 // pred_check
          %p1290 = pneg %p396
        $region130: #{forward.3} parent=91 // pred_check_branch
          %1292 = sbr.rel (%p1290) target = $region132
        $region131: #{forward.3} parent=91 // pred_region
          %s1293 = sand.u32 %s104, 1
          %s1294 = scalar_lea.sflag [#allocation20], %s1293
          %s1295 = sand.u32 %s386, 1
          %s1296 = scalar_lea.vmem [#allocation21], %s1295
          %s1298 = ssub.s32 16, 16
          %1299 = vsyncadd %s1294, %s1298
          %s1300 = smul.addr %s112, 16
          %s1301 = scalar_lea.hbm %s21, %s1300
          %s1303 = sshll.u32 %s1296, 4
          %s1304 = int_to_ptr.vmem [resolvable:$true] %s1303
          %1306 = dma.hbm_to_vmem [thread:$0]  %s1301, 16, %s1304, %s1294
        $region132: #{forward.3} parent=91 // pred_fallthru
          _
        // Predicated region
        $region133: #{forward.3} parent=91 // pred_check
          %p1307 = pneg %p422
        $region134: #{forward.3} parent=91 // pred_check_branch
          %1309 = sbr.rel (%p1307) target = $region136
        $region135: #{forward.3} parent=91 // pred_region
          %s1310 = sand.u32 %s104, 1
          %s1311 = scalar_lea.sflag [#allocation23], %s1310
          %s1312 = sand.u32 %s412, 1
          %s1313 = smul.addr %s1312, 64
          %s1314 = scalar_lea.vmem [#allocation22], %s1313
          %s1316 = ssub.s32 1024, 1024
          %1317 = vsyncadd %s1311, %s1316
          %s1318 = smul.addr %s112, 16
          %s1319 = smul.addr %s1318, 64
          %s1320 = scalar_lea.hbm %s23, %s1319
          %s1321 = sshll.u32 %s1314, 4
          %s1322 = int_to_ptr.vmem [resolvable:$true] %s1321
          %1327 = dma.hbm_to_vmem [thread:$0]  %s1320, 1024, %s1322, %s1311, 64, 64, 4
        $region136: #{forward.3} parent=91 // pred_fallthru
          _
        // Predicated region
        $region137: #{forward.3} parent=91 // pred_check
          %p1328 = pneg %p448
        $region138: #{forward.3} parent=91 // pred_check_branch
          %1330 = sbr.rel (%p1328) target = $region140
        $region139: #{forward.3} parent=91 // pred_region
          %s1331 = sand.u32 %s104, 1
          %s1332 = scalar_lea.sflag [#allocation23], %s1331
          %s1333 = sand.u32 %s438, 1
          %s1334 = scalar_lea.vmem [#allocation24], %s1333
          %s1336 = ssub.s32 16, 16
          %1337 = vsyncadd %s1332, %s1336
          %s1338 = smul.addr %s112, 16
          %s1339 = scalar_lea.hbm %s25, %s1338
          %s1341 = sshll.u32 %s1334, 4
          %s1342 = int_to_ptr.vmem [resolvable:$true] %s1341
          %1344 = dma.hbm_to_vmem [thread:$0]  %s1339, 16, %s1342, %s1332
        $region140: #{forward.3} parent=91 // pred_fallthru
          _
      $region92: #{forward.3} parent=5 // pred_fallthru
        _
      %p1345 = scmp.le.s32.totalorder 1, %s104
      %p1346 = scmp.lt.s32.totalorder %s104, 3
      %p1347 = pnand %p1345, %p1346
      %p1348 = pneg %p1347
      // Predicated region
      $region141: #{forward.3} parent=5 // pred_check
        _
      $region142: #{forward.3} parent=5 // pred_check_branch
        %1350 = sbr.rel (%p1347) target = $region144
      $region143: #{forward.3} parent=5 // pred_region
        %s1351 = ssub.s32 %s104, 1
        // Predicated region
        $region145: #{forward.3} parent=143 // pred_check
          %p1352 = pneg %p142
        $region146: #{forward.3} parent=143 // pred_check_branch
          %1354 = sbr.rel (%p1352) target = $region148
        $region147: #{forward.3} parent=143 // pred_region
          %1355 = dma.done [#allocation5], 256
        $region148: #{forward.3} parent=143 // pred_fallthru
          _
        %s1356 = sand.u32 %s109, 1
        %s1357 = scalar_lea.sflag [#allocation8], %s1356
        %s1358 = sand.u32 %s155, 1
        %s1359 = scalar_lea.vmem [#allocation7], %s1358
        // Predicated region
        $region149: #{forward.3} parent=143 // pred_check
          %p1360 = pneg %p168
        $region150: #{forward.3} parent=143 // pred_check_branch
          %1362 = sbr.rel (%p1360) target = $region152
        $region151: #{forward.3} parent=143 // pred_region
          %1363 = dma.done %s1357, 16
        $region152: #{forward.3} parent=143 // pred_fallthru
          _
        %s1364 = sand.u32 %s109, 1
        %s1365 = scalar_lea.sflag [#allocation8], %s1364
        %s1366 = sand.u32 %s181, 1
        %s1367 = scalar_lea.vmem [#allocation9], %s1366
        // Predicated region
        $region153: #{forward.3} parent=143 // pred_check
          %p1368 = pneg %p194
        $region154: #{forward.3} parent=143 // pred_check_branch
          %1370 = sbr.rel (%p1368) target = $region156
        $region155: #{forward.3} parent=143 // pred_region
          %1371 = dma.done %s1365, 16
        $region156: #{forward.3} parent=143 // pred_fallthru
          _
        %s1372 = sand.u32 %s109, 1
        %s1373 = scalar_lea.sflag [#allocation11], %s1372
        %s1374 = sand.u32 %s207, 1
        %s1375 = smul.addr %s1374, 16
        %s1376 = scalar_lea.vmem [#allocation10], %s1375
        // Predicated region
        $region157: #{forward.3} parent=143 // pred_check
          %p1377 = pneg %p220
        $region158: #{forward.3} parent=143 // pred_check_branch
          %1379 = sbr.rel (%p1377) target = $region160
        $region159: #{forward.3} parent=143 // pred_region
          %1380 = dma.done %s1373, 256
        $region160: #{forward.3} parent=143 // pred_fallthru
          _
        %s1381 = sand.u32 %s109, 1
        %s1382 = scalar_lea.sflag [#allocation11], %s1381
        %s1383 = sand.u32 %s233, 1
        %s1384 = scalar_lea.vmem [#allocation12], %s1383
        // Predicated region
        $region161: #{forward.3} parent=143 // pred_check
          %p1385 = pneg %p246
        $region162: #{forward.3} parent=143 // pred_check_branch
          %1387 = sbr.rel (%p1385) target = $region164
        $region163: #{forward.3} parent=143 // pred_region
          %1388 = dma.done %s1382, 16
        $region164: #{forward.3} parent=143 // pred_fallthru
          _
        %s1389 = sand.u32 %s109, 1
        %s1390 = scalar_lea.sflag [#allocation14], %s1389
        %s1391 = sand.u32 %s259, 1
        %s1392 = smul.addr %s1391, 16
        %s1393 = scalar_lea.vmem [#allocation13], %s1392
        // Predicated region
        $region165: #{forward.3} parent=143 // pred_check
          %p1394 = pneg %p272
        $region166: #{forward.3} parent=143 // pred_check_branch
          %1396 = sbr.rel (%p1394) target = $region168
        $region167: #{forward.3} parent=143 // pred_region
          %1397 = dma.done %s1390, 256
        $region168: #{forward.3} parent=143 // pred_fallthru
          _
        %s1398 = sand.u32 %s109, 1
        %s1399 = scalar_lea.sflag [#allocation14], %s1398
        %s1400 = sand.u32 %s285, 1
        %s1401 = scalar_lea.vmem [#allocation15], %s1400
        // Predicated region
        $region169: #{forward.3} parent=143 // pred_check
          %p1402 = pneg %p298
        $region170: #{forward.3} parent=143 // pred_check_branch
          %1404 = sbr.rel (%p1402) target = $region172
        $region171: #{forward.3} parent=143 // pred_region
          %1405 = dma.done %s1399, 16
        $region172: #{forward.3} parent=143 // pred_fallthru
          _
        %s1406 = sand.u32 %s109, 1
        %s1407 = scalar_lea.sflag [#allocation17], %s1406
        %s1408 = sand.u32 %s311, 1
        %s1409 = scalar_lea.vmem [#allocation16], %s1408
        // Predicated region
        $region173: #{forward.3} parent=143 // pred_check
          %p1410 = pneg %p324
        $region174: #{forward.3} parent=143 // pred_check_branch
          %1412 = sbr.rel (%p1410) target = $region176
        $region175: #{forward.3} parent=143 // pred_region
          %1413 = dma.done %s1407, 16
        $region176: #{forward.3} parent=143 // pred_fallthru
          _
        %s1414 = sand.u32 %s109, 1
        %s1415 = scalar_lea.sflag [#allocation17], %s1414
        %s1416 = sand.u32 %s337, 1
        %s1417 = scalar_lea.vmem [#allocation18], %s1416
        // Predicated region
        $region177: #{forward.3} parent=143 // pred_check
          %p1418 = pneg %p350
        $region178: #{forward.3} parent=143 // pred_check_branch
          %1420 = sbr.rel (%p1418) target = $region180
        $region179: #{forward.3} parent=143 // pred_region
          %1421 = dma.done %s1415, 16
        $region180: #{forward.3} parent=143 // pred_fallthru
          _
        %s1422 = sand.u32 %s109, 1
        %s1423 = scalar_lea.sflag [#allocation20], %s1422
        %s1424 = sand.u32 %s363, 1
        %s1425 = smul.addr %s1424, 16
        %s1426 = scalar_lea.vmem [#allocation19], %s1425
        // Predicated region
        $region181: #{forward.3} parent=143 // pred_check
          %p1427 = pneg %p376
        $region182: #{forward.3} parent=143 // pred_check_branch
          %1429 = sbr.rel (%p1427) target = $region184
        $region183: #{forward.3} parent=143 // pred_region
          %1430 = dma.done %s1423, 256
        $region184: #{forward.3} parent=143 // pred_fallthru
          _
        %s1431 = sand.u32 %s109, 1
        %s1432 = scalar_lea.sflag [#allocation20], %s1431
        %s1433 = sand.u32 %s389, 1
        %s1434 = scalar_lea.vmem [#allocation21], %s1433
        // Predicated region
        $region185: #{forward.3} parent=143 // pred_check
          %p1435 = pneg %p402
        $region186: #{forward.3} parent=143 // pred_check_branch
          %1437 = sbr.rel (%p1435) target = $region188
        $region187: #{forward.3} parent=143 // pred_region
          %1438 = dma.done %s1432, 16
        $region188: #{forward.3} parent=143 // pred_fallthru
          _
        %s1439 = sand.u32 %s109, 1
        %s1440 = scalar_lea.sflag [#allocation23], %s1439
        %s1441 = sand.u32 %s415, 1
        %s1442 = smul.addr %s1441, 64
        %s1443 = scalar_lea.vmem [#allocation22], %s1442
        // Predicated region
        $region189: #{forward.3} parent=143 // pred_check
          %p1444 = pneg %p428
        $region190: #{forward.3} parent=143 // pred_check_branch
          %1446 = sbr.rel (%p1444) target = $region192
        $region191: #{forward.3} parent=143 // pred_region
          %1447 = dma.done %s1440, 1024
        $region192: #{forward.3} parent=143 // pred_fallthru
          _
        %s1448 = sand.u32 %s109, 1
        %s1449 = scalar_lea.sflag [#allocation23], %s1448
        %s1450 = sand.u32 %s441, 1
        %s1451 = scalar_lea.vmem [#allocation24], %s1450
        // Predicated region
        $region193: #{forward.3} parent=143 // pred_check
          %p1452 = pneg %p454
        $region194: #{forward.3} parent=143 // pred_check_branch
          %1454 = sbr.rel (%p1452) target = $region196
        $region195: #{forward.3} parent=143 // pred_region
          %1455 = dma.done %s1449, 16
        $region196: #{forward.3} parent=143 // pred_fallthru
          _
        // Predicated region
        $region197: #{forward.3} parent=143 // pred_check
          %p1456 = pneg %p475
        $region198: #{forward.3} parent=143 // pred_check_branch
          %1458 = sbr.rel (%p1456) target = $region200
        $region199: #{forward.3} parent=143 // pred_region
          %1459 = dma.done [#allocation26], 16
        $region200: #{forward.3} parent=143 // pred_fallthru
          _
        // Predicated region
        $region201: #{forward.3} parent=143 // pred_check
          %p1460 = pneg %p496
        $region202: #{forward.3} parent=143 // pred_check_branch
          %1462 = sbr.rel (%p1460) target = $region204
        $region203: #{forward.3} parent=143 // pred_region
          %1463 = dma.done [#allocation26], 16
        $region204: #{forward.3} parent=143 // pred_fallthru
          _
        // Predicated region
        $region205: #{forward.3} parent=143 // pred_check
          %p1464 = pneg %p517
        $region206: #{forward.3} parent=143 // pred_check_branch
          %1466 = sbr.rel (%p1464) target = $region208
        $region207: #{forward.3} parent=143 // pred_region
          %1467 = dma.done [#allocation29], 256
        $region208: #{forward.3} parent=143 // pred_fallthru
          _
        // Predicated region
        $region209: #{forward.3} parent=143 // pred_check
          %p1468 = pneg %p538
        $region210: #{forward.3} parent=143 // pred_check_branch
          %1470 = sbr.rel (%p1468) target = $region212
        $region211: #{forward.3} parent=143 // pred_region
          %1471 = dma.done [#allocation29], 16
        $region212: #{forward.3} parent=143 // pred_fallthru
          _
        // Predicated region
        $region213: #{forward.3} parent=143 // pred_check
          %p1472 = pneg %p559
        $region214: #{forward.3} parent=143 // pred_check_branch
          %1474 = sbr.rel (%p1472) target = $region216
        $region215: #{forward.3} parent=143 // pred_region
          %1475 = dma.done [#allocation32], 2048
        $region216: #{forward.3} parent=143 // pred_fallthru
          _
        // Predicated region
        $region217: #{forward.3} parent=143 // pred_check
          %p1476 = pneg %p580
        $region218: #{forward.3} parent=143 // pred_check_branch
          %1478 = sbr.rel (%p1476) target = $region220
        $region219: #{forward.3} parent=143 // pred_region
          %1479 = dma.done [#allocation32], 32
        $region220: #{forward.3} parent=143 // pred_fallthru
          _
        // Predicated region
        $region221: #{forward.3} parent=143 // pred_check
          %p1480 = pneg %p601
        $region222: #{forward.3} parent=143 // pred_check_branch
          %1482 = sbr.rel (%p1480) target = $region224
        $region223: #{forward.3} parent=143 // pred_region
          %1483 = dma.done [#allocation35], 2048
        $region224: #{forward.3} parent=143 // pred_fallthru
          _
        // Predicated region
        $region225: #{forward.3} parent=143 // pred_check
          %p1484 = pneg %p622
        $region226: #{forward.3} parent=143 // pred_check_branch
          %1486 = sbr.rel (%p1484) target = $region228
        $region227: #{forward.3} parent=143 // pred_region
          %1487 = dma.done [#allocation35], 16
        $region228: #{forward.3} parent=143 // pred_fallthru
          _
        // Predicated region
        $region229: #{forward.3} parent=143 // pred_check
          %p1488 = pneg %p643
        $region230: #{forward.3} parent=143 // pred_check_branch
          %1490 = sbr.rel (%p1488) target = $region232
        $region231: #{forward.3} parent=143 // pred_region
          %1491 = dma.done [#allocation38], 1024
        $region232: #{forward.3} parent=143 // pred_fallthru
          _
        // Predicated region
        $region233: #{forward.3} parent=143 // pred_check
          %p1492 = pneg %p664
        $region234: #{forward.3} parent=143 // pred_check_branch
          %1494 = sbr.rel (%p1492) target = $region236
        $region235: #{forward.3} parent=143 // pred_region
          %1495 = dma.done [#allocation38], 16
        $region236: #{forward.3} parent=143 // pred_fallthru
          _
        // Predicated region
        $region237: #{forward.3} parent=143 // pred_check
          %p1496 = pneg %p685
        $region238: #{forward.3} parent=143 // pred_check_branch
          %1498 = sbr.rel (%p1496) target = $region240
        $region239: #{forward.3} parent=143 // pred_region
          %1499 = dma.done [#allocation41], 256
        $region240: #{forward.3} parent=143 // pred_fallthru
          _
        // Predicated region
        $region241: #{forward.3} parent=143 // pred_check
          %p1500 = pneg %p706
        $region242: #{forward.3} parent=143 // pred_check_branch
          %1502 = sbr.rel (%p1500) target = $region244
        $region243: #{forward.3} parent=143 // pred_region
          %1503 = dma.done [#allocation41], 16
        $region244: #{forward.3} parent=143 // pred_fallthru
          _
        // Predicated region
        $region245: #{forward.3} parent=143 // pred_check
          %p1504 = pneg %p727
        $region246: #{forward.3} parent=143 // pred_check_branch
          %1506 = sbr.rel (%p1504) target = $region248
        $region247: #{forward.3} parent=143 // pred_region
          %1507 = dma.done [#allocation44], 2048
        $region248: #{forward.3} parent=143 // pred_fallthru
          _
        // Predicated region
        $region249: #{forward.3} parent=143 // pred_check
          %p1508 = pneg %p748
        $region250: #{forward.3} parent=143 // pred_check_branch
          %1510 = sbr.rel (%p1508) target = $region252
        $region251: #{forward.3} parent=143 // pred_region
          %1511 = dma.done [#allocation44], 32
        $region252: #{forward.3} parent=143 // pred_fallthru
          _
        // Predicated region
        $region253: #{forward.3} parent=143 // pred_check
          %p1512 = pneg %p769
        $region254: #{forward.3} parent=143 // pred_check_branch
          %1514 = sbr.rel (%p1512) target = $region256
        $region255: #{forward.3} parent=143 // pred_region
          %1515 = dma.done [#allocation47], 2048
        $region256: #{forward.3} parent=143 // pred_fallthru
          _
        // Predicated region
        $region257: #{forward.3} parent=143 // pred_check
          %p1516 = pneg %p790
        $region258: #{forward.3} parent=143 // pred_check_branch
          %1518 = sbr.rel (%p1516) target = $region260
        $region259: #{forward.3} parent=143 // pred_region
          %1519 = dma.done [#allocation47], 16
        $region260: #{forward.3} parent=143 // pred_fallthru
          _
        // Predicated region
        $region261: #{forward.3} parent=143 // pred_check
          %p1520 = pneg %p811
        $region262: #{forward.3} parent=143 // pred_check_branch
          %1522 = sbr.rel (%p1520) target = $region264
        $region263: #{forward.3} parent=143 // pred_region
          %1523 = dma.done [#allocation50], 1024
        $region264: #{forward.3} parent=143 // pred_fallthru
          _
        %p1524 = pneg %p142
        %p1525 = pneg %p139
        %s1526 = sand.u32 %s109, 1
        %s1527 = scalar_lea.sflag [#allocation8], %s1526
        %s1528 = sand.u32 %s155, 1
        %s1529 = scalar_lea.vmem [#allocation7], %s1528
        %p1530 = pneg %p168
        %p1531 = pneg %p165
        %s1532 = sand.u32 %s109, 1
        %s1533 = scalar_lea.sflag [#allocation8], %s1532
        %s1534 = sand.u32 %s181, 1
        %s1535 = scalar_lea.vmem [#allocation9], %s1534
        %p1536 = pneg %p194
        %p1537 = pneg %p191
        %s1538 = sand.u32 %s109, 1
        %s1539 = scalar_lea.sflag [#allocation11], %s1538
        %s1540 = sand.u32 %s207, 1
        %s1541 = smul.addr %s1540, 16
        %s1542 = scalar_lea.vmem [#allocation10], %s1541
        %p1543 = pneg %p220
        %p1544 = pneg %p217
        %s1545 = sand.u32 %s109, 1
        %s1546 = scalar_lea.sflag [#allocation11], %s1545
        %s1547 = sand.u32 %s233, 1
        %s1548 = scalar_lea.vmem [#allocation12], %s1547
        %p1549 = pneg %p246
        %p1550 = pneg %p243
        %s1551 = sand.u32 %s109, 1
        %s1552 = scalar_lea.sflag [#allocation14], %s1551
        %s1553 = sand.u32 %s259, 1
        %s1554 = smul.addr %s1553, 16
        %s1555 = scalar_lea.vmem [#allocation13], %s1554
        %p1556 = pneg %p272
        %p1557 = pneg %p269
        %s1558 = sand.u32 %s109, 1
        %s1559 = scalar_lea.sflag [#allocation14], %s1558
        %s1560 = sand.u32 %s285, 1
        %s1561 = scalar_lea.vmem [#allocation15], %s1560
        %p1562 = pneg %p298
        %p1563 = pneg %p295
        %s1564 = sand.u32 %s109, 1
        %s1565 = scalar_lea.sflag [#allocation17], %s1564
        %s1566 = sand.u32 %s311, 1
        %s1567 = scalar_lea.vmem [#allocation16], %s1566
        %p1568 = pneg %p324
        %p1569 = pneg %p321
        %s1570 = sand.u32 %s109, 1
        %s1571 = scalar_lea.sflag [#allocation17], %s1570
        %s1572 = sand.u32 %s337, 1
        %s1573 = scalar_lea.vmem [#allocation18], %s1572
        %p1574 = pneg %p350
        %p1575 = pneg %p347
        %s1576 = sand.u32 %s109, 1
        %s1577 = scalar_lea.sflag [#allocation20], %s1576
        %s1578 = sand.u32 %s363, 1
        %s1579 = smul.addr %s1578, 16
        %s1580 = scalar_lea.vmem [#allocation19], %s1579
        %p1581 = pneg %p376
        %p1582 = pneg %p373
        %s1583 = sand.u32 %s109, 1
        %s1584 = scalar_lea.sflag [#allocation20], %s1583
        %s1585 = sand.u32 %s389, 1
        %s1586 = scalar_lea.vmem [#allocation21], %s1585
        %p1587 = pneg %p402
        %p1588 = pneg %p399
        %s1589 = sand.u32 %s109, 1
        %s1590 = scalar_lea.sflag [#allocation23], %s1589
        %s1591 = sand.u32 %s415, 1
        %s1592 = smul.addr %s1591, 64
        %s1593 = scalar_lea.vmem [#allocation22], %s1592
        %p1594 = pneg %p428
        %p1595 = pneg %p425
        %s1596 = sand.u32 %s109, 1
        %s1597 = scalar_lea.sflag [#allocation23], %s1596
        %s1598 = sand.u32 %s441, 1
        %s1599 = scalar_lea.vmem [#allocation24], %s1598
        %p1600 = pneg %p454
        %p1601 = pneg %p451
        %p1602 = pneg %p475
        %p1603 = pneg %p472
        %p1604 = pneg %p496
        %p1605 = pneg %p493
        %p1606 = pneg %p517
        %p1607 = pneg %p514
        %p1608 = pneg %p538
        %p1609 = pneg %p535
        %p1610 = pneg %p559
        %p1611 = pneg %p556
        %p1612 = pneg %p580
        %p1613 = pneg %p577
        %p1614 = pneg %p601
        %p1615 = pneg %p598
        %p1616 = pneg %p622
        %p1617 = pneg %p619
        %p1618 = pneg %p643
        %p1619 = pneg %p640
        %p1620 = pneg %p664
        %p1621 = pneg %p661
        %p1622 = pneg %p685
        %p1623 = pneg %p682
        %p1624 = pneg %p706
        %p1625 = pneg %p703
        %p1626 = pneg %p727
        %p1627 = pneg %p724
        %p1628 = pneg %p748
        %p1629 = pneg %p745
        %p1630 = pneg %p769
        %p1631 = pneg %p766
        %p1632 = pneg %p790
        %p1633 = pneg %p787
        %p1634 = pneg %p811
        %p1635 = pneg %p808
        %p1636 = pneg %p832
        %p1637 = pneg %p829
        %p1638 = pneg %p858
        %p1639 = pneg %p855
        %p1640 = pneg %p884
        %p1641 = pneg %p881
        %s1642 = smul.u32 2, %s113
        %p1644 = scmp.eq.s32.totalorder %s114, 0
        // Predicated region
        $region265: #{forward.3} parent=143 // pred_check
          %p1645 = pneg %p1644
        $region266: #{forward.3} parent=143 // pred_check_branch
          %1647 = sbr.rel (%p1645) target = $region268
        $region267: #{forward.3} parent=143 // pred_region
          %v1648 = vld [vmem:[#allocation4] sm:$0xff]
          %v1649 = vld [vmem:[#allocation4 + $0x8] sm:$0xff]
          %vm1650 = vcmask 261120
          %1651 = vst.msk [vmem:[#allocation2] sm:$0xff] %vm1650, %v1648
          %1652 = vst.msk [vmem:[#allocation2 + $0x8] sm:$0xff] %vm1650, %v1649
        $region268: #{forward.3} parent=143 // pred_fallthru
          _
        %v1653 = vld [vmem:[#allocation2] sm:$0xff]
        %v1654 = vld [vmem:[#allocation2 + $0x8] sm:$0xff]
        %v1655 = vld [vmem:[%s1359] sm:$0x1]
        %v1656 = vld [vmem:[%s1367] sm:$0x1]
        %vm1657 = vcmask 261120
        %v1658 = vsel %vm1657, %v1653, 0.0
        %1659 = vadd.xlane.f32.xlu0 %v1658
        %v1660 = vpop.xlane.xlu0 %1659
        %v1661 = vsel %vm1657, %v1654, 0.0
        %1662 = vadd.xlane.f32.xlu0 %v1661
        %v1663 = vpop.xlane.xlu0 %1662
        %v1664 = vrcp.pop 32.0
        %v1665 = vmul.f32 %v1660, %v1664
        %v1666 = vmul.f32 %v1663, %v1664
        %v1667 = vsub.f32 %v1653, %v1665
        %v1668 = vsub.f32 %v1654, %v1666
        %v1669 = vmul.f32 %v1667, %v1667
        %v1670 = vmul.f32 %v1668, %v1668
        %v1671 = vsel %vm1657, %v1669, 0.0
        %1672 = vadd.xlane.f32.xlu0 %v1671
        %v1673 = vpop.xlane.xlu0 %1672
        %v1674 = vsel %vm1657, %v1670, 0.0
        %1675 = vadd.xlane.f32.xlu0 %v1674
        %v1676 = vpop.xlane.xlu0 %1675
        %v1677 = vmul.f32 %v1673, %v1664
        %v1678 = vmul.f32 %v1676, %v1664
        %v1679 = vadd.f32 %v1677, 1e-05
        %v1680 = vadd.f32 %v1678, 1e-05
        %v1681 = vrsqrt.pop %v1679
        %v1682 = vrsqrt.pop %v1680
        %v1683 = vmul.f32 %v1667, %v1681
        %v1684 = vmul.f32 %v1668, %v1682
        %v1686 = vlaneseq
        %v1687 = vshrl.u32 %v1686, 7
        %v1688 = vsub.s32 0, %v1687
        %v1689 = vrot.slane %v1655, %v1688
        %v1691 = vmul.f32 %v1683, %v1689
        %v1692 = vmul.f32 %v1684, %v1689
        %v1694 = vlaneseq
        %v1695 = vshrl.u32 %v1694, 7
        %v1696 = vsub.s32 0, %v1695
        %v1697 = vrot.slane %v1656, %v1696
        %v1699 = vadd.f32 %v1691, %v1697
        %v1700 = vadd.f32 %v1692, %v1697
        %v1701 = vpack.c.bf16 %v1700, %v1699
        %v1702 = vld [vmem:[%s1376] sm:$0xf]
        %v1703 = vld [vmem:[%s1376 + $0x4] sm:$0xf]
        %v1704 = vld [vmem:[%s1376 + $0x8] sm:$0xf]
        %v1705 = vld [vmem:[%s1376 + $0xc] sm:$0xf]
        %v1706 = vld [vmem:[%s1384] sm:$0x1]
        %v1708 = vlaneseq
        %v1709 = vshrl.u32 %v1708, 7
        %v1710 = vsub.s32 0, %v1709
        %v1711 = vrot.slane %v1706, %v1710
        %v1717 = vunpack.c.l.b16 %v1702
        %v1718 = vunpack.c.l.b16 %v1703
        %v1719 = vunpack.c.l.b16 %v1704
        %v1720 = vunpack.c.l.b16 %v1705
        %v1721 = vpack.c.b16 %v1718, %v1717
        %v1722 = vpack.c.b16 %v1720, %v1719
        %v1726 = vsel %vm1657, %v1701, 0
        %1728 = vmatprep.subr.bf16.mxu0 0
        %1729 = vmatpush1.bf16.msra.mxu0 %v1721
        %1730 = vmatprep.subr.bf16.mxu0 0
        %1731 = vmatpush1.bf16.msra.mxu0 %v1722
        %1732 = vmatprep.subr.bf16.mxu0 0
        %1733 = vmatpush1.bf16.msra.mxu0 0
        %1734 = vmatprep.subr.bf16.mxu0 0
        %1735 = vmatpush1.bf16.msra.mxu0 0
        %1736 = vmatprep.subr.bf16.mxu0 0
        %1737 = vmatpush1.bf16.msra.mxu0 0
        %1738 = vmatprep.subr.bf16.mxu0 0
        %1739 = vmatpush1.bf16.msra.mxu0 0
        %1740 = vmatprep.subr.bf16.mxu0 0
        %1741 = vmatpush1.bf16.msra.mxu0 0
        %1742 = vmatprep.subr.bf16.mxu0 0
        %1743 = vmatpush1.bf16.msra.mxu0 0
        %1744 = vmatprep.subr.bf16.mxu0 0
        %1745 = vmatpush1.bf16.msra.mxu0 0
        %1746 = vmatprep.subr.bf16.mxu0 0
        %1747 = vmatpush1.bf16.msra.mxu0 0
        %1748 = vmatprep.subr.bf16.mxu0 0
        %1749 = vmatpush1.bf16.msra.mxu0 0
        %1750 = vmatprep.subr.bf16.mxu0 0
        %1751 = vmatpush1.bf16.msra.mxu0 0
        %1752 = vmatprep.subr.bf16.mxu0 0
        %1753 = vmatpush1.bf16.msra.mxu0 0
        %1754 = vmatprep.subr.bf16.mxu0 0
        %1755 = vmatpush1.bf16.msra.mxu0 0
        %1756 = vmatprep.subr.bf16.mxu0 0
        %1757 = vmatpush1.bf16.msra.mxu0 0
        %1758 = vmatprep.subr.bf16.mxu0 0
        %1759 = vmatpush1.bf16.msra.mxu0 0
        %1760 = vmatprep.mubr.bf16.mxu0 0
        %1761 = vmatmul.mubr.bf16.gmra.mrb[0].mxu0 %v1726
        %v1762 = vpop.f32.mrb[0].mxu0
        %v1763 = vadd.f32 %v1711, %v1762
        %v1764 = vpop.f32.mrb[0].mxu0
        %v1765 = vpop.f32.mrb[0].mxu0
        %v1766 = vadd.f32 %v1711, %v1765
        %v1767 = vpop.f32.mrb[0].mxu0
        %1768 = vdwg.mxu0
        %v1769 = vpack.c.bf16 %v1763, %v1763
        %v1770 = vpack.c.bf16 %v1766, %v1766
        %v1771 = vlaneseq
        %v1772 = vshrl.u32 %v1771, 7
        %v1773 = vlaneseq
        %v1774 = vand.u32 %v1773, 127
        %v1775 = vsub.s32 %v1772, %v1774
        %vm1776 = vcmp.lt.s32.totalorder %v1775, 0
        %v1777 = vsub.s32 0, %v1775
        %v1778 = vsel %vm1776, %v1777, %v1775
        %v1779 = vld [vmem:[%s1393] sm:$0xf]
        %v1780 = vld [vmem:[%s1393 + $0x4] sm:$0xf]
        %v1781 = vld [vmem:[%s1393 + $0x8] sm:$0xf]
        %v1782 = vld [vmem:[%s1393 + $0xc] sm:$0xf]
        %1784 = vrot.lane.b32.xlu0 %v1769, 96
        %v1785 = vpop.permute.xlu0 %1784
        %vm1786 = vcmask 64512
        %v1788 = vsel %vm1786, %v1769, 0
        %v1791 = vsel %vm1786, %v1785, 0
        %1793 = vmatprep.subr.bf16.mxu0 0
        %1794 = vmatpush1.bf16.xpose.msra.mxu0 %v1791
        %1795 = vmatprep.subr.bf16.mxu0 0
        %1796 = vmatpush1.bf16.xpose.msra.mxu0 0
        %1797 = vmatprep.subr.bf16.mxu0 0
        %1798 = vmatpush1.bf16.xpose.msra.mxu0 0
        %1799 = vmatprep.subr.bf16.mxu0 0
        %1800 = vmatpush1.bf16.xpose.msra.mxu0 0
        %1801 = vmatprep.subr.bf16.mxu0 0
        %1802 = vmatpush1.bf16.xpose.msra.mxu0 0
        %1803 = vmatprep.subr.bf16.mxu0 0
        %1804 = vmatpush1.bf16.xpose.msra.mxu0 0
        %1805 = vmatprep.subr.bf16.mxu0 0
        %1806 = vmatpush1.bf16.xpose.msra.mxu0 0
        %1807 = vmatprep.subr.bf16.mxu0 0
        %1808 = vmatpush1.bf16.xpose.msra.mxu0 0
        %1809 = vmatprep.subr.bf16.mxu0 0
        %1810 = vmatpush1.bf16.xpose.msra.mxu0 0
        %1811 = vmatprep.subr.bf16.mxu0 0
        %1812 = vmatpush1.bf16.xpose.msra.mxu0 0
        %1813 = vmatprep.subr.bf16.mxu0 0
        %1814 = vmatpush1.bf16.xpose.msra.mxu0 0
        %1815 = vmatprep.subr.bf16.mxu0 0
        %1816 = vmatpush1.bf16.xpose.msra.mxu0 0
        %1817 = vmatprep.subr.bf16.mxu0 0
        %1818 = vmatpush1.bf16.xpose.msra.mxu0 0
        %1819 = vmatprep.subr.bf16.mxu0 0
        %1820 = vmatpush1.bf16.xpose.msra.mxu0 0
        %1821 = vmatprep.subr.bf16.mxu0 0
        %1822 = vmatpush1.bf16.xpose.msra.mxu0 0
        %1823 = vmatprep.subr.bf16.mxu0 0
        %1824 = vmatpush1.bf16.xpose.msra.mxu0 0
        %1825 = vmatprep.mubr.bf16.mxu0 0
        %1826 = vmatmul.mubr.bf16.gmra.mrb[0].mxu0 %v1788
        %v1827 = vpop.f32.mrb[0].mxu0
        %v1828 = vadd.f32 0.0, %v1827
        %v1829 = vpop.f32.mrb[0].mxu0
        %v1830 = vpop.f32.mrb[0].mxu0
        %v1831 = vpop.f32.mrb[0].mxu0
        %1832 = vdwg.mxu0
        %1834 = vrot.lane.b32.xlu0 %v1770, 96
        %v1835 = vpop.permute.xlu0 %1834
        %v1837 = vsel %vm1786, %v1770, 0
        %v1840 = vsel %vm1786, %v1835, 0
        %1842 = vmatprep.subr.bf16.mxu0 0
        %1843 = vmatpush1.bf16.xpose.msra.mxu0 %v1840
        %1844 = vmatprep.subr.bf16.mxu0 0
        %1845 = vmatpush1.bf16.xpose.msra.mxu0 0
        %1846 = vmatprep.subr.bf16.mxu0 0
        %1847 = vmatpush1.bf16.xpose.msra.mxu0 0
        %1848 = vmatprep.subr.bf16.mxu0 0
        %1849 = vmatpush1.bf16.xpose.msra.mxu0 0
        %1850 = vmatprep.subr.bf16.mxu0 0
        %1851 = vmatpush1.bf16.xpose.msra.mxu0 0
        %1852 = vmatprep.subr.bf16.mxu0 0
        %1853 = vmatpush1.bf16.xpose.msra.mxu0 0
        %1854 = vmatprep.subr.bf16.mxu0 0
        %1855 = vmatpush1.bf16.xpose.msra.mxu0 0
        %1856 = vmatprep.subr.bf16.mxu0 0
        %1857 = vmatpush1.bf16.xpose.msra.mxu0 0
        %1858 = vmatprep.subr.bf16.mxu0 0
        %1859 = vmatpush1.bf16.xpose.msra.mxu0 0
        %1860 = vmatprep.subr.bf16.mxu0 0
        %1861 = vmatpush1.bf16.xpose.msra.mxu0 0
        %1862 = vmatprep.subr.bf16.mxu0 0
        %1863 = vmatpush1.bf16.xpose.msra.mxu0 0
        %1864 = vmatprep.subr.bf16.mxu0 0
        %1865 = vmatpush1.bf16.xpose.msra.mxu0 0
        %1866 = vmatprep.subr.bf16.mxu0 0
        %1867 = vmatpush1.bf16.xpose.msra.mxu0 0
        %1868 = vmatprep.subr.bf16.mxu0 0
        %1869 = vmatpush1.bf16.xpose.msra.mxu0 0
        %1870 = vmatprep.subr.bf16.mxu0 0
        %1871 = vmatpush1.bf16.xpose.msra.mxu0 0
        %1872 = vmatprep.subr.bf16.mxu0 0
        %1873 = vmatpush1.bf16.xpose.msra.mxu0 0
        %1874 = vmatprep.mubr.bf16.mxu0 0
        %1875 = vmatmul.mubr.bf16.gmra.mrb[0].mxu0 %v1837
        %v1876 = vpop.f32.mrb[0].mxu0
        %v1877 = vadd.f32 0.0, %v1876
        %v1878 = vpop.f32.mrb[0].mxu0
        %v1879 = vpop.f32.mrb[0].mxu0
        %v1880 = vpop.f32.mrb[0].mxu0
        %1881 = vdwg.mxu0
        %v1882 = vmul.f32 %v1828, 0.35355338
        %v1883 = vmul.f32 %v1877, 0.35355338
        %vm1884 = vcmp.le.s32.totalorder %v1778, 1
        %v1885 = vand.u32 %v1778, 1
        %vm1886 = vcmp.eq.s32.totalorder %v1885, 0
        %vm1887 = vmor %vm1884, %vm1886
        %v1888 = vsel %vm1887, 1, 0
        %vm1889 = vcmp.eq.s32.totalorder %v1888, 1
        %v1890 = vsel %vm1889, %v1882, -1e+30
        %v1891 = vsel %vm1889, %v1883, -1e+30
        %v1892 = vsel %vm1786, %v1890, -inf
        %1893 = vmax.xlane.f32.xlu0 %v1892
        %v1894 = vpop.xlane.xlu0 %1893
        %v1895 = vsel %vm1786, %v1891, -inf
        %1896 = vmax.xlane.f32.xlu0 %v1895
        %v1897 = vpop.xlane.xlu0 %1896
        %v1898 = vsub.f32 %v1890, %v1894
        %v1899 = vsub.f32 %v1891, %v1897
        %v1900 = vmul.f32 %v1898, 1.442695
        %v1901 = vpow.pop %v1900
        %v1902 = vmul.f32 %v1899, 1.442695
        %v1903 = vpow.pop %v1902
        %v1904 = vsel %vm1786, %v1901, 0.0
        %1905 = vadd.xlane.f32.xlu0 %v1904
        %v1906 = vpop.xlane.xlu0 %1905
        %v1907 = vsel %vm1786, %v1903, 0.0
        %1908 = vadd.xlane.f32.xlu0 %v1907
        %v1909 = vpop.xlane.xlu0 %1908
        %v1910 = vrcp.pop %v1906
        %v1911 = vmul.f32 %v1901, %v1910
        %v1912 = vrcp.pop %v1909
        %v1913 = vmul.f32 %v1903, %v1912
        %v1914 = vpack.c.bf16 %v1911, %v1911
        %v1915 = vpack.c.bf16 %v1913, %v1913
        %1916 = vrot.lane.b32.xlu0 %v1769, 64
        %v1917 = vpop.permute.xlu0 %1916
        %v1919 = vsel %vm1786, %v1914, 0
        %vm1921 = vcmask 1043456
        %v1923 = vsel %vm1921, %v1917, 0
        %1925 = vmatprep.subr.bf16.mxu0 0
        %1926 = vmatpush1.bf16.msra.mxu0 %v1923
        %1927 = vmatprep.subr.bf16.mxu0 0
        %1928 = vmatpush1.bf16.msra.mxu0 0
        %1929 = vmatprep.subr.bf16.mxu0 0
        %1930 = vmatpush1.bf16.msra.mxu0 0
        %1931 = vmatprep.subr.bf16.mxu0 0
        %1932 = vmatpush1.bf16.msra.mxu0 0
        %1933 = vmatprep.subr.bf16.mxu0 0
        %1934 = vmatpush1.bf16.msra.mxu0 0
        %1935 = vmatprep.subr.bf16.mxu0 0
        %1936 = vmatpush1.bf16.msra.mxu0 0
        %1937 = vmatprep.subr.bf16.mxu0 0
        %1938 = vmatpush1.bf16.msra.mxu0 0
        %1939 = vmatprep.subr.bf16.mxu0 0
        %1940 = vmatpush1.bf16.msra.mxu0 0
        %1941 = vmatprep.subr.bf16.mxu0 0
        %1942 = vmatpush1.bf16.msra.mxu0 0
        %1943 = vmatprep.subr.bf16.mxu0 0
        %1944 = vmatpush1.bf16.msra.mxu0 0
        %1945 = vmatprep.subr.bf16.mxu0 0
        %1946 = vmatpush1.bf16.msra.mxu0 0
        %1947 = vmatprep.subr.bf16.mxu0 0
        %1948 = vmatpush1.bf16.msra.mxu0 0
        %1949 = vmatprep.subr.bf16.mxu0 0
        %1950 = vmatpush1.bf16.msra.mxu0 0
        %1951 = vmatprep.subr.bf16.mxu0 0
        %1952 = vmatpush1.bf16.msra.mxu0 0
        %1953 = vmatprep.subr.bf16.mxu0 0
        %1954 = vmatpush1.bf16.msra.mxu0 0
        %1955 = vmatprep.subr.bf16.mxu0 0
        %1956 = vmatpush1.bf16.msra.mxu0 0
        %1957 = vmatprep.mubr.bf16.mxu0 0
        %1958 = vmatmul.mubr.bf16.gmra.mrb[0].mxu0 %v1919
        %v1959 = vpop.f32.mrb[0].mxu0
        %v1960 = vadd.f32 0.0, %v1959
        %v1961 = vpop.f32.mrb[0].mxu0
        %v1962 = vpop.f32.mrb[0].mxu0
        %v1963 = vpop.f32.mrb[0].mxu0
        %1964 = vdwg.mxu0
        %1965 = vrot.lane.b32.xlu0 %v1770, 64
        %v1966 = vpop.permute.xlu0 %1965
        %v1968 = vsel %vm1786, %v1915, 0
        %v1971 = vsel %vm1921, %v1966, 0
        %1973 = vmatprep.subr.bf16.mxu0 0
        %1974 = vmatpush1.bf16.msra.mxu0 %v1971
        %1975 = vmatprep.subr.bf16.mxu0 0
        %1976 = vmatpush1.bf16.msra.mxu0 0
        %1977 = vmatprep.subr.bf16.mxu0 0
        %1978 = vmatpush1.bf16.msra.mxu0 0
        %1979 = vmatprep.subr.bf16.mxu0 0
        %1980 = vmatpush1.bf16.msra.mxu0 0
        %1981 = vmatprep.subr.bf16.mxu0 0
        %1982 = vmatpush1.bf16.msra.mxu0 0
        %1983 = vmatprep.subr.bf16.mxu0 0
        %1984 = vmatpush1.bf16.msra.mxu0 0
        %1985 = vmatprep.subr.bf16.mxu0 0
        %1986 = vmatpush1.bf16.msra.mxu0 0
        %1987 = vmatprep.subr.bf16.mxu0 0
        %1988 = vmatpush1.bf16.msra.mxu0 0
        %1989 = vmatprep.subr.bf16.mxu0 0
        %1990 = vmatpush1.bf16.msra.mxu0 0
        %1991 = vmatprep.subr.bf16.mxu0 0
        %1992 = vmatpush1.bf16.msra.mxu0 0
        %1993 = vmatprep.subr.bf16.mxu0 0
        %1994 = vmatpush1.bf16.msra.mxu0 0
        %1995 = vmatprep.subr.bf16.mxu0 0
        %1996 = vmatpush1.bf16.msra.mxu0 0
        %1997 = vmatprep.subr.bf16.mxu0 0
        %1998 = vmatpush1.bf16.msra.mxu0 0
        %1999 = vmatprep.subr.bf16.mxu0 0
        %2000 = vmatpush1.bf16.msra.mxu0 0
        %2001 = vmatprep.subr.bf16.mxu0 0
        %2002 = vmatpush1.bf16.msra.mxu0 0
        %2003 = vmatprep.subr.bf16.mxu0 0
        %2004 = vmatpush1.bf16.msra.mxu0 0
        %2005 = vmatprep.mubr.bf16.mxu0 0
        %2006 = vmatmul.mubr.bf16.gmra.mrb[0].mxu0 %v1968
        %v2007 = vpop.f32.mrb[0].mxu0
        %v2008 = vadd.f32 0.0, %v2007
        %v2009 = vpop.f32.mrb[0].mxu0
        %v2010 = vpop.f32.mrb[0].mxu0
        %v2011 = vpop.f32.mrb[0].mxu0
        %2012 = vdwg.mxu0
        %v2013 = vpack.c.bf16 %v2008, %v1960
        %2014 = vrot.lane.b32.xlu0 %v1769, 120
        %v2015 = vpop.permute.xlu0 %2014
        %2016 = vrot.lane.b32.xlu0 %v1769, 88
        %v2017 = vpop.permute.xlu0 %2016
        %v2019 = vsel %vm1786, %v2015, 0
        %v2022 = vsel %vm1786, %v2017, 0
        %2024 = vmatprep.subr.bf16.mxu0 0
        %2025 = vmatpush1.bf16.xpose.msra.mxu0 %v2022
        %2026 = vmatprep.subr.bf16.mxu0 0
        %2027 = vmatpush1.bf16.xpose.msra.mxu0 0
        %2028 = vmatprep.subr.bf16.mxu0 0
        %2029 = vmatpush1.bf16.xpose.msra.mxu0 0
        %2030 = vmatprep.subr.bf16.mxu0 0
        %2031 = vmatpush1.bf16.xpose.msra.mxu0 0
        %2032 = vmatprep.subr.bf16.mxu0 0
        %2033 = vmatpush1.bf16.xpose.msra.mxu0 0
        %2034 = vmatprep.subr.bf16.mxu0 0
        %2035 = vmatpush1.bf16.xpose.msra.mxu0 0
        %2036 = vmatprep.subr.bf16.mxu0 0
        %2037 = vmatpush1.bf16.xpose.msra.mxu0 0
        %2038 = vmatprep.subr.bf16.mxu0 0
        %2039 = vmatpush1.bf16.xpose.msra.mxu0 0
        %2040 = vmatprep.subr.bf16.mxu0 0
        %2041 = vmatpush1.bf16.xpose.msra.mxu0 0
        %2042 = vmatprep.subr.bf16.mxu0 0
        %2043 = vmatpush1.bf16.xpose.msra.mxu0 0
        %2044 = vmatprep.subr.bf16.mxu0 0
        %2045 = vmatpush1.bf16.xpose.msra.mxu0 0
        %2046 = vmatprep.subr.bf16.mxu0 0
        %2047 = vmatpush1.bf16.xpose.msra.mxu0 0
        %2048 = vmatprep.subr.bf16.mxu0 0
        %2049 = vmatpush1.bf16.xpose.msra.mxu0 0
        %2050 = vmatprep.subr.bf16.mxu0 0
        %2051 = vmatpush1.bf16.xpose.msra.mxu0 0
        %2052 = vmatprep.subr.bf16.mxu0 0
        %2053 = vmatpush1.bf16.xpose.msra.mxu0 0
        %2054 = vmatprep.subr.bf16.mxu0 0
        %2055 = vmatpush1.bf16.xpose.msra.mxu0 0
        %2056 = vmatprep.mubr.bf16.mxu0 0
        %2057 = vmatmul.mubr.bf16.gmra.mrb[0].mxu0 %v2019
        %v2058 = vpop.f32.mrb[0].mxu0
        %v2059 = vadd.f32 0.0, %v2058
        %v2060 = vpop.f32.mrb[0].mxu0
        %v2061 = vpop.f32.mrb[0].mxu0
        %v2062 = vpop.f32.mrb[0].mxu0
        %2063 = vdwg.mxu0
        %2064 = vrot.lane.b32.xlu0 %v1770, 120
        %v2065 = vpop.permute.xlu0 %2064
        %2066 = vrot.lane.b32.xlu0 %v1770, 88
        %v2067 = vpop.permute.xlu0 %2066
        %v2069 = vsel %vm1786, %v2065, 0
        %v2072 = vsel %vm1786, %v2067, 0
        %2074 = vmatprep.subr.bf16.mxu0 0
        %2075 = vmatpush1.bf16.xpose.msra.mxu0 %v2072
        %2076 = vmatprep.subr.bf16.mxu0 0
        %2077 = vmatpush1.bf16.xpose.msra.mxu0 0
        %2078 = vmatprep.subr.bf16.mxu0 0
        %2079 = vmatpush1.bf16.xpose.msra.mxu0 0
        %2080 = vmatprep.subr.bf16.mxu0 0
        %2081 = vmatpush1.bf16.xpose.msra.mxu0 0
        %2082 = vmatprep.subr.bf16.mxu0 0
        %2083 = vmatpush1.bf16.xpose.msra.mxu0 0
        %2084 = vmatprep.subr.bf16.mxu0 0
        %2085 = vmatpush1.bf16.xpose.msra.mxu0 0
        %2086 = vmatprep.subr.bf16.mxu0 0
        %2087 = vmatpush1.bf16.xpose.msra.mxu0 0
        %2088 = vmatprep.subr.bf16.mxu0 0
        %2089 = vmatpush1.bf16.xpose.msra.mxu0 0
        %2090 = vmatprep.subr.bf16.mxu0 0
        %2091 = vmatpush1.bf16.xpose.msra.mxu0 0
        %2092 = vmatprep.subr.bf16.mxu0 0
        %2093 = vmatpush1.bf16.xpose.msra.mxu0 0
        %2094 = vmatprep.subr.bf16.mxu0 0
        %2095 = vmatpush1.bf16.xpose.msra.mxu0 0
        %2096 = vmatprep.subr.bf16.mxu0 0
        %2097 = vmatpush1.bf16.xpose.msra.mxu0 0
        %2098 = vmatprep.subr.bf16.mxu0 0
        %2099 = vmatpush1.bf16.xpose.msra.mxu0 0
        %2100 = vmatprep.subr.bf16.mxu0 0
        %2101 = vmatpush1.bf16.xpose.msra.mxu0 0
        %2102 = vmatprep.subr.bf16.mxu0 0
        %2103 = vmatpush1.bf16.xpose.msra.mxu0 0
        %2104 = vmatprep.subr.bf16.mxu0 0
        %2105 = vmatpush1.bf16.xpose.msra.mxu0 0
        %2106 = vmatprep.mubr.bf16.mxu0 0
        %2107 = vmatmul.mubr.bf16.gmra.mrb[0].mxu0 %v2069
        %v2108 = vpop.f32.mrb[0].mxu0
        %v2109 = vadd.f32 0.0, %v2108
        %v2110 = vpop.f32.mrb[0].mxu0
        %v2111 = vpop.f32.mrb[0].mxu0
        %v2112 = vpop.f32.mrb[0].mxu0
        %2113 = vdwg.mxu0
        %v2114 = vmul.f32 %v2059, 0.35355338
        %v2115 = vmul.f32 %v2109, 0.35355338
        %vm2116 = vcmp.le.s32.totalorder %v1778, 2
        %v2117 = vand.u32 %v1778, 3
        %vm2118 = vcmp.eq.s32.totalorder %v2117, 0
        %vm2119 = vmor %vm2116, %vm2118
        %v2120 = vsel %vm2119, 1, 0
        %vm2121 = vcmp.eq.s32.totalorder %v2120, 1
        %v2122 = vsel %vm2121, %v2114, -1e+30
        %v2123 = vsel %vm2121, %v2115, -1e+30
        %v2124 = vsel %vm1786, %v2122, -inf
        %2125 = vmax.xlane.f32.xlu0 %v2124
        %v2126 = vpop.xlane.xlu0 %2125
        %v2127 = vsel %vm1786, %v2123, -inf
        %2128 = vmax.xlane.f32.xlu0 %v2127
        %v2129 = vpop.xlane.xlu0 %2128
        %v2130 = vsub.f32 %v2122, %v2126
        %v2131 = vsub.f32 %v2123, %v2129
        %v2132 = vmul.f32 %v2130, 1.442695
        %v2133 = vpow.pop %v2132
        %v2134 = vmul.f32 %v2131, 1.442695
        %v2135 = vpow.pop %v2134
        %v2136 = vsel %vm1786, %v2133, 0.0
        %2137 = vadd.xlane.f32.xlu0 %v2136
        %v2138 = vpop.xlane.xlu0 %2137
        %v2139 = vsel %vm1786, %v2135, 0.0
        %2140 = vadd.xlane.f32.xlu0 %v2139
        %v2141 = vpop.xlane.xlu0 %2140
        %v2142 = vrcp.pop %v2138
        %v2143 = vmul.f32 %v2133, %v2142
        %v2144 = vrcp.pop %v2141
        %v2145 = vmul.f32 %v2135, %v2144
        %v2146 = vpack.c.bf16 %v2143, %v2143
        %v2147 = vpack.c.bf16 %v2145, %v2145
        %2148 = vrot.lane.b32.xlu0 %v1769, 56
        %v2149 = vpop.permute.xlu0 %2148
        %v2151 = vsel %vm1786, %v2146, 0
        %v2154 = vsel %vm1921, %v2149, 0
        %2156 = vmatprep.subr.bf16.mxu0 0
        %2157 = vmatpush1.bf16.msra.mxu0 %v2154
        %2158 = vmatprep.subr.bf16.mxu0 0
        %2159 = vmatpush1.bf16.msra.mxu0 0
        %2160 = vmatprep.subr.bf16.mxu0 0
        %2161 = vmatpush1.bf16.msra.mxu0 0
        %2162 = vmatprep.subr.bf16.mxu0 0
        %2163 = vmatpush1.bf16.msra.mxu0 0
        %2164 = vmatprep.subr.bf16.mxu0 0
        %2165 = vmatpush1.bf16.msra.mxu0 0
        %2166 = vmatprep.subr.bf16.mxu0 0
        %2167 = vmatpush1.bf16.msra.mxu0 0
        %2168 = vmatprep.subr.bf16.mxu0 0
        %2169 = vmatpush1.bf16.msra.mxu0 0
        %2170 = vmatprep.subr.bf16.mxu0 0
        %2171 = vmatpush1.bf16.msra.mxu0 0
        %2172 = vmatprep.subr.bf16.mxu0 0
        %2173 = vmatpush1.bf16.msra.mxu0 0
        %2174 = vmatprep.subr.bf16.mxu0 0
        %2175 = vmatpush1.bf16.msra.mxu0 0
        %2176 = vmatprep.subr.bf16.mxu0 0
        %2177 = vmatpush1.bf16.msra.mxu0 0
        %2178 = vmatprep.subr.bf16.mxu0 0
        %2179 = vmatpush1.bf16.msra.mxu0 0
        %2180 = vmatprep.subr.bf16.mxu0 0
        %2181 = vmatpush1.bf16.msra.mxu0 0
        %2182 = vmatprep.subr.bf16.mxu0 0
        %2183 = vmatpush1.bf16.msra.mxu0 0
        %2184 = vmatprep.subr.bf16.mxu0 0
        %2185 = vmatpush1.bf16.msra.mxu0 0
        %2186 = vmatprep.subr.bf16.mxu0 0
        %2187 = vmatpush1.bf16.msra.mxu0 0
        %2188 = vmatprep.mubr.bf16.mxu0 0
        %2189 = vmatmul.mubr.bf16.gmra.mrb[0].mxu0 %v2151
        %v2190 = vpop.f32.mrb[0].mxu0
        %v2191 = vadd.f32 0.0, %v2190
        %v2192 = vpop.f32.mrb[0].mxu0
        %v2193 = vpop.f32.mrb[0].mxu0
        %v2194 = vpop.f32.mrb[0].mxu0
        %2195 = vdwg.mxu0
        %2196 = vrot.lane.b32.xlu0 %v1770, 56
        %v2197 = vpop.permute.xlu0 %2196
        %v2199 = vsel %vm1786, %v2147, 0
        %v2202 = vsel %vm1921, %v2197, 0
        %2204 = vmatprep.subr.bf16.mxu0 0
        %2205 = vmatpush1.bf16.msra.mxu0 %v2202
        %2206 = vmatprep.subr.bf16.mxu0 0
        %2207 = vmatpush1.bf16.msra.mxu0 0
        %2208 = vmatprep.subr.bf16.mxu0 0
        %2209 = vmatpush1.bf16.msra.mxu0 0
        %2210 = vmatprep.subr.bf16.mxu0 0
        %2211 = vmatpush1.bf16.msra.mxu0 0
        %2212 = vmatprep.subr.bf16.mxu0 0
        %2213 = vmatpush1.bf16.msra.mxu0 0
        %2214 = vmatprep.subr.bf16.mxu0 0
        %2215 = vmatpush1.bf16.msra.mxu0 0
        %2216 = vmatprep.subr.bf16.mxu0 0
        %2217 = vmatpush1.bf16.msra.mxu0 0
        %2218 = vmatprep.subr.bf16.mxu0 0
        %2219 = vmatpush1.bf16.msra.mxu0 0
        %2220 = vmatprep.subr.bf16.mxu0 0
        %2221 = vmatpush1.bf16.msra.mxu0 0
        %2222 = vmatprep.subr.bf16.mxu0 0
        %2223 = vmatpush1.bf16.msra.mxu0 0
        %2224 = vmatprep.subr.bf16.mxu0 0
        %2225 = vmatpush1.bf16.msra.mxu0 0
        %2226 = vmatprep.subr.bf16.mxu0 0
        %2227 = vmatpush1.bf16.msra.mxu0 0
        %2228 = vmatprep.subr.bf16.mxu0 0
        %2229 = vmatpush1.bf16.msra.mxu0 0
        %2230 = vmatprep.subr.bf16.mxu0 0
        %2231 = vmatpush1.bf16.msra.mxu0 0
        %2232 = vmatprep.subr.bf16.mxu0 0
        %2233 = vmatpush1.bf16.msra.mxu0 0
        %2234 = vmatprep.subr.bf16.mxu0 0
        %2235 = vmatpush1.bf16.msra.mxu0 0
        %2236 = vmatprep.mubr.bf16.mxu0 0
        %2237 = vmatmul.mubr.bf16.gmra.mrb[0].mxu0 %v2199
        %v2238 = vpop.f32.mrb[0].mxu0
        %v2239 = vadd.f32 0.0, %v2238
        %v2240 = vpop.f32.mrb[0].mxu0
        %v2241 = vpop.f32.mrb[0].mxu0
        %v2242 = vpop.f32.mrb[0].mxu0
        %2243 = vdwg.mxu0
        %v2244 = vpack.c.bf16 %v2239, %v2191
        %v2246 = vsel %vm1786, %v2244, 0
        %v2249 = vsel %vm1921, %v1780, 0
        %2251 = vmatprep.subr.bf16.mxu0 0
        %2252 = vmatpush1.bf16.msra.mxu0 %v2249
        %2253 = vmatprep.subr.bf16.mxu0 0
        %2254 = vmatpush1.bf16.msra.mxu0 0
        %2255 = vmatprep.subr.bf16.mxu0 0
        %2256 = vmatpush1.bf16.msra.mxu0 0
        %2257 = vmatprep.subr.bf16.mxu0 0
        %2258 = vmatpush1.bf16.msra.mxu0 0
        %2259 = vmatprep.subr.bf16.mxu0 0
        %2260 = vmatpush1.bf16.msra.mxu0 0
        %2261 = vmatprep.subr.bf16.mxu0 0
        %2262 = vmatpush1.bf16.msra.mxu0 0
        %2263 = vmatprep.subr.bf16.mxu0 0
        %2264 = vmatpush1.bf16.msra.mxu0 0
        %2265 = vmatprep.subr.bf16.mxu0 0
        %2266 = vmatpush1.bf16.msra.mxu0 0
        %2267 = vmatprep.subr.bf16.mxu0 0
        %2268 = vmatpush1.bf16.msra.mxu0 0
        %2269 = vmatprep.subr.bf16.mxu0 0
        %2270 = vmatpush1.bf16.msra.mxu0 0
        %2271 = vmatprep.subr.bf16.mxu0 0
        %2272 = vmatpush1.bf16.msra.mxu0 0
        %2273 = vmatprep.subr.bf16.mxu0 0
        %2274 = vmatpush1.bf16.msra.mxu0 0
        %2275 = vmatprep.subr.bf16.mxu0 0
        %2276 = vmatpush1.bf16.msra.mxu0 0
        %2277 = vmatprep.subr.bf16.mxu0 0
        %2278 = vmatpush1.bf16.msra.mxu0 0
        %2279 = vmatprep.subr.bf16.mxu0 0
        %2280 = vmatpush1.bf16.msra.mxu0 0
        %2281 = vmatprep.subr.bf16.mxu0 0
        %2282 = vmatpush1.bf16.msra.mxu0 0
        %2283 = vmatprep.mubr.bf16.mxu0 0
        %2284 = vmatmul.mubr.bf16.gmra.mrb[0].mxu0 %v2246
        %v2285 = vpop.f32.mrb[0].mxu0
        %v2286 = vadd.f32 0.0, %v2285
        %v2287 = vpop.f32.mrb[0].mxu0
        %v2288 = vpop.f32.mrb[0].mxu0
        %v2289 = vadd.f32 0.0, %v2288
        %v2290 = vpop.f32.mrb[0].mxu0
        %2291 = vdwg.mxu0
        %v2293 = vsel %vm1786, %v2013, 0
        %v2296 = vsel %vm1921, %v1779, 0
        %2298 = vmatprep.subr.bf16.mxu0 0
        %2299 = vmatpush1.bf16.msra.mxu0 %v2296
        %2300 = vmatprep.subr.bf16.mxu0 0
        %2301 = vmatpush1.bf16.msra.mxu0 0
        %2302 = vmatprep.subr.bf16.mxu0 0
        %2303 = vmatpush1.bf16.msra.mxu0 0
        %2304 = vmatprep.subr.bf16.mxu0 0
        %2305 = vmatpush1.bf16.msra.mxu0 0
        %2306 = vmatprep.subr.bf16.mxu0 0
        %2307 = vmatpush1.bf16.msra.mxu0 0
        %2308 = vmatprep.subr.bf16.mxu0 0
        %2309 = vmatpush1.bf16.msra.mxu0 0
        %2310 = vmatprep.subr.bf16.mxu0 0
        %2311 = vmatpush1.bf16.msra.mxu0 0
        %2312 = vmatprep.subr.bf16.mxu0 0
        %2313 = vmatpush1.bf16.msra.mxu0 0
        %2314 = vmatprep.subr.bf16.mxu0 0
        %2315 = vmatpush1.bf16.msra.mxu0 0
        %2316 = vmatprep.subr.bf16.mxu0 0
        %2317 = vmatpush1.bf16.msra.mxu0 0
        %2318 = vmatprep.subr.bf16.mxu0 0
        %2319 = vmatpush1.bf16.msra.mxu0 0
        %2320 = vmatprep.subr.bf16.mxu0 0
        %2321 = vmatpush1.bf16.msra.mxu0 0
        %2322 = vmatprep.subr.bf16.mxu0 0
        %2323 = vmatpush1.bf16.msra.mxu0 0
        %2324 = vmatprep.subr.bf16.mxu0 0
        %2325 = vmatpush1.bf16.msra.mxu0 0
        %2326 = vmatprep.subr.bf16.mxu0 0
        %2327 = vmatpush1.bf16.msra.mxu0 0
        %2328 = vmatprep.subr.bf16.mxu0 0
        %2329 = vmatpush1.bf16.msra.mxu0 0
        %2330 = vmatprep.mubr.bf16.mxu0 0
        %2331 = vmatmul.mubr.bf16.gmra.mrb[0].mxu0 %v2293
        %v2332 = vpop.f32.mrb[0].mxu0
        %v2333 = vadd.f32 %v2286, %v2332
        %v2334 = vpop.f32.mrb[0].mxu0
        %v2335 = vpop.f32.mrb[0].mxu0
        %v2336 = vadd.f32 %v2289, %v2335
        %v2337 = vpop.f32.mrb[0].mxu0
        %2338 = vdwg.mxu0
        %2339 = vrot.lane.b32.xlu0 %v1769, 112
        %v2340 = vpop.permute.xlu0 %2339
        %2341 = vrot.lane.b32.xlu0 %v1769, 80
        %v2342 = vpop.permute.xlu0 %2341
        %v2344 = vsel %vm1786, %v2340, 0
        %v2347 = vsel %vm1786, %v2342, 0
        %2349 = vmatprep.subr.bf16.mxu0 0
        %2350 = vmatpush1.bf16.xpose.msra.mxu0 %v2347
        %2351 = vmatprep.subr.bf16.mxu0 0
        %2352 = vmatpush1.bf16.xpose.msra.mxu0 0
        %2353 = vmatprep.subr.bf16.mxu0 0
        %2354 = vmatpush1.bf16.xpose.msra.mxu0 0
        %2355 = vmatprep.subr.bf16.mxu0 0
        %2356 = vmatpush1.bf16.xpose.msra.mxu0 0
        %2357 = vmatprep.subr.bf16.mxu0 0
        %2358 = vmatpush1.bf16.xpose.msra.mxu0 0
        %2359 = vmatprep.subr.bf16.mxu0 0
        %2360 = vmatpush1.bf16.xpose.msra.mxu0 0
        %2361 = vmatprep.subr.bf16.mxu0 0
        %2362 = vmatpush1.bf16.xpose.msra.mxu0 0
        %2363 = vmatprep.subr.bf16.mxu0 0
        %2364 = vmatpush1.bf16.xpose.msra.mxu0 0
        %2365 = vmatprep.subr.bf16.mxu0 0
        %2366 = vmatpush1.bf16.xpose.msra.mxu0 0
        %2367 = vmatprep.subr.bf16.mxu0 0
        %2368 = vmatpush1.bf16.xpose.msra.mxu0 0
        %2369 = vmatprep.subr.bf16.mxu0 0
        %2370 = vmatpush1.bf16.xpose.msra.mxu0 0
        %2371 = vmatprep.subr.bf16.mxu0 0
        %2372 = vmatpush1.bf16.xpose.msra.mxu0 0
        %2373 = vmatprep.subr.bf16.mxu0 0
        %2374 = vmatpush1.bf16.xpose.msra.mxu0 0
        %2375 = vmatprep.subr.bf16.mxu0 0
        %2376 = vmatpush1.bf16.xpose.msra.mxu0 0
        %2377 = vmatprep.subr.bf16.mxu0 0
        %2378 = vmatpush1.bf16.xpose.msra.mxu0 0
        %2379 = vmatprep.subr.bf16.mxu0 0
        %2380 = vmatpush1.bf16.xpose.msra.mxu0 0
        %2381 = vmatprep.mubr.bf16.mxu0 0
        %2382 = vmatmul.mubr.bf16.gmra.mrb[0].mxu0 %v2344
        %v2383 = vpop.f32.mrb[0].mxu0
        %v2384 = vadd.f32 0.0, %v2383
        %v2385 = vpop.f32.mrb[0].mxu0
        %v2386 = vpop.f32.mrb[0].mxu0
        %v2387 = vpop.f32.mrb[0].mxu0
        %2388 = vdwg.mxu0
        %2389 = vrot.lane.b32.xlu0 %v1770, 112
        %v2390 = vpop.permute.xlu0 %2389
        %2391 = vrot.lane.b32.xlu0 %v1770, 80
        %v2392 = vpop.permute.xlu0 %2391
        %v2394 = vsel %vm1786, %v2390, 0
        %v2397 = vsel %vm1786, %v2392, 0
        %2399 = vmatprep.subr.bf16.mxu0 0
        %2400 = vmatpush1.bf16.xpose.msra.mxu0 %v2397
        %2401 = vmatprep.subr.bf16.mxu0 0
        %2402 = vmatpush1.bf16.xpose.msra.mxu0 0
        %2403 = vmatprep.subr.bf16.mxu0 0
        %2404 = vmatpush1.bf16.xpose.msra.mxu0 0
        %2405 = vmatprep.subr.bf16.mxu0 0
        %2406 = vmatpush1.bf16.xpose.msra.mxu0 0
        %2407 = vmatprep.subr.bf16.mxu0 0
        %2408 = vmatpush1.bf16.xpose.msra.mxu0 0
        %2409 = vmatprep.subr.bf16.mxu0 0
        %2410 = vmatpush1.bf16.xpose.msra.mxu0 0
        %2411 = vmatprep.subr.bf16.mxu0 0
        %2412 = vmatpush1.bf16.xpose.msra.mxu0 0
        %2413 = vmatprep.subr.bf16.mxu0 0
        %2414 = vmatpush1.bf16.xpose.msra.mxu0 0
        %2415 = vmatprep.subr.bf16.mxu0 0
        %2416 = vmatpush1.bf16.xpose.msra.mxu0 0
        %2417 = vmatprep.subr.bf16.mxu0 0
        %2418 = vmatpush1.bf16.xpose.msra.mxu0 0
        %2419 = vmatprep.subr.bf16.mxu0 0
        %2420 = vmatpush1.bf16.xpose.msra.mxu0 0
        %2421 = vmatprep.subr.bf16.mxu0 0
        %2422 = vmatpush1.bf16.xpose.msra.mxu0 0
        %2423 = vmatprep.subr.bf16.mxu0 0
        %2424 = vmatpush1.bf16.xpose.msra.mxu0 0
        %2425 = vmatprep.subr.bf16.mxu0 0
        %2426 = vmatpush1.bf16.xpose.msra.mxu0 0
        %2427 = vmatprep.subr.bf16.mxu0 0
        %2428 = vmatpush1.bf16.xpose.msra.mxu0 0
        %2429 = vmatprep.subr.bf16.mxu0 0
        %2430 = vmatpush1.bf16.xpose.msra.mxu0 0
        %2431 = vmatprep.mubr.bf16.mxu0 0
        %2432 = vmatmul.mubr.bf16.gmra.mrb[0].mxu0 %v2394
        %v2433 = vpop.f32.mrb[0].mxu0
        %v2434 = vadd.f32 0.0, %v2433
        %v2435 = vpop.f32.mrb[0].mxu0
        %v2436 = vpop.f32.mrb[0].mxu0
        %v2437 = vpop.f32.mrb[0].mxu0
        %2438 = vdwg.mxu0
        %v2439 = vmul.f32 %v2384, 0.35355338
        %v2440 = vmul.f32 %v2434, 0.35355338
        %vm2441 = vcmp.le.s32.totalorder %v1778, 4
        %v2442 = vand.u32 %v1778, 7
        %vm2443 = vcmp.eq.s32.totalorder %v2442, 0
        %vm2444 = vmor %vm2441, %vm2443
        %v2445 = vsel %vm2444, 1, 0
        %vm2446 = vcmp.eq.s32.totalorder %v2445, 1
        %v2447 = vsel %vm2446, %v2439, -1e+30
        %v2448 = vsel %vm2446, %v2440, -1e+30
        %v2449 = vsel %vm1786, %v2447, -inf
        %2450 = vmax.xlane.f32.xlu0 %v2449
        %v2451 = vpop.xlane.xlu0 %2450
        %v2452 = vsel %vm1786, %v2448, -inf
        %2453 = vmax.xlane.f32.xlu0 %v2452
        %v2454 = vpop.xlane.xlu0 %2453
        %v2455 = vsub.f32 %v2447, %v2451
        %v2456 = vsub.f32 %v2448, %v2454
        %v2457 = vmul.f32 %v2455, 1.442695
        %v2458 = vpow.pop %v2457
        %v2459 = vmul.f32 %v2456, 1.442695
        %v2460 = vpow.pop %v2459
        %v2461 = vsel %vm1786, %v2458, 0.0
        %2462 = vadd.xlane.f32.xlu0 %v2461
        %v2463 = vpop.xlane.xlu0 %2462
        %v2464 = vsel %vm1786, %v2460, 0.0
        %2465 = vadd.xlane.f32.xlu0 %v2464
        %v2466 = vpop.xlane.xlu0 %2465
        %v2467 = vrcp.pop %v2463
        %v2468 = vmul.f32 %v2458, %v2467
        %v2469 = vrcp.pop %v2466
        %v2470 = vmul.f32 %v2460, %v2469
        %v2471 = vpack.c.bf16 %v2468, %v2468
        %v2472 = vpack.c.bf16 %v2470, %v2470
        %2473 = vrot.lane.b32.xlu0 %v1769, 48
        %v2474 = vpop.permute.xlu0 %2473
        %v2476 = vsel %vm1786, %v2471, 0
        %v2479 = vsel %vm1921, %v2474, 0
        %2481 = vmatprep.subr.bf16.mxu0 0
        %2482 = vmatpush1.bf16.msra.mxu0 %v2479
        %2483 = vmatprep.subr.bf16.mxu0 0
        %2484 = vmatpush1.bf16.msra.mxu0 0
        %2485 = vmatprep.subr.bf16.mxu0 0
        %2486 = vmatpush1.bf16.msra.mxu0 0
        %2487 = vmatprep.subr.bf16.mxu0 0
        %2488 = vmatpush1.bf16.msra.mxu0 0
        %2489 = vmatprep.subr.bf16.mxu0 0
        %2490 = vmatpush1.bf16.msra.mxu0 0
        %2491 = vmatprep.subr.bf16.mxu0 0
        %2492 = vmatpush1.bf16.msra.mxu0 0
        %2493 = vmatprep.subr.bf16.mxu0 0
        %2494 = vmatpush1.bf16.msra.mxu0 0
        %2495 = vmatprep.subr.bf16.mxu0 0
        %2496 = vmatpush1.bf16.msra.mxu0 0
        %2497 = vmatprep.subr.bf16.mxu0 0
        %2498 = vmatpush1.bf16.msra.mxu0 0
        %2499 = vmatprep.subr.bf16.mxu0 0
        %2500 = vmatpush1.bf16.msra.mxu0 0
        %2501 = vmatprep.subr.bf16.mxu0 0
        %2502 = vmatpush1.bf16.msra.mxu0 0
        %2503 = vmatprep.subr.bf16.mxu0 0
        %2504 = vmatpush1.bf16.msra.mxu0 0
        %2505 = vmatprep.subr.bf16.mxu0 0
        %2506 = vmatpush1.bf16.msra.mxu0 0
        %2507 = vmatprep.subr.bf16.mxu0 0
        %2508 = vmatpush1.bf16.msra.mxu0 0
        %2509 = vmatprep.subr.bf16.mxu0 0
        %2510 = vmatpush1.bf16.msra.mxu0 0
        %2511 = vmatprep.subr.bf16.mxu0 0
        %2512 = vmatpush1.bf16.msra.mxu0 0
        %2513 = vmatprep.mubr.bf16.mxu0 0
        %2514 = vmatmul.mubr.bf16.gmra.mrb[0].mxu0 %v2476
        %v2515 = vpop.f32.mrb[0].mxu0
        %v2516 = vadd.f32 0.0, %v2515
        %v2517 = vpop.f32.mrb[0].mxu0
        %v2518 = vpop.f32.mrb[0].mxu0
        %v2519 = vpop.f32.mrb[0].mxu0
        %2520 = vdwg.mxu0
        %2521 = vrot.lane.b32.xlu0 %v1770, 48
        %v2522 = vpop.permute.xlu0 %2521
        %v2524 = vsel %vm1786, %v2472, 0
        %v2527 = vsel %vm1921, %v2522, 0
        %2529 = vmatprep.subr.bf16.mxu0 0
        %2530 = vmatpush1.bf16.msra.mxu0 %v2527
        %2531 = vmatprep.subr.bf16.mxu0 0
        %2532 = vmatpush1.bf16.msra.mxu0 0
        %2533 = vmatprep.subr.bf16.mxu0 0
        %2534 = vmatpush1.bf16.msra.mxu0 0
        %2535 = vmatprep.subr.bf16.mxu0 0
        %2536 = vmatpush1.bf16.msra.mxu0 0
        %2537 = vmatprep.subr.bf16.mxu0 0
        %2538 = vmatpush1.bf16.msra.mxu0 0
        %2539 = vmatprep.subr.bf16.mxu0 0
        %2540 = vmatpush1.bf16.msra.mxu0 0
        %2541 = vmatprep.subr.bf16.mxu0 0
        %2542 = vmatpush1.bf16.msra.mxu0 0
        %2543 = vmatprep.subr.bf16.mxu0 0
        %2544 = vmatpush1.bf16.msra.mxu0 0
        %2545 = vmatprep.subr.bf16.mxu0 0
        %2546 = vmatpush1.bf16.msra.mxu0 0
        %2547 = vmatprep.subr.bf16.mxu0 0
        %2548 = vmatpush1.bf16.msra.mxu0 0
        %2549 = vmatprep.subr.bf16.mxu0 0
        %2550 = vmatpush1.bf16.msra.mxu0 0
        %2551 = vmatprep.subr.bf16.mxu0 0
        %2552 = vmatpush1.bf16.msra.mxu0 0
        %2553 = vmatprep.subr.bf16.mxu0 0
        %2554 = vmatpush1.bf16.msra.mxu0 0
        %2555 = vmatprep.subr.bf16.mxu0 0
        %2556 = vmatpush1.bf16.msra.mxu0 0
        %2557 = vmatprep.subr.bf16.mxu0 0
        %2558 = vmatpush1.bf16.msra.mxu0 0
        %2559 = vmatprep.subr.bf16.mxu0 0
        %2560 = vmatpush1.bf16.msra.mxu0 0
        %2561 = vmatprep.mubr.bf16.mxu0 0
        %2562 = vmatmul.mubr.bf16.gmra.mrb[0].mxu0 %v2524
        %v2563 = vpop.f32.mrb[0].mxu0
        %v2564 = vadd.f32 0.0, %v2563
        %v2565 = vpop.f32.mrb[0].mxu0
        %v2566 = vpop.f32.mrb[0].mxu0
        %v2567 = vpop.f32.mrb[0].mxu0
        %2568 = vdwg.mxu0
        %v2569 = vpack.c.bf16 %v2564, %v2516
        %v2571 = vsel %vm1786, %v2569, 0
        %v2574 = vsel %vm1921, %v1781, 0
        %2576 = vmatprep.subr.bf16.mxu0 0
        %2577 = vmatpush1.bf16.msra.mxu0 %v2574
        %2578 = vmatprep.subr.bf16.mxu0 0
        %2579 = vmatpush1.bf16.msra.mxu0 0
        %2580 = vmatprep.subr.bf16.mxu0 0
        %2581 = vmatpush1.bf16.msra.mxu0 0
        %2582 = vmatprep.subr.bf16.mxu0 0
        %2583 = vmatpush1.bf16.msra.mxu0 0
        %2584 = vmatprep.subr.bf16.mxu0 0
        %2585 = vmatpush1.bf16.msra.mxu0 0
        %2586 = vmatprep.subr.bf16.mxu0 0
        %2587 = vmatpush1.bf16.msra.mxu0 0
        %2588 = vmatprep.subr.bf16.mxu0 0
        %2589 = vmatpush1.bf16.msra.mxu0 0
        %2590 = vmatprep.subr.bf16.mxu0 0
        %2591 = vmatpush1.bf16.msra.mxu0 0
        %2592 = vmatprep.subr.bf16.mxu0 0
        %2593 = vmatpush1.bf16.msra.mxu0 0
        %2594 = vmatprep.subr.bf16.mxu0 0
        %2595 = vmatpush1.bf16.msra.mxu0 0
        %2596 = vmatprep.subr.bf16.mxu0 0
        %2597 = vmatpush1.bf16.msra.mxu0 0
        %2598 = vmatprep.subr.bf16.mxu0 0
        %2599 = vmatpush1.bf16.msra.mxu0 0
        %2600 = vmatprep.subr.bf16.mxu0 0
        %2601 = vmatpush1.bf16.msra.mxu0 0
        %2602 = vmatprep.subr.bf16.mxu0 0
        %2603 = vmatpush1.bf16.msra.mxu0 0
        %2604 = vmatprep.subr.bf16.mxu0 0
        %2605 = vmatpush1.bf16.msra.mxu0 0
        %2606 = vmatprep.subr.bf16.mxu0 0
        %2607 = vmatpush1.bf16.msra.mxu0 0
        %2608 = vmatprep.mubr.bf16.mxu0 0
        %2609 = vmatmul.mubr.bf16.gmra.mrb[0].mxu0 %v2571
        %v2610 = vpop.f32.mrb[0].mxu0
        %v2611 = vadd.f32 0.0, %v2610
        %v2612 = vpop.f32.mrb[0].mxu0
        %v2613 = vpop.f32.mrb[0].mxu0
        %v2614 = vadd.f32 0.0, %v2613
        %v2615 = vpop.f32.mrb[0].mxu0
        %2616 = vdwg.mxu0
        %v2617 = vadd.f32 %v2333, %v2611
        %v2618 = vadd.f32 %v2336, %v2614
        %2619 = vrot.lane.b32.xlu0 %v1769, 104
        %v2620 = vpop.permute.xlu0 %2619
        %2621 = vrot.lane.b32.xlu0 %v1769, 72
        %v2622 = vpop.permute.xlu0 %2621
        %v2624 = vsel %vm1786, %v2620, 0
        %v2627 = vsel %vm1786, %v2622, 0
        %2629 = vmatprep.subr.bf16.mxu0 0
        %2630 = vmatpush1.bf16.xpose.msra.mxu0 %v2627
        %2631 = vmatprep.subr.bf16.mxu0 0
        %2632 = vmatpush1.bf16.xpose.msra.mxu0 0
        %2633 = vmatprep.subr.bf16.mxu0 0
        %2634 = vmatpush1.bf16.xpose.msra.mxu0 0
        %2635 = vmatprep.subr.bf16.mxu0 0
        %2636 = vmatpush1.bf16.xpose.msra.mxu0 0
        %2637 = vmatprep.subr.bf16.mxu0 0
        %2638 = vmatpush1.bf16.xpose.msra.mxu0 0
        %2639 = vmatprep.subr.bf16.mxu0 0
        %2640 = vmatpush1.bf16.xpose.msra.mxu0 0
        %2641 = vmatprep.subr.bf16.mxu0 0
        %2642 = vmatpush1.bf16.xpose.msra.mxu0 0
        %2643 = vmatprep.subr.bf16.mxu0 0
        %2644 = vmatpush1.bf16.xpose.msra.mxu0 0
        %2645 = vmatprep.subr.bf16.mxu0 0
        %2646 = vmatpush1.bf16.xpose.msra.mxu0 0
        %2647 = vmatprep.subr.bf16.mxu0 0
        %2648 = vmatpush1.bf16.xpose.msra.mxu0 0
        %2649 = vmatprep.subr.bf16.mxu0 0
        %2650 = vmatpush1.bf16.xpose.msra.mxu0 0
        %2651 = vmatprep.subr.bf16.mxu0 0
        %2652 = vmatpush1.bf16.xpose.msra.mxu0 0
        %2653 = vmatprep.subr.bf16.mxu0 0
        %2654 = vmatpush1.bf16.xpose.msra.mxu0 0
        %2655 = vmatprep.subr.bf16.mxu0 0
        %2656 = vmatpush1.bf16.xpose.msra.mxu0 0
        %2657 = vmatprep.subr.bf16.mxu0 0
        %2658 = vmatpush1.bf16.xpose.msra.mxu0 0
        %2659 = vmatprep.subr.bf16.mxu0 0
        %2660 = vmatpush1.bf16.xpose.msra.mxu0 0
        %2661 = vmatprep.mubr.bf16.mxu0 0
        %2662 = vmatmul.mubr.bf16.gmra.mrb[0].mxu0 %v2624
        %v2663 = vpop.f32.mrb[0].mxu0
        %v2664 = vadd.f32 0.0, %v2663
        %v2665 = vpop.f32.mrb[0].mxu0
        %v2666 = vpop.f32.mrb[0].mxu0
        %v2667 = vpop.f32.mrb[0].mxu0
        %2668 = vdwg.mxu0
        %2669 = vrot.lane.b32.xlu0 %v1770, 104
        %v2670 = vpop.permute.xlu0 %2669
        %2671 = vrot.lane.b32.xlu0 %v1770, 72
        %v2672 = vpop.permute.xlu0 %2671
        %v2674 = vsel %vm1786, %v2670, 0
        %v2677 = vsel %vm1786, %v2672, 0
        %2679 = vmatprep.subr.bf16.mxu0 0
        %2680 = vmatpush1.bf16.xpose.msra.mxu0 %v2677
        %2681 = vmatprep.subr.bf16.mxu0 0
        %2682 = vmatpush1.bf16.xpose.msra.mxu0 0
        %2683 = vmatprep.subr.bf16.mxu0 0
        %2684 = vmatpush1.bf16.xpose.msra.mxu0 0
        %2685 = vmatprep.subr.bf16.mxu0 0
        %2686 = vmatpush1.bf16.xpose.msra.mxu0 0
        %2687 = vmatprep.subr.bf16.mxu0 0
        %2688 = vmatpush1.bf16.xpose.msra.mxu0 0
        %2689 = vmatprep.subr.bf16.mxu0 0
        %2690 = vmatpush1.bf16.xpose.msra.mxu0 0
        %2691 = vmatprep.subr.bf16.mxu0 0
        %2692 = vmatpush1.bf16.xpose.msra.mxu0 0
        %2693 = vmatprep.subr.bf16.mxu0 0
        %2694 = vmatpush1.bf16.xpose.msra.mxu0 0
        %2695 = vmatprep.subr.bf16.mxu0 0
        %2696 = vmatpush1.bf16.xpose.msra.mxu0 0
        %2697 = vmatprep.subr.bf16.mxu0 0
        %2698 = vmatpush1.bf16.xpose.msra.mxu0 0
        %2699 = vmatprep.subr.bf16.mxu0 0
        %2700 = vmatpush1.bf16.xpose.msra.mxu0 0
        %2701 = vmatprep.subr.bf16.mxu0 0
        %2702 = vmatpush1.bf16.xpose.msra.mxu0 0
        %2703 = vmatprep.subr.bf16.mxu0 0
        %2704 = vmatpush1.bf16.xpose.msra.mxu0 0
        %2705 = vmatprep.subr.bf16.mxu0 0
        %2706 = vmatpush1.bf16.xpose.msra.mxu0 0
        %2707 = vmatprep.subr.bf16.mxu0 0
        %2708 = vmatpush1.bf16.xpose.msra.mxu0 0
        %2709 = vmatprep.subr.bf16.mxu0 0
        %2710 = vmatpush1.bf16.xpose.msra.mxu0 0
        %2711 = vmatprep.mubr.bf16.mxu0 0
        %2712 = vmatmul.mubr.bf16.gmra.mrb[0].mxu0 %v2674
        %v2713 = vpop.f32.mrb[0].mxu0
        %v2714 = vadd.f32 0.0, %v2713
        %v2715 = vpop.f32.mrb[0].mxu0
        %v2716 = vpop.f32.mrb[0].mxu0
        %v2717 = vpop.f32.mrb[0].mxu0
        %2718 = vdwg.mxu0
        %v2719 = vmul.f32 %v2664, 0.35355338
        %v2720 = vmul.f32 %v2714, 0.35355338
        %vm2721 = vcmp.le.s32.totalorder %v1778, 8
        %v2722 = vand.u32 %v1778, 15
        %vm2723 = vcmp.eq.s32.totalorder %v2722, 0
        %vm2724 = vmor %vm2721, %vm2723
        %v2725 = vsel %vm2724, 1, 0
        %vm2726 = vcmp.eq.s32.totalorder %v2725, 1
        %v2727 = vsel %vm2726, %v2719, -1e+30
        %v2728 = vsel %vm2726, %v2720, -1e+30
        %v2729 = vsel %vm1786, %v2727, -inf
        %2730 = vmax.xlane.f32.xlu0 %v2729
        %v2731 = vpop.xlane.xlu0 %2730
        %v2732 = vsel %vm1786, %v2728, -inf
        %2733 = vmax.xlane.f32.xlu0 %v2732
        %v2734 = vpop.xlane.xlu0 %2733
        %v2735 = vsub.f32 %v2727, %v2731
        %v2736 = vsub.f32 %v2728, %v2734
        %v2737 = vmul.f32 %v2735, 1.442695
        %v2738 = vpow.pop %v2737
        %v2739 = vmul.f32 %v2736, 1.442695
        %v2740 = vpow.pop %v2739
        %v2741 = vsel %vm1786, %v2738, 0.0
        %2742 = vadd.xlane.f32.xlu0 %v2741
        %v2743 = vpop.xlane.xlu0 %2742
        %v2744 = vsel %vm1786, %v2740, 0.0
        %2745 = vadd.xlane.f32.xlu0 %v2744
        %v2746 = vpop.xlane.xlu0 %2745
        %v2747 = vrcp.pop %v2743
        %v2748 = vmul.f32 %v2738, %v2747
        %v2749 = vrcp.pop %v2746
        %v2750 = vmul.f32 %v2740, %v2749
        %v2751 = vpack.c.bf16 %v2748, %v2748
        %v2752 = vpack.c.bf16 %v2750, %v2750
        %2753 = vrot.lane.b32.xlu0 %v1769, 40
        %v2754 = vpop.permute.xlu0 %2753
        %v2756 = vsel %vm1786, %v2751, 0
        %v2759 = vsel %vm1921, %v2754, 0
        %2761 = vmatprep.subr.bf16.mxu0 0
        %2762 = vmatpush1.bf16.msra.mxu0 %v2759
        %2763 = vmatprep.subr.bf16.mxu0 0
        %2764 = vmatpush1.bf16.msra.mxu0 0
        %2765 = vmatprep.subr.bf16.mxu0 0
        %2766 = vmatpush1.bf16.msra.mxu0 0
        %2767 = vmatprep.subr.bf16.mxu0 0
        %2768 = vmatpush1.bf16.msra.mxu0 0
        %2769 = vmatprep.subr.bf16.mxu0 0
        %2770 = vmatpush1.bf16.msra.mxu0 0
        %2771 = vmatprep.subr.bf16.mxu0 0
        %2772 = vmatpush1.bf16.msra.mxu0 0
        %2773 = vmatprep.subr.bf16.mxu0 0
        %2774 = vmatpush1.bf16.msra.mxu0 0
        %2775 = vmatprep.subr.bf16.mxu0 0
        %2776 = vmatpush1.bf16.msra.mxu0 0
        %2777 = vmatprep.subr.bf16.mxu0 0
        %2778 = vmatpush1.bf16.msra.mxu0 0
        %2779 = vmatprep.subr.bf16.mxu0 0
        %2780 = vmatpush1.bf16.msra.mxu0 0
        %2781 = vmatprep.subr.bf16.mxu0 0
        %2782 = vmatpush1.bf16.msra.mxu0 0
        %2783 = vmatprep.subr.bf16.mxu0 0
        %2784 = vmatpush1.bf16.msra.mxu0 0
        %2785 = vmatprep.subr.bf16.mxu0 0
        %2786 = vmatpush1.bf16.msra.mxu0 0
        %2787 = vmatprep.subr.bf16.mxu0 0
        %2788 = vmatpush1.bf16.msra.mxu0 0
        %2789 = vmatprep.subr.bf16.mxu0 0
        %2790 = vmatpush1.bf16.msra.mxu0 0
        %2791 = vmatprep.subr.bf16.mxu0 0
        %2792 = vmatpush1.bf16.msra.mxu0 0
        %2793 = vmatprep.mubr.bf16.mxu0 0
        %2794 = vmatmul.mubr.bf16.gmra.mrb[0].mxu0 %v2756
        %v2795 = vpop.f32.mrb[0].mxu0
        %v2796 = vadd.f32 0.0, %v2795
        %v2797 = vpop.f32.mrb[0].mxu0
        %v2798 = vpop.f32.mrb[0].mxu0
        %v2799 = vpop.f32.mrb[0].mxu0
        %2800 = vdwg.mxu0
        %2801 = vrot.lane.b32.xlu0 %v1770, 40
        %v2802 = vpop.permute.xlu0 %2801
        %v2804 = vsel %vm1786, %v2752, 0
        %v2807 = vsel %vm1921, %v2802, 0
        %2809 = vmatprep.subr.bf16.mxu0 0
        %2810 = vmatpush1.bf16.msra.mxu0 %v2807
        %2811 = vmatprep.subr.bf16.mxu0 0
        %2812 = vmatpush1.bf16.msra.mxu0 0
        %2813 = vmatprep.subr.bf16.mxu0 0
        %2814 = vmatpush1.bf16.msra.mxu0 0
        %2815 = vmatprep.subr.bf16.mxu0 0
        %2816 = vmatpush1.bf16.msra.mxu0 0
        %2817 = vmatprep.subr.bf16.mxu0 0
        %2818 = vmatpush1.bf16.msra.mxu0 0
        %2819 = vmatprep.subr.bf16.mxu0 0
        %2820 = vmatpush1.bf16.msra.mxu0 0
        %2821 = vmatprep.subr.bf16.mxu0 0
        %2822 = vmatpush1.bf16.msra.mxu0 0
        %2823 = vmatprep.subr.bf16.mxu0 0
        %2824 = vmatpush1.bf16.msra.mxu0 0
        %2825 = vmatprep.subr.bf16.mxu0 0
        %2826 = vmatpush1.bf16.msra.mxu0 0
        %2827 = vmatprep.subr.bf16.mxu0 0
        %2828 = vmatpush1.bf16.msra.mxu0 0
        %2829 = vmatprep.subr.bf16.mxu0 0
        %2830 = vmatpush1.bf16.msra.mxu0 0
        %2831 = vmatprep.subr.bf16.mxu0 0
        %2832 = vmatpush1.bf16.msra.mxu0 0
        %2833 = vmatprep.subr.bf16.mxu0 0
        %2834 = vmatpush1.bf16.msra.mxu0 0
        %2835 = vmatprep.subr.bf16.mxu0 0
        %2836 = vmatpush1.bf16.msra.mxu0 0
        %2837 = vmatprep.subr.bf16.mxu0 0
        %2838 = vmatpush1.bf16.msra.mxu0 0
        %2839 = vmatprep.subr.bf16.mxu0 0
        %2840 = vmatpush1.bf16.msra.mxu0 0
        %2841 = vmatprep.mubr.bf16.mxu0 0
        %2842 = vmatmul.mubr.bf16.gmra.mrb[0].mxu0 %v2804
        %v2843 = vpop.f32.mrb[0].mxu0
        %v2844 = vadd.f32 0.0, %v2843
        %v2845 = vpop.f32.mrb[0].mxu0
        %v2846 = vpop.f32.mrb[0].mxu0
        %v2847 = vpop.f32.mrb[0].mxu0
        %2848 = vdwg.mxu0
        %v2849 = vpack.c.bf16 %v2844, %v2796
        %v2851 = vsel %vm1786, %v2849, 0
        %v2854 = vsel %vm1921, %v1782, 0
        %2856 = vmatprep.subr.bf16.mxu0 0
        %2857 = vmatpush1.bf16.msra.mxu0 %v2854
        %2858 = vmatprep.subr.bf16.mxu0 0
        %2859 = vmatpush1.bf16.msra.mxu0 0
        %2860 = vmatprep.subr.bf16.mxu0 0
        %2861 = vmatpush1.bf16.msra.mxu0 0
        %2862 = vmatprep.subr.bf16.mxu0 0
        %2863 = vmatpush1.bf16.msra.mxu0 0
        %2864 = vmatprep.subr.bf16.mxu0 0
        %2865 = vmatpush1.bf16.msra.mxu0 0
        %2866 = vmatprep.subr.bf16.mxu0 0
        %2867 = vmatpush1.bf16.msra.mxu0 0
        %2868 = vmatprep.subr.bf16.mxu0 0
        %2869 = vmatpush1.bf16.msra.mxu0 0
        %2870 = vmatprep.subr.bf16.mxu0 0
        %2871 = vmatpush1.bf16.msra.mxu0 0
        %2872 = vmatprep.subr.bf16.mxu0 0
        %2873 = vmatpush1.bf16.msra.mxu0 0
        %2874 = vmatprep.subr.bf16.mxu0 0
        %2875 = vmatpush1.bf16.msra.mxu0 0
        %2876 = vmatprep.subr.bf16.mxu0 0
        %2877 = vmatpush1.bf16.msra.mxu0 0
        %2878 = vmatprep.subr.bf16.mxu0 0
        %2879 = vmatpush1.bf16.msra.mxu0 0
        %2880 = vmatprep.subr.bf16.mxu0 0
        %2881 = vmatpush1.bf16.msra.mxu0 0
        %2882 = vmatprep.subr.bf16.mxu0 0
        %2883 = vmatpush1.bf16.msra.mxu0 0
        %2884 = vmatprep.subr.bf16.mxu0 0
        %2885 = vmatpush1.bf16.msra.mxu0 0
        %2886 = vmatprep.subr.bf16.mxu0 0
        %2887 = vmatpush1.bf16.msra.mxu0 0
        %2888 = vmatprep.mubr.bf16.mxu0 0
        %2889 = vmatmul.mubr.bf16.gmra.mrb[0].mxu0 %v2851
        %v2890 = vpop.f32.mrb[0].mxu0
        %v2891 = vadd.f32 0.0, %v2890
        %v2892 = vpop.f32.mrb[0].mxu0
        %v2893 = vpop.f32.mrb[0].mxu0
        %v2894 = vadd.f32 0.0, %v2893
        %v2895 = vpop.f32.mrb[0].mxu0
        %2896 = vdwg.mxu0
        %v2897 = vadd.f32 %v2617, %v2891
        %v2898 = vadd.f32 %v2618, %v2894
        %v2899 = vadd.f32 %v1653, %v2897
        %v2900 = vadd.f32 %v1654, %v2898
        %v2901 = vld [vmem:[%s1401] sm:$0x1]
        %v2903 = vlaneseq
        %v2904 = vshrl.u32 %v2903, 7
        %v2905 = vsub.s32 0, %v2904
        %v2906 = vrot.slane %v2901, %v2905
        %v2908 = vadd.f32 %v2899, %v2906
        %v2909 = vadd.f32 %v2900, %v2906
        %v2910 = vld [vmem:[%s1409] sm:$0x1]
        %v2911 = vld [vmem:[%s1417] sm:$0x1]
        %v2912 = vsel %vm1657, %v2908, 0.0
        %2913 = vadd.xlane.f32.xlu0 %v2912
        %v2914 = vpop.xlane.xlu0 %2913
        %v2915 = vsel %vm1657, %v2909, 0.0
        %2916 = vadd.xlane.f32.xlu0 %v2915
        %v2917 = vpop.xlane.xlu0 %2916
        %v2918 = vmul.f32 %v2914, %v1664
        %v2919 = vmul.f32 %v2917, %v1664
        %v2920 = vsub.f32 %v2908, %v2918
        %v2921 = vsub.f32 %v2909, %v2919
        %v2922 = vmul.f32 %v2920, %v2920
        %v2923 = vmul.f32 %v2921, %v2921
        %v2924 = vsel %vm1657, %v2922, 0.0
        %2925 = vadd.xlane.f32.xlu0 %v2924
        %v2926 = vpop.xlane.xlu0 %2925
        %v2927 = vsel %vm1657, %v2923, 0.0
        %2928 = vadd.xlane.f32.xlu0 %v2927
        %v2929 = vpop.xlane.xlu0 %2928
        %v2930 = vmul.f32 %v2926, %v1664
        %v2931 = vmul.f32 %v2929, %v1664
        %v2932 = vadd.f32 %v2930, 1e-05
        %v2933 = vadd.f32 %v2931, 1e-05
        %v2934 = vrsqrt.pop %v2932
        %v2935 = vrsqrt.pop %v2933
        %v2936 = vmul.f32 %v2920, %v2934
        %v2937 = vmul.f32 %v2921, %v2935
        %v2939 = vlaneseq
        %v2940 = vshrl.u32 %v2939, 7
        %v2941 = vsub.s32 0, %v2940
        %v2942 = vrot.slane %v2910, %v2941
        %v2944 = vmul.f32 %v2936, %v2942
        %v2945 = vmul.f32 %v2937, %v2942
        %v2947 = vlaneseq
        %v2948 = vshrl.u32 %v2947, 7
        %v2949 = vsub.s32 0, %v2948
        %v2950 = vrot.slane %v2911, %v2949
        %v2952 = vadd.f32 %v2944, %v2950
        %v2953 = vadd.f32 %v2945, %v2950
        %v2954 = vpack.c.bf16 %v2953, %v2952
        %v2955 = vld [vmem:[%s1426] sm:$0xf]
        %v2956 = vld [vmem:[%s1426 + $0x4] sm:$0xf]
        %v2957 = vld [vmem:[%s1426 + $0x8] sm:$0xf]
        %v2958 = vld [vmem:[%s1426 + $0xc] sm:$0xf]
        %v2959 = vld [vmem:[%s1434] sm:$0x1]
        %v2961 = vlaneseq
        %v2962 = vshrl.u32 %v2961, 7
        %v2963 = vsub.s32 0, %v2962
        %v2964 = vrot.slane %v2959, %v2963
        %v2970 = vunpack.c.l.b16 %v2955
        %v2971 = vunpack.c.l.b16 %v2956
        %v2972 = vunpack.c.l.b16 %v2957
        %v2973 = vunpack.c.l.b16 %v2958
        %v2974 = vpack.c.b16 %v2971, %v2970
        %v2975 = vpack.c.b16 %v2973, %v2972
        %v2979 = vsel %vm1657, %v2954, 0
        %2981 = vmatprep.subr.bf16.mxu0 0
        %2982 = vmatpush1.bf16.msra.mxu0 %v2974
        %2983 = vmatprep.subr.bf16.mxu0 0
        %2984 = vmatpush1.bf16.msra.mxu0 %v2975
        %2985 = vmatprep.subr.bf16.mxu0 0
        %2986 = vmatpush1.bf16.msra.mxu0 0
        %2987 = vmatprep.subr.bf16.mxu0 0
        %2988 = vmatpush1.bf16.msra.mxu0 0
        %2989 = vmatprep.subr.bf16.mxu0 0
        %2990 = vmatpush1.bf16.msra.mxu0 0
        %2991 = vmatprep.subr.bf16.mxu0 0
        %2992 = vmatpush1.bf16.msra.mxu0 0
        %2993 = vmatprep.subr.bf16.mxu0 0
        %2994 = vmatpush1.bf16.msra.mxu0 0
        %2995 = vmatprep.subr.bf16.mxu0 0
        %2996 = vmatpush1.bf16.msra.mxu0 0
        %2997 = vmatprep.subr.bf16.mxu0 0
        %2998 = vmatpush1.bf16.msra.mxu0 0
        %2999 = vmatprep.subr.bf16.mxu0 0
        %3000 = vmatpush1.bf16.msra.mxu0 0
        %3001 = vmatprep.subr.bf16.mxu0 0
        %3002 = vmatpush1.bf16.msra.mxu0 0
        %3003 = vmatprep.subr.bf16.mxu0 0
        %3004 = vmatpush1.bf16.msra.mxu0 0
        %3005 = vmatprep.subr.bf16.mxu0 0
        %3006 = vmatpush1.bf16.msra.mxu0 0
        %3007 = vmatprep.subr.bf16.mxu0 0
        %3008 = vmatpush1.bf16.msra.mxu0 0
        %3009 = vmatprep.subr.bf16.mxu0 0
        %3010 = vmatpush1.bf16.msra.mxu0 0
        %3011 = vmatprep.subr.bf16.mxu0 0
        %3012 = vmatpush1.bf16.msra.mxu0 0
        %3013 = vmatprep.mubr.bf16.mxu0 0
        %3014 = vmatmul.mubr.bf16.gmra.mrb[0].mxu0 %v2979
        %v3015 = vpop.f32.mrb[0].mxu0
        %v3016 = vadd.f32 %v2964, %v3015
        %v3017 = vpop.f32.mrb[0].mxu0
        %v3018 = vpop.f32.mrb[0].mxu0
        %v3019 = vadd.f32 %v2964, %v3018
        %v3020 = vpop.f32.mrb[0].mxu0
        %3021 = vdwg.mxu0
        %v3022 = vmul.f32 %v3016, 0.5
        %v3023 = vmul.f32 %v3019, 0.5
        %v3024 = vmul.f32 %v3016, 0.044715
        %v3025 = vmul.f32 %v3019, 0.044715
        %v3026 = vmul.f32 %v3024, %v3016
        %v3027 = vmul.f32 %v3025, %v3019
        %v3028 = vmul.f32 %v3026, %v3016
        %v3029 = vmul.f32 %v3027, %v3019
        %v3030 = vadd.f32 %v3016, %v3028
        %v3031 = vadd.f32 %v3019, %v3029
        %v3032 = vmul.f32 %v3030, 0.7978846
        %v3033 = vmul.f32 %v3031, 0.7978846
        %v3034 = vtanh.pop %v3032
        %v3035 = vtanh.pop %v3033
        %v3036 = vadd.f32 %v3034, 1.0
        %v3037 = vadd.f32 %v3035, 1.0
        %v3038 = vmul.f32 %v3022, %v3036
        %v3039 = vmul.f32 %v3023, %v3037
        %v3040 = vpack.c.bf16 %v3039, %v3038
        %v3041 = vld [vmem:[%s1443] sm:$0xf]
        %v3042 = vld [vmem:[%s1443 + $0x4] sm:$0xf]
        %v3043 = vld [vmem:[%s1443 + $0x8] sm:$0xf]
        %v3044 = vld [vmem:[%s1443 + $0xc] sm:$0xf]
        %v3045 = vld [vmem:[%s1443 + $0x10] sm:$0xf]
        %v3046 = vld [vmem:[%s1443 + $0x14] sm:$0xf]
        %v3047 = vld [vmem:[%s1443 + $0x18] sm:$0xf]
        %v3048 = vld [vmem:[%s1443 + $0x1c] sm:$0xf]
        %v3049 = vld [vmem:[%s1443 + $0x20] sm:$0xf]
        %v3050 = vld [vmem:[%s1443 + $0x24] sm:$0xf]
        %v3051 = vld [vmem:[%s1443 + $0x28] sm:$0xf]
        %v3052 = vld [vmem:[%s1443 + $0x2c] sm:$0xf]
        %v3053 = vld [vmem:[%s1443 + $0x30] sm:$0xf]
        %v3054 = vld [vmem:[%s1443 + $0x34] sm:$0xf]
        %v3055 = vld [vmem:[%s1443 + $0x38] sm:$0xf]
        %v3056 = vld [vmem:[%s1443 + $0x3c] sm:$0xf]
        %v3057 = vld [vmem:[%s1451] sm:$0x1]
        %v3059 = vlaneseq
        %v3060 = vshrl.u32 %v3059, 7
        %v3061 = vsub.s32 0, %v3060
        %v3062 = vrot.slane %v3057, %v3061
        %v3080 = vunpack.c.l.b16 %v3041
        %v3081 = vunpack.c.l.b16 %v3042
        %v3082 = vunpack.c.l.b16 %v3043
        %v3083 = vunpack.c.l.b16 %v3044
        %v3084 = vunpack.c.l.b16 %v3045
        %v3085 = vunpack.c.l.b16 %v3046
        %v3086 = vunpack.c.l.b16 %v3047
        %v3087 = vunpack.c.l.b16 %v3048
        %v3088 = vunpack.c.l.b16 %v3049
        %v3089 = vunpack.c.l.b16 %v3050
        %v3090 = vunpack.c.l.b16 %v3051
        %v3091 = vunpack.c.l.b16 %v3052
        %v3092 = vunpack.c.l.b16 %v3053
        %v3093 = vunpack.c.l.b16 %v3054
        %v3094 = vunpack.c.l.b16 %v3055
        %v3095 = vunpack.c.l.b16 %v3056
        %v3096 = vpack.c.b16 %v3081, %v3080
        %v3097 = vpack.c.b16 %v3083, %v3082
        %v3098 = vpack.c.b16 %v3085, %v3084
        %v3099 = vpack.c.b16 %v3087, %v3086
        %v3100 = vpack.c.b16 %v3089, %v3088
        %v3101 = vpack.c.b16 %v3091, %v3090
        %v3102 = vpack.c.b16 %v3093, %v3092
        %v3103 = vpack.c.b16 %v3095, %v3094
        %3112 = vmatprep.subr.bf16.mxu0 0
        %3113 = vmatpush1.bf16.msra.mxu0 %v3096
        %3114 = vmatprep.subr.bf16.mxu0 0
        %3115 = vmatpush1.bf16.msra.mxu0 %v3097
        %3116 = vmatprep.subr.bf16.mxu0 0
        %3117 = vmatpush1.bf16.msra.mxu0 %v3098
        %3118 = vmatprep.subr.bf16.mxu0 0
        %3119 = vmatpush1.bf16.msra.mxu0 %v3099
        %3120 = vmatprep.subr.bf16.mxu0 0
        %3121 = vmatpush1.bf16.msra.mxu0 %v3100
        %3122 = vmatprep.subr.bf16.mxu0 0
        %3123 = vmatpush1.bf16.msra.mxu0 %v3101
        %3124 = vmatprep.subr.bf16.mxu0 0
        %3125 = vmatpush1.bf16.msra.mxu0 %v3102
        %3126 = vmatprep.subr.bf16.mxu0 0
        %3127 = vmatpush1.bf16.msra.mxu0 %v3103
        %3128 = vmatprep.subr.bf16.mxu0 0
        %3129 = vmatpush1.bf16.msra.mxu0 0
        %3130 = vmatprep.subr.bf16.mxu0 0
        %3131 = vmatpush1.bf16.msra.mxu0 0
        %3132 = vmatprep.subr.bf16.mxu0 0
        %3133 = vmatpush1.bf16.msra.mxu0 0
        %3134 = vmatprep.subr.bf16.mxu0 0
        %3135 = vmatpush1.bf16.msra.mxu0 0
        %3136 = vmatprep.subr.bf16.mxu0 0
        %3137 = vmatpush1.bf16.msra.mxu0 0
        %3138 = vmatprep.subr.bf16.mxu0 0
        %3139 = vmatpush1.bf16.msra.mxu0 0
        %3140 = vmatprep.subr.bf16.mxu0 0
        %3141 = vmatpush1.bf16.msra.mxu0 0
        %3142 = vmatprep.subr.bf16.mxu0 0
        %3143 = vmatpush1.bf16.msra.mxu0 0
        %3144 = vmatprep.mubr.bf16.mxu0 0
        %3145 = vmatmul.mubr.bf16.gmra.mrb[0].mxu0 %v3040
        %v3146 = vpop.f32.mrb[0].mxu0
        %v3147 = vadd.f32 %v3062, %v3146
        %v3148 = vpop.f32.mrb[0].mxu0
        %v3149 = vpop.f32.mrb[0].mxu0
        %v3150 = vadd.f32 %v3062, %v3149
        %v3151 = vpop.f32.mrb[0].mxu0
        %3152 = vdwg.mxu0
        %v3153 = vadd.f32 %v2908, %v3147
        %v3154 = vadd.f32 %v2909, %v3150
        %3155 = vst.msk [vmem:[#allocation2] sm:$0xff] %vm1657, %v3153
        %3156 = vst.msk [vmem:[#allocation2 + $0x8] sm:$0xff] %vm1657, %v3154
        %p3157 = scmp.eq.s32.totalorder %s114, 1
        // Predicated region
        $region269: #{forward.3} parent=143 // pred_check
          %p3158 = pneg %p3157
        $region270: #{forward.3} parent=143 // pred_check_branch
          %3160 = sbr.rel (%p3158) target = $region272
        $region271: #{forward.3} parent=143 // pred_region
          %v3161 = vld [vmem:[#allocation25] sm:$0x1]
          %v3162 = vld [vmem:[#allocation27] sm:$0x1]
          %v3165 = vrot.slane %v3154, 7
          %vm3168 = vcmask 261127
          %v3169 = vsel %vm3168, %v3153, 0.0
          %3170 = vadd.xlane.f32.xlu0 %v3169
          %v3171 = vpop.xlane.xlu0 %3170
          %vm3172 = vcmask 253952
          %v3173 = vsel %vm3172, %v3165, 0.0
          %3174 = vadd.xlane.f32.xlu0 %v3173
          %v3175 = vpop.xlane.xlu0 %3174
          %v3176 = vmul.f32 %v3171, %v1664
          %v3177 = vmul.f32 %v3175, %v1664
          %v3180 = vrot.slane %v3177, 1
          %v3183 = vsub.f32 %v3153, %v3176
          %v3184 = vsub.f32 %v3154, %v3180
          %v3185 = vmul.f32 %v3183, %v3183
          %v3186 = vmul.f32 %v3184, %v3184
          %v3189 = vrot.slane %v3186, 7
          %v3192 = vsel %vm3168, %v3185, 0.0
          %3193 = vadd.xlane.f32.xlu0 %v3192
          %v3194 = vpop.xlane.xlu0 %3193
          %v3195 = vsel %vm3172, %v3189, 0.0
          %3196 = vadd.xlane.f32.xlu0 %v3195
          %v3197 = vpop.xlane.xlu0 %3196
          %v3198 = vmul.f32 %v3194, %v1664
          %v3199 = vmul.f32 %v3197, %v1664
          %v3200 = vadd.f32 %v3198, 1e-05
          %v3201 = vadd.f32 %v3199, 1e-05
          %v3202 = vrsqrt.pop %v3200
          %v3203 = vrsqrt.pop %v3201
          %v3206 = vrot.slane %v3203, 1
          %v3209 = vmul.f32 %v3183, %v3202
          %v3210 = vmul.f32 %v3184, %v3206
          %v3212 = vlaneseq
          %v3213 = vshrl.u32 %v3212, 7
          %v3214 = vsub.s32 0, %v3213
          %v3215 = vrot.slane %v3161, %v3214
          %v3217 = vmul.f32 %v3209, %v3215
          %v3218 = vmul.f32 %v3210, %v3215
          %v3220 = vlaneseq
          %v3221 = vshrl.u32 %v3220, 7
          %v3222 = vsub.s32 0, %v3221
          %v3223 = vrot.slane %v3162, %v3222
          %v3225 = vadd.f32 %v3217, %v3223
          %v3226 = vadd.f32 %v3218, %v3223
          %v3227 = vpack.c.bf16 %v3225, %v3225
          %v3228 = vpack.c.bf16 %v3226, %v3226
          %v3229 = vld [vmem:[#allocation28] sm:$0xf]
          %v3230 = vld [vmem:[#allocation28 + $0x4] sm:$0xf]
          %v3231 = vld [vmem:[#allocation28 + $0x8] sm:$0xf]
          %v3232 = vld [vmem:[#allocation28 + $0xc] sm:$0xf]
          %v3233 = vld [vmem:[#allocation30] sm:$0x1]
          %v3235 = vlaneseq
          %v3236 = vshrl.u32 %v3235, 7
          %v3237 = vsub.s32 0, %v3236
          %v3238 = vrot.slane %v3233, %v3237
          %v3242 = vunpack.c.l.b16 %v3227
          %v3243 = vunpack.c.l.b16 %v3228
          %v3244 = vrot.slane %v3242, 7
          %v3245 = vrot.slane %v3243, 6
          %vm3246 = vcmask 1041409
          %v3247 = vsel %vm3246, %v3245, %v3244
          %v3248 = vpack.c.b16 %v3247, %v3247
          %v3253 = vunpack.c.l.b16 %v3229
          %v3254 = vunpack.c.l.b16 %v3230
          %v3255 = vunpack.c.l.b16 %v3231
          %v3256 = vunpack.c.l.b16 %v3232
          %v3257 = vpack.c.b16 %v3254, %v3253
          %v3258 = vpack.c.b16 %v3256, %v3255
          %v3262 = vsel %vm1657, %v3248, 0
          %3264 = vmatprep.subr.bf16.mxu0 0
          %3265 = vmatpush1.bf16.msra.mxu0 %v3257
          %3266 = vmatprep.subr.bf16.mxu0 0
          %3267 = vmatpush1.bf16.msra.mxu0 %v3258
          %3268 = vmatprep.subr.bf16.mxu0 0
          %3269 = vmatpush1.bf16.msra.mxu0 0
          %3270 = vmatprep.subr.bf16.mxu0 0
          %3271 = vmatpush1.bf16.msra.mxu0 0
          %3272 = vmatprep.subr.bf16.mxu0 0
          %3273 = vmatpush1.bf16.msra.mxu0 0
          %3274 = vmatprep.subr.bf16.mxu0 0
          %3275 = vmatpush1.bf16.msra.mxu0 0
          %3276 = vmatprep.subr.bf16.mxu0 0
          %3277 = vmatpush1.bf16.msra.mxu0 0
          %3278 = vmatprep.subr.bf16.mxu0 0
          %3279 = vmatpush1.bf16.msra.mxu0 0
          %3280 = vmatprep.subr.bf16.mxu0 0
          %3281 = vmatpush1.bf16.msra.mxu0 0
          %3282 = vmatprep.subr.bf16.mxu0 0
          %3283 = vmatpush1.bf16.msra.mxu0 0
          %3284 = vmatprep.subr.bf16.mxu0 0
          %3285 = vmatpush1.bf16.msra.mxu0 0
          %3286 = vmatprep.subr.bf16.mxu0 0
          %3287 = vmatpush1.bf16.msra.mxu0 0
          %3288 = vmatprep.subr.bf16.mxu0 0
          %3289 = vmatpush1.bf16.msra.mxu0 0
          %3290 = vmatprep.subr.bf16.mxu0 0
          %3291 = vmatpush1.bf16.msra.mxu0 0
          %3292 = vmatprep.subr.bf16.mxu0 0
          %3293 = vmatpush1.bf16.msra.mxu0 0
          %3294 = vmatprep.subr.bf16.mxu0 0
          %3295 = vmatpush1.bf16.msra.mxu0 0
          %3296 = vmatprep.mubr.bf16.mxu0 0
          %3297 = vmatmul.mubr.bf16.gmra.mrb[0].mxu0 %v3262
          %v3298 = vpop.f32.mrb[0].mxu0
          %v3299 = vadd.f32 %v3238, %v3298
          %v3300 = vpop.f32.mrb[0].mxu0
          %v3301 = vpop.f32.mrb[0].mxu0
          %v3302 = vpop.f32.mrb[0].mxu0
          %3303 = vdwg.mxu0
          %v3304 = vmul.f32 %v3299, 0.5
          %v3305 = vmul.f32 %v3299, 0.044715
          %v3306 = vmul.f32 %v3305, %v3299
          %v3307 = vmul.f32 %v3306, %v3299
          %v3308 = vadd.f32 %v3299, %v3307
          %v3309 = vmul.f32 %v3308, 0.7978846
          %v3310 = vtanh.pop %v3309
          %v3311 = vadd.f32 %v3310, 1.0
          %v3312 = vmul.f32 %v3304, %v3311
          %v3313 = vpack.c.bf16 %v3312, %v3312
          %v3314 = vld [vmem:[#allocation31] sm:$0xff]
          %v3315 = vld [vmem:[#allocation31 + $0x8] sm:$0xff]
          %v3316 = vld [vmem:[#allocation31 + $0x10] sm:$0xff]
          %v3317 = vld [vmem:[#allocation31 + $0x18] sm:$0xff]
          %v3318 = vld [vmem:[#allocation31 + $0x20] sm:$0xff]
          %v3319 = vld [vmem:[#allocation31 + $0x28] sm:$0xff]
          %v3320 = vld [vmem:[#allocation31 + $0x30] sm:$0xff]
          %v3321 = vld [vmem:[#allocation31 + $0x38] sm:$0xff]
          %v3322 = vld [vmem:[#allocation31 + $0x40] sm:$0xff]
          %v3323 = vld [vmem:[#allocation31 + $0x48] sm:$0xff]
          %v3324 = vld [vmem:[#allocation31 + $0x50] sm:$0xff]
          %v3325 = vld [vmem:[#allocation31 + $0x58] sm:$0xff]
          %v3326 = vld [vmem:[#allocation31 + $0x60] sm:$0xff]
          %v3327 = vld [vmem:[#allocation31 + $0x68] sm:$0xff]
          %v3328 = vld [vmem:[#allocation31 + $0x70] sm:$0xff]
          %v3329 = vld [vmem:[#allocation31 + $0x78] sm:$0xff]
          %v3330 = vld [vmem:[#allocation33] sm:$0x3]
          %v3332 = vlaneseq
          %v3333 = vshrl.u32 %v3332, 7
          %v3334 = vsub.s32 0, %v3333
          %v3335 = vrot.slane %v3330, %v3334
          %v3336 = vlaneseq
          %v3337 = vshrl.u32 %v3336, 7
          %v3338 = vsub.s32 1, %v3337
          %v3339 = vrot.slane %v3330, %v3338
          %v3358 = vunpack.c.l.b16 %v3314
          %v3359 = vunpack.c.h.b16 %v3314
          %v3360 = vunpack.c.l.b16 %v3315
          %v3361 = vunpack.c.h.b16 %v3315
          %v3362 = vunpack.c.l.b16 %v3316
          %v3363 = vunpack.c.h.b16 %v3316
          %v3364 = vunpack.c.l.b16 %v3317
          %v3365 = vunpack.c.h.b16 %v3317
          %v3366 = vunpack.c.l.b16 %v3318
          %v3367 = vunpack.c.h.b16 %v3318
          %v3368 = vunpack.c.l.b16 %v3319
          %v3369 = vunpack.c.h.b16 %v3319
          %v3370 = vunpack.c.l.b16 %v3320
          %v3371 = vunpack.c.h.b16 %v3320
          %v3372 = vunpack.c.l.b16 %v3321
          %v3373 = vunpack.c.h.b16 %v3321
          %v3374 = vunpack.c.l.b16 %v3322
          %v3375 = vunpack.c.h.b16 %v3322
          %v3376 = vunpack.c.l.b16 %v3323
          %v3377 = vunpack.c.h.b16 %v3323
          %v3378 = vunpack.c.l.b16 %v3324
          %v3379 = vunpack.c.h.b16 %v3324
          %v3380 = vunpack.c.l.b16 %v3325
          %v3381 = vunpack.c.h.b16 %v3325
          %v3382 = vunpack.c.l.b16 %v3326
          %v3383 = vunpack.c.h.b16 %v3326
          %v3384 = vunpack.c.l.b16 %v3327
          %v3385 = vunpack.c.h.b16 %v3327
          %v3386 = vunpack.c.l.b16 %v3328
          %v3387 = vunpack.c.h.b16 %v3328
          %v3388 = vunpack.c.l.b16 %v3329
          %v3389 = vunpack.c.h.b16 %v3329
          %v3390 = vpack.c.b16 %v3360, %v3358
          %v3391 = vpack.c.b16 %v3361, %v3359
          %v3392 = vpack.c.b16 %v3364, %v3362
          %v3393 = vpack.c.b16 %v3365, %v3363
          %v3394 = vpack.c.b16 %v3368, %v3366
          %v3395 = vpack.c.b16 %v3369, %v3367
          %v3396 = vpack.c.b16 %v3372, %v3370
          %v3397 = vpack.c.b16 %v3373, %v3371
          %v3398 = vpack.c.b16 %v3376, %v3374
          %v3399 = vpack.c.b16 %v3377, %v3375
          %v3400 = vpack.c.b16 %v3380, %v3378
          %v3401 = vpack.c.b16 %v3381, %v3379
          %v3402 = vpack.c.b16 %v3384, %v3382
          %v3403 = vpack.c.b16 %v3385, %v3383
          %v3404 = vpack.c.b16 %v3388, %v3386
          %v3405 = vpack.c.b16 %v3389, %v3387
          %3422 = vmatprep.subr.bf16.mxu0 %v3391
          %3423 = vmatpush1.bf16.msra.mxu0 %v3390
          %3424 = vmatprep.subr.bf16.mxu0 %v3393
          %3425 = vmatpush1.bf16.msra.mxu0 %v3392
          %3426 = vmatprep.subr.bf16.mxu0 %v3395
          %3427 = vmatpush1.bf16.msra.mxu0 %v3394
          %3428 = vmatprep.subr.bf16.mxu0 %v3397
          %3429 = vmatpush1.bf16.msra.mxu0 %v3396
          %3430 = vmatprep.subr.bf16.mxu0 %v3399
          %3431 = vmatpush1.bf16.msra.mxu0 %v3398
          %3432 = vmatprep.subr.bf16.mxu0 %v3401
          %3433 = vmatpush1.bf16.msra.mxu0 %v3400
          %3434 = vmatprep.subr.bf16.mxu0 %v3403
          %3435 = vmatpush1.bf16.msra.mxu0 %v3402
          %3436 = vmatprep.subr.bf16.mxu0 %v3405
          %3437 = vmatpush1.bf16.msra.mxu0 %v3404
          %3438 = vmatprep.subr.bf16.mxu0 0
          %3439 = vmatpush1.bf16.msra.mxu0 0
          %3440 = vmatprep.subr.bf16.mxu0 0
          %3441 = vmatpush1.bf16.msra.mxu0 0
          %3442 = vmatprep.subr.bf16.mxu0 0
          %3443 = vmatpush1.bf16.msra.mxu0 0
          %3444 = vmatprep.subr.bf16.mxu0 0
          %3445 = vmatpush1.bf16.msra.mxu0 0
          %3446 = vmatprep.subr.bf16.mxu0 0
          %3447 = vmatpush1.bf16.msra.mxu0 0
          %3448 = vmatprep.subr.bf16.mxu0 0
          %3449 = vmatpush1.bf16.msra.mxu0 0
          %3450 = vmatprep.subr.bf16.mxu0 0
          %3451 = vmatpush1.bf16.msra.mxu0 0
          %3452 = vmatprep.subr.bf16.mxu0 0
          %3453 = vmatpush1.bf16.msra.mxu0 0
          %3454 = vmatprep.mubr.bf16.mxu0 0
          %3455 = vmatmul.mubr.bf16.gmra.mrb[0].mxu0 %v3313
          %v3456 = vpop.f32.mrb[0].mxu0
          %v3457 = vadd.f32 %v3335, %v3456
          %v3458 = vpop.f32.mrb[0].mxu0
          %v3459 = vadd.f32 %v3339, %v3458
          %v3460 = vpop.f32.mrb[0].mxu0
          %v3461 = vpop.f32.mrb[0].mxu0
          %3462 = vdwg.mxu0
          %v3463 = vmul.f32 %v3457, 0.5
          %v3464 = vmul.f32 %v3459, 0.5
          %v3465 = vmul.f32 %v3457, 0.044715
          %v3466 = vmul.f32 %v3459, 0.044715
          %v3467 = vmul.f32 %v3465, %v3457
          %v3468 = vmul.f32 %v3466, %v3459
          %v3469 = vmul.f32 %v3467, %v3457
          %v3470 = vmul.f32 %v3468, %v3459
          %v3471 = vadd.f32 %v3457, %v3469
          %v3472 = vadd.f32 %v3459, %v3470
          %v3473 = vmul.f32 %v3471, 0.7978846
          %v3474 = vmul.f32 %v3472, 0.7978846
          %v3475 = vtanh.pop %v3473
          %v3476 = vtanh.pop %v3474
          %v3477 = vadd.f32 %v3475, 1.0
          %v3478 = vadd.f32 %v3476, 1.0
          %v3479 = vmul.f32 %v3463, %v3477
          %v3480 = vmul.f32 %v3464, %v3478
          %v3481 = vpack.c.bf16 %v3479, %v3479
          %v3482 = vpack.c.bf16 %v3480, %v3480
          %v3483 = vld [vmem:[#allocation34] sm:$0xf]
          %v3484 = vld [vmem:[#allocation34 + $0x4] sm:$0xf]
          %v3485 = vld [vmem:[#allocation34 + $0x8] sm:$0xf]
          %v3486 = vld [vmem:[#allocation34 + $0xc] sm:$0xf]
          %v3487 = vld [vmem:[#allocation34 + $0x10] sm:$0xf]
          %v3488 = vld [vmem:[#allocation34 + $0x14] sm:$0xf]
          %v3489 = vld [vmem:[#allocation34 + $0x18] sm:$0xf]
          %v3490 = vld [vmem:[#allocation34 + $0x1c] sm:$0xf]
          %v3491 = vld [vmem:[#allocation34 + $0x20] sm:$0xf]
          %v3492 = vld [vmem:[#allocation34 + $0x24] sm:$0xf]
          %v3493 = vld [vmem:[#allocation34 + $0x28] sm:$0xf]
          %v3494 = vld [vmem:[#allocation34 + $0x2c] sm:$0xf]
          %v3495 = vld [vmem:[#allocation34 + $0x30] sm:$0xf]
          %v3496 = vld [vmem:[#allocation34 + $0x34] sm:$0xf]
          %v3497 = vld [vmem:[#allocation34 + $0x38] sm:$0xf]
          %v3498 = vld [vmem:[#allocation34 + $0x3c] sm:$0xf]
          %v3499 = vld [vmem:[#allocation34 + $0x40] sm:$0xf]
          %v3500 = vld [vmem:[#allocation34 + $0x44] sm:$0xf]
          %v3501 = vld [vmem:[#allocation34 + $0x48] sm:$0xf]
          %v3502 = vld [vmem:[#allocation34 + $0x4c] sm:$0xf]
          %v3503 = vld [vmem:[#allocation34 + $0x50] sm:$0xf]
          %v3504 = vld [vmem:[#allocation34 + $0x54] sm:$0xf]
          %v3505 = vld [vmem:[#allocation34 + $0x58] sm:$0xf]
          %v3506 = vld [vmem:[#allocation34 + $0x5c] sm:$0xf]
          %v3507 = vld [vmem:[#allocation34 + $0x60] sm:$0xf]
          %v3508 = vld [vmem:[#allocation34 + $0x64] sm:$0xf]
          %v3509 = vld [vmem:[#allocation34 + $0x68] sm:$0xf]
          %v3510 = vld [vmem:[#allocation34 + $0x6c] sm:$0xf]
          %v3511 = vld [vmem:[#allocation34 + $0x70] sm:$0xf]
          %v3512 = vld [vmem:[#allocation34 + $0x74] sm:$0xf]
          %v3513 = vld [vmem:[#allocation34 + $0x78] sm:$0xf]
          %v3514 = vld [vmem:[#allocation34 + $0x7c] sm:$0xf]
          %v3515 = vld [vmem:[#allocation36] sm:$0x1]
          %v3517 = vlaneseq
          %v3518 = vshrl.u32 %v3517, 7
          %v3519 = vsub.s32 0, %v3518
          %v3520 = vrot.slane %v3515, %v3519
          %v3554 = vunpack.c.l.b16 %v3483
          %v3555 = vunpack.c.l.b16 %v3484
          %v3556 = vunpack.c.l.b16 %v3485
          %v3557 = vunpack.c.l.b16 %v3486
          %v3558 = vunpack.c.l.b16 %v3487
          %v3559 = vunpack.c.l.b16 %v3488
          %v3560 = vunpack.c.l.b16 %v3489
          %v3561 = vunpack.c.l.b16 %v3490
          %v3562 = vunpack.c.l.b16 %v3491
          %v3563 = vunpack.c.l.b16 %v3492
          %v3564 = vunpack.c.l.b16 %v3493
          %v3565 = vunpack.c.l.b16 %v3494
          %v3566 = vunpack.c.l.b16 %v3495
          %v3567 = vunpack.c.l.b16 %v3496
          %v3568 = vunpack.c.l.b16 %v3497
          %v3569 = vunpack.c.l.b16 %v3498
          %v3570 = vunpack.c.l.b16 %v3499
          %v3571 = vunpack.c.l.b16 %v3500
          %v3572 = vunpack.c.l.b16 %v3501
          %v3573 = vunpack.c.l.b16 %v3502
          %v3574 = vunpack.c.l.b16 %v3503
          %v3575 = vunpack.c.l.b16 %v3504
          %v3576 = vunpack.c.l.b16 %v3505
          %v3577 = vunpack.c.l.b16 %v3506
          %v3578 = vunpack.c.l.b16 %v3507
          %v3579 = vunpack.c.l.b16 %v3508
          %v3580 = vunpack.c.l.b16 %v3509
          %v3581 = vunpack.c.l.b16 %v3510
          %v3582 = vunpack.c.l.b16 %v3511
          %v3583 = vunpack.c.l.b16 %v3512
          %v3584 = vunpack.c.l.b16 %v3513
          %v3585 = vunpack.c.l.b16 %v3514
          %v3586 = vpack.c.b16 %v3555, %v3554
          %v3587 = vpack.c.b16 %v3557, %v3556
          %v3588 = vpack.c.b16 %v3559, %v3558
          %v3589 = vpack.c.b16 %v3561, %v3560
          %v3590 = vpack.c.b16 %v3563, %v3562
          %v3591 = vpack.c.b16 %v3565, %v3564
          %v3592 = vpack.c.b16 %v3567, %v3566
          %v3593 = vpack.c.b16 %v3569, %v3568
          %v3594 = vpack.c.b16 %v3571, %v3570
          %v3595 = vpack.c.b16 %v3573, %v3572
          %v3596 = vpack.c.b16 %v3575, %v3574
          %v3597 = vpack.c.b16 %v3577, %v3576
          %v3598 = vpack.c.b16 %v3579, %v3578
          %v3599 = vpack.c.b16 %v3581, %v3580
          %v3600 = vpack.c.b16 %v3583, %v3582
          %v3601 = vpack.c.b16 %v3585, %v3584
          %3618 = vmatprep.subr.bf16.mxu0 0
          %3619 = vmatpush1.bf16.msra.mxu0 %v3586
          %3620 = vmatprep.subr.bf16.mxu0 0
          %3621 = vmatpush1.bf16.msra.mxu0 %v3587
          %3622 = vmatprep.subr.bf16.mxu0 0
          %3623 = vmatpush1.bf16.msra.mxu0 %v3588
          %3624 = vmatprep.subr.bf16.mxu0 0
          %3625 = vmatpush1.bf16.msra.mxu0 %v3589
          %3626 = vmatprep.subr.bf16.mxu0 0
          %3627 = vmatpush1.bf16.msra.mxu0 %v3590
          %3628 = vmatprep.subr.bf16.mxu0 0
          %3629 = vmatpush1.bf16.msra.mxu0 %v3591
          %3630 = vmatprep.subr.bf16.mxu0 0
          %3631 = vmatpush1.bf16.msra.mxu0 %v3592
          %3632 = vmatprep.subr.bf16.mxu0 0
          %3633 = vmatpush1.bf16.msra.mxu0 %v3593
          %3634 = vmatprep.subr.bf16.mxu0 0
          %3635 = vmatpush1.bf16.msra.mxu0 %v3594
          %3636 = vmatprep.subr.bf16.mxu0 0
          %3637 = vmatpush1.bf16.msra.mxu0 %v3595
          %3638 = vmatprep.subr.bf16.mxu0 0
          %3639 = vmatpush1.bf16.msra.mxu0 %v3596
          %3640 = vmatprep.subr.bf16.mxu0 0
          %3641 = vmatpush1.bf16.msra.mxu0 %v3597
          %3642 = vmatprep.subr.bf16.mxu0 0
          %3643 = vmatpush1.bf16.msra.mxu0 %v3598
          %3644 = vmatprep.subr.bf16.mxu0 0
          %3645 = vmatpush1.bf16.msra.mxu0 %v3599
          %3646 = vmatprep.subr.bf16.mxu0 0
          %3647 = vmatpush1.bf16.msra.mxu0 %v3600
          %3648 = vmatprep.subr.bf16.mxu0 0
          %3649 = vmatpush1.bf16.msra.mxu0 %v3601
          %3650 = vmatprep.mubr.bf16.mxu0 %v3482
          %3651 = vmatmul.mubr.bf16.gmra.mrb[0].mxu0 %v3481
          %v3652 = vpop.f32.mrb[0].mxu0
          %v3653 = vadd.f32 %v3520, %v3652
          %v3654 = vpop.f32.mrb[0].mxu0
          %v3655 = vpop.f32.mrb[0].mxu0
          %v3656 = vpop.f32.mrb[0].mxu0
          %3657 = vdwg.mxu0
          %v3658 = vmul.f32 %v3653, 0.5
          %v3659 = vmul.f32 %v3653, 0.044715
          %v3660 = vmul.f32 %v3659, %v3653
          %v3661 = vmul.f32 %v3660, %v3653
          %v3662 = vadd.f32 %v3653, %v3661
          %v3663 = vmul.f32 %v3662, 0.7978846
          %v3664 = vtanh.pop %v3663
          %v3665 = vadd.f32 %v3664, 1.0
          %v3666 = vmul.f32 %v3658, %v3665
          %v3667 = vpack.c.bf16 %v3666, %v3666
          %v3668 = vld [vmem:[#allocation37] sm:$0xf]
          %v3669 = vld [vmem:[#allocation37 + $0x4] sm:$0xf]
          %v3670 = vld [vmem:[#allocation37 + $0x8] sm:$0xf]
          %v3671 = vld [vmem:[#allocation37 + $0xc] sm:$0xf]
          %v3672 = vld [vmem:[#allocation37 + $0x10] sm:$0xf]
          %v3673 = vld [vmem:[#allocation37 + $0x14] sm:$0xf]
          %v3674 = vld [vmem:[#allocation37 + $0x18] sm:$0xf]
          %v3675 = vld [vmem:[#allocation37 + $0x1c] sm:$0xf]
          %v3676 = vld [vmem:[#allocation37 + $0x20] sm:$0xf]
          %v3677 = vld [vmem:[#allocation37 + $0x24] sm:$0xf]
          %v3678 = vld [vmem:[#allocation37 + $0x28] sm:$0xf]
          %v3679 = vld [vmem:[#allocation37 + $0x2c] sm:$0xf]
          %v3680 = vld [vmem:[#allocation37 + $0x30] sm:$0xf]
          %v3681 = vld [vmem:[#allocation37 + $0x34] sm:$0xf]
          %v3682 = vld [vmem:[#allocation37 + $0x38] sm:$0xf]
          %v3683 = vld [vmem:[#allocation37 + $0x3c] sm:$0xf]
          %v3684 = vld [vmem:[#allocation39] sm:$0x1]
          %v3686 = vlaneseq
          %v3687 = vshrl.u32 %v3686, 7
          %v3688 = vsub.s32 0, %v3687
          %v3689 = vrot.slane %v3684, %v3688
          %v3707 = vunpack.c.l.b16 %v3668
          %v3708 = vunpack.c.l.b16 %v3669
          %v3709 = vunpack.c.l.b16 %v3670
          %v3710 = vunpack.c.l.b16 %v3671
          %v3711 = vunpack.c.l.b16 %v3672
          %v3712 = vunpack.c.l.b16 %v3673
          %v3713 = vunpack.c.l.b16 %v3674
          %v3714 = vunpack.c.l.b16 %v3675
          %v3715 = vunpack.c.l.b16 %v3676
          %v3716 = vunpack.c.l.b16 %v3677
          %v3717 = vunpack.c.l.b16 %v3678
          %v3718 = vunpack.c.l.b16 %v3679
          %v3719 = vunpack.c.l.b16 %v3680
          %v3720 = vunpack.c.l.b16 %v3681
          %v3721 = vunpack.c.l.b16 %v3682
          %v3722 = vunpack.c.l.b16 %v3683
          %v3723 = vpack.c.b16 %v3708, %v3707
          %v3724 = vpack.c.b16 %v3710, %v3709
          %v3725 = vpack.c.b16 %v3712, %v3711
          %v3726 = vpack.c.b16 %v3714, %v3713
          %v3727 = vpack.c.b16 %v3716, %v3715
          %v3728 = vpack.c.b16 %v3718, %v3717
          %v3729 = vpack.c.b16 %v3720, %v3719
          %v3730 = vpack.c.b16 %v3722, %v3721
          %3739 = vmatprep.subr.bf16.mxu0 0
          %3740 = vmatpush1.bf16.msra.mxu0 %v3723
          %3741 = vmatprep.subr.bf16.mxu0 0
          %3742 = vmatpush1.bf16.msra.mxu0 %v3724
          %3743 = vmatprep.subr.bf16.mxu0 0
          %3744 = vmatpush1.bf16.msra.mxu0 %v3725
          %3745 = vmatprep.subr.bf16.mxu0 0
          %3746 = vmatpush1.bf16.msra.mxu0 %v3726
          %3747 = vmatprep.subr.bf16.mxu0 0
          %3748 = vmatpush1.bf16.msra.mxu0 %v3727
          %3749 = vmatprep.subr.bf16.mxu0 0
          %3750 = vmatpush1.bf16.msra.mxu0 %v3728
          %3751 = vmatprep.subr.bf16.mxu0 0
          %3752 = vmatpush1.bf16.msra.mxu0 %v3729
          %3753 = vmatprep.subr.bf16.mxu0 0
          %3754 = vmatpush1.bf16.msra.mxu0 %v3730
          %3755 = vmatprep.subr.bf16.mxu0 0
          %3756 = vmatpush1.bf16.msra.mxu0 0
          %3757 = vmatprep.subr.bf16.mxu0 0
          %3758 = vmatpush1.bf16.msra.mxu0 0
          %3759 = vmatprep.subr.bf16.mxu0 0
          %3760 = vmatpush1.bf16.msra.mxu0 0
          %3761 = vmatprep.subr.bf16.mxu0 0
          %3762 = vmatpush1.bf16.msra.mxu0 0
          %3763 = vmatprep.subr.bf16.mxu0 0
          %3764 = vmatpush1.bf16.msra.mxu0 0
          %3765 = vmatprep.subr.bf16.mxu0 0
          %3766 = vmatpush1.bf16.msra.mxu0 0
          %3767 = vmatprep.subr.bf16.mxu0 0
          %3768 = vmatpush1.bf16.msra.mxu0 0
          %3769 = vmatprep.subr.bf16.mxu0 0
          %3770 = vmatpush1.bf16.msra.mxu0 0
          %3771 = vmatprep.mubr.bf16.mxu0 0
          %3772 = vmatmul.mubr.bf16.gmra.mrb[0].mxu0 %v3667
          %v3773 = vpop.f32.mrb[0].mxu0
          %v3774 = vadd.f32 %v3689, %v3773
          %v3775 = vpop.f32.mrb[0].mxu0
          %v3776 = vpop.f32.mrb[0].mxu0
          %v3777 = vpop.f32.mrb[0].mxu0
          %3778 = vdwg.mxu0
          %vm3779 = vcmask 17408
          %3780 = vst.msk [vmem:[#allocation51] sm:$0x3] %vm3779, %v3774
          %v3781 = vld [vmem:[#allocation40] sm:$0xf]
          %v3782 = vld [vmem:[#allocation40 + $0x4] sm:$0xf]
          %v3783 = vld [vmem:[#allocation40 + $0x8] sm:$0xf]
          %v3784 = vld [vmem:[#allocation40 + $0xc] sm:$0xf]
          %v3785 = vld [vmem:[#allocation42] sm:$0x1]
          %v3787 = vlaneseq
          %v3788 = vshrl.u32 %v3787, 7
          %v3789 = vsub.s32 0, %v3788
          %v3790 = vrot.slane %v3785, %v3789
          %v3796 = vunpack.c.l.b16 %v3781
          %v3797 = vunpack.c.l.b16 %v3782
          %v3798 = vunpack.c.l.b16 %v3783
          %v3799 = vunpack.c.l.b16 %v3784
          %v3800 = vpack.c.b16 %v3797, %v3796
          %v3801 = vpack.c.b16 %v3799, %v3798
          %3804 = vmatprep.subr.bf16.mxu0 0
          %3805 = vmatpush1.bf16.msra.mxu0 %v3800
          %3806 = vmatprep.subr.bf16.mxu0 0
          %3807 = vmatpush1.bf16.msra.mxu0 %v3801
          %3808 = vmatprep.subr.bf16.mxu0 0
          %3809 = vmatpush1.bf16.msra.mxu0 0
          %3810 = vmatprep.subr.bf16.mxu0 0
          %3811 = vmatpush1.bf16.msra.mxu0 0
          %3812 = vmatprep.subr.bf16.mxu0 0
          %3813 = vmatpush1.bf16.msra.mxu0 0
          %3814 = vmatprep.subr.bf16.mxu0 0
          %3815 = vmatpush1.bf16.msra.mxu0 0
          %3816 = vmatprep.subr.bf16.mxu0 0
          %3817 = vmatpush1.bf16.msra.mxu0 0
          %3818 = vmatprep.subr.bf16.mxu0 0
          %3819 = vmatpush1.bf16.msra.mxu0 0
          %3820 = vmatprep.subr.bf16.mxu0 0
          %3821 = vmatpush1.bf16.msra.mxu0 0
          %3822 = vmatprep.subr.bf16.mxu0 0
          %3823 = vmatpush1.bf16.msra.mxu0 0
          %3824 = vmatprep.subr.bf16.mxu0 0
          %3825 = vmatpush1.bf16.msra.mxu0 0
          %3826 = vmatprep.subr.bf16.mxu0 0
          %3827 = vmatpush1.bf16.msra.mxu0 0
          %3828 = vmatprep.subr.bf16.mxu0 0
          %3829 = vmatpush1.bf16.msra.mxu0 0
          %3830 = vmatprep.subr.bf16.mxu0 0
          %3831 = vmatpush1.bf16.msra.mxu0 0
          %3832 = vmatprep.subr.bf16.mxu0 0
          %3833 = vmatpush1.bf16.msra.mxu0 0
          %3834 = vmatprep.subr.bf16.mxu0 0
          %3835 = vmatpush1.bf16.msra.mxu0 0
          %3836 = vmatprep.mubr.bf16.mxu0 0
          %3837 = vmatmul.mubr.bf16.gmra.mrb[0].mxu0 %v3262
          %v3838 = vpop.f32.mrb[0].mxu0
          %v3839 = vadd.f32 %v3790, %v3838
          %v3840 = vpop.f32.mrb[0].mxu0
          %v3841 = vpop.f32.mrb[0].mxu0
          %v3842 = vpop.f32.mrb[0].mxu0
          %3843 = vdwg.mxu0
          %v3844 = vmul.f32 %v3839, 0.5
          %v3845 = vmul.f32 %v3839, 0.044715
          %v3846 = vmul.f32 %v3845, %v3839
          %v3847 = vmul.f32 %v3846, %v3839
          %v3848 = vadd.f32 %v3839, %v3847
          %v3849 = vmul.f32 %v3848, 0.7978846
          %v3850 = vtanh.pop %v3849
          %v3851 = vadd.f32 %v3850, 1.0
          %v3852 = vmul.f32 %v3844, %v3851
          %v3853 = vpack.c.bf16 %v3852, %v3852
          %v3854 = vld [vmem:[#allocation43] sm:$0xff]
          %v3855 = vld [vmem:[#allocation43 + $0x8] sm:$0xff]
          %v3856 = vld [vmem:[#allocation43 + $0x10] sm:$0xff]
          %v3857 = vld [vmem:[#allocation43 + $0x18] sm:$0xff]
          %v3858 = vld [vmem:[#allocation43 + $0x20] sm:$0xff]
          %v3859 = vld [vmem:[#allocation43 + $0x28] sm:$0xff]
          %v3860 = vld [vmem:[#allocation43 + $0x30] sm:$0xff]
          %v3861 = vld [vmem:[#allocation43 + $0x38] sm:$0xff]
          %v3862 = vld [vmem:[#allocation43 + $0x40] sm:$0xff]
          %v3863 = vld [vmem:[#allocation43 + $0x48] sm:$0xff]
          %v3864 = vld [vmem:[#allocation43 + $0x50] sm:$0xff]
          %v3865 = vld [vmem:[#allocation43 + $0x58] sm:$0xff]
          %v3866 = vld [vmem:[#allocation43 + $0x60] sm:$0xff]
          %v3867 = vld [vmem:[#allocation43 + $0x68] sm:$0xff]
          %v3868 = vld [vmem:[#allocation43 + $0x70] sm:$0xff]
          %v3869 = vld [vmem:[#allocation43 + $0x78] sm:$0xff]
          %v3870 = vld [vmem:[#allocation45] sm:$0x3]
          %v3872 = vlaneseq
          %v3873 = vshrl.u32 %v3872, 7
          %v3874 = vsub.s32 0, %v3873
          %v3875 = vrot.slane %v3870, %v3874
          %v3876 = vlaneseq
          %v3877 = vshrl.u32 %v3876, 7
          %v3878 = vsub.s32 1, %v3877
          %v3879 = vrot.slane %v3870, %v3878
          %v3898 = vunpack.c.l.b16 %v3854
          %v3899 = vunpack.c.h.b16 %v3854
          %v3900 = vunpack.c.l.b16 %v3855
          %v3901 = vunpack.c.h.b16 %v3855
          %v3902 = vunpack.c.l.b16 %v3856
          %v3903 = vunpack.c.h.b16 %v3856
          %v3904 = vunpack.c.l.b16 %v3857
          %v3905 = vunpack.c.h.b16 %v3857
          %v3906 = vunpack.c.l.b16 %v3858
          %v3907 = vunpack.c.h.b16 %v3858
          %v3908 = vunpack.c.l.b16 %v3859
          %v3909 = vunpack.c.h.b16 %v3859
          %v3910 = vunpack.c.l.b16 %v3860
          %v3911 = vunpack.c.h.b16 %v3860
          %v3912 = vunpack.c.l.b16 %v3861
          %v3913 = vunpack.c.h.b16 %v3861
          %v3914 = vunpack.c.l.b16 %v3862
          %v3915 = vunpack.c.h.b16 %v3862
          %v3916 = vunpack.c.l.b16 %v3863
          %v3917 = vunpack.c.h.b16 %v3863
          %v3918 = vunpack.c.l.b16 %v3864
          %v3919 = vunpack.c.h.b16 %v3864
          %v3920 = vunpack.c.l.b16 %v3865
          %v3921 = vunpack.c.h.b16 %v3865
          %v3922 = vunpack.c.l.b16 %v3866
          %v3923 = vunpack.c.h.b16 %v3866
          %v3924 = vunpack.c.l.b16 %v3867
          %v3925 = vunpack.c.h.b16 %v3867
          %v3926 = vunpack.c.l.b16 %v3868
          %v3927 = vunpack.c.h.b16 %v3868
          %v3928 = vunpack.c.l.b16 %v3869
          %v3929 = vunpack.c.h.b16 %v3869
          %v3930 = vpack.c.b16 %v3900, %v3898
          %v3931 = vpack.c.b16 %v3901, %v3899
          %v3932 = vpack.c.b16 %v3904, %v3902
          %v3933 = vpack.c.b16 %v3905, %v3903
          %v3934 = vpack.c.b16 %v3908, %v3906
          %v3935 = vpack.c.b16 %v3909, %v3907
          %v3936 = vpack.c.b16 %v3912, %v3910
          %v3937 = vpack.c.b16 %v3913, %v3911
          %v3938 = vpack.c.b16 %v3916, %v3914
          %v3939 = vpack.c.b16 %v3917, %v3915
          %v3940 = vpack.c.b16 %v3920, %v3918
          %v3941 = vpack.c.b16 %v3921, %v3919
          %v3942 = vpack.c.b16 %v3924, %v3922
          %v3943 = vpack.c.b16 %v3925, %v3923
          %v3944 = vpack.c.b16 %v3928, %v3926
          %v3945 = vpack.c.b16 %v3929, %v3927
          %3962 = vmatprep.subr.bf16.mxu0 %v3931
          %3963 = vmatpush1.bf16.msra.mxu0 %v3930
          %3964 = vmatprep.subr.bf16.mxu0 %v3933
          %3965 = vmatpush1.bf16.msra.mxu0 %v3932
          %3966 = vmatprep.subr.bf16.mxu0 %v3935
          %3967 = vmatpush1.bf16.msra.mxu0 %v3934
          %3968 = vmatprep.subr.bf16.mxu0 %v3937
          %3969 = vmatpush1.bf16.msra.mxu0 %v3936
          %3970 = vmatprep.subr.bf16.mxu0 %v3939
          %3971 = vmatpush1.bf16.msra.mxu0 %v3938
          %3972 = vmatprep.subr.bf16.mxu0 %v3941
          %3973 = vmatpush1.bf16.msra.mxu0 %v3940
          %3974 = vmatprep.subr.bf16.mxu0 %v3943
          %3975 = vmatpush1.bf16.msra.mxu0 %v3942
          %3976 = vmatprep.subr.bf16.mxu0 %v3945
          %3977 = vmatpush1.bf16.msra.mxu0 %v3944
          %3978 = vmatprep.subr.bf16.mxu0 0
          %3979 = vmatpush1.bf16.msra.mxu0 0
          %3980 = vmatprep.subr.bf16.mxu0 0
          %3981 = vmatpush1.bf16.msra.mxu0 0
          %3982 = vmatprep.subr.bf16.mxu0 0
          %3983 = vmatpush1.bf16.msra.mxu0 0
          %3984 = vmatprep.subr.bf16.mxu0 0
          %3985 = vmatpush1.bf16.msra.mxu0 0
          %3986 = vmatprep.subr.bf16.mxu0 0
          %3987 = vmatpush1.bf16.msra.mxu0 0
          %3988 = vmatprep.subr.bf16.mxu0 0
          %3989 = vmatpush1.bf16.msra.mxu0 0
          %3990 = vmatprep.subr.bf16.mxu0 0
          %3991 = vmatpush1.bf16.msra.mxu0 0
          %3992 = vmatprep.subr.bf16.mxu0 0
          %3993 = vmatpush1.bf16.msra.mxu0 0
          %3994 = vmatprep.mubr.bf16.mxu0 0
          %3995 = vmatmul.mubr.bf16.gmra.mrb[0].mxu0 %v3853
          %v3996 = vpop.f32.mrb[0].mxu0
          %v3997 = vadd.f32 %v3875, %v3996
          %v3998 = vpop.f32.mrb[0].mxu0
          %v3999 = vadd.f32 %v3879, %v3998
          %v4000 = vpop.f32.mrb[0].mxu0
          %v4001 = vpop.f32.mrb[0].mxu0
          %4002 = vdwg.mxu0
          %v4003 = vmul.f32 %v3997, 0.5
          %v4004 = vmul.f32 %v3999, 0.5
          %v4005 = vmul.f32 %v3997, 0.044715
          %v4006 = vmul.f32 %v3999, 0.044715
          %v4007 = vmul.f32 %v4005, %v3997
          %v4008 = vmul.f32 %v4006, %v3999
          %v4009 = vmul.f32 %v4007, %v3997
          %v4010 = vmul.f32 %v4008, %v3999
          %v4011 = vadd.f32 %v3997, %v4009
          %v4012 = vadd.f32 %v3999, %v4010
          %v4013 = vmul.f32 %v4011, 0.7978846
          %v4014 = vmul.f32 %v4012, 0.7978846
          %v4015 = vtanh.pop %v4013
          %v4016 = vtanh.pop %v4014
          %v4017 = vadd.f32 %v4015, 1.0
          %v4018 = vadd.f32 %v4016, 1.0
          %v4019 = vmul.f32 %v4003, %v4017
          %v4020 = vmul.f32 %v4004, %v4018
          %v4021 = vpack.c.bf16 %v4019, %v4019
          %v4022 = vpack.c.bf16 %v4020, %v4020
          %v4023 = vld [vmem:[#allocation46] sm:$0xf]
          %v4024 = vld [vmem:[#allocation46 + $0x4] sm:$0xf]
          %v4025 = vld [vmem:[#allocation46 + $0x8] sm:$0xf]
          %v4026 = vld [vmem:[#allocation46 + $0xc] sm:$0xf]
          %v4027 = vld [vmem:[#allocation46 + $0x10] sm:$0xf]
          %v4028 = vld [vmem:[#allocation46 + $0x14] sm:$0xf]
          %v4029 = vld [vmem:[#allocation46 + $0x18] sm:$0xf]
          %v4030 = vld [vmem:[#allocation46 + $0x1c] sm:$0xf]
          %v4031 = vld [vmem:[#allocation46 + $0x20] sm:$0xf]
          %v4032 = vld [vmem:[#allocation46 + $0x24] sm:$0xf]
          %v4033 = vld [vmem:[#allocation46 + $0x28] sm:$0xf]
          %v4034 = vld [vmem:[#allocation46 + $0x2c] sm:$0xf]
          %v4035 = vld [vmem:[#allocation46 + $0x30] sm:$0xf]
          %v4036 = vld [vmem:[#allocation46 + $0x34] sm:$0xf]
          %v4037 = vld [vmem:[#allocation46 + $0x38] sm:$0xf]
          %v4038 = vld [vmem:[#allocation46 + $0x3c] sm:$0xf]
          %v4039 = vld [vmem:[#allocation46 + $0x40] sm:$0xf]
          %v4040 = vld [vmem:[#allocation46 + $0x44] sm:$0xf]
          %v4041 = vld [vmem:[#allocation46 + $0x48] sm:$0xf]
          %v4042 = vld [vmem:[#allocation46 + $0x4c] sm:$0xf]
          %v4043 = vld [vmem:[#allocation46 + $0x50] sm:$0xf]
          %v4044 = vld [vmem:[#allocation46 + $0x54] sm:$0xf]
          %v4045 = vld [vmem:[#allocation46 + $0x58] sm:$0xf]
          %v4046 = vld [vmem:[#allocation46 + $0x5c] sm:$0xf]
          %v4047 = vld [vmem:[#allocation46 + $0x60] sm:$0xf]
          %v4048 = vld [vmem:[#allocation46 + $0x64] sm:$0xf]
          %v4049 = vld [vmem:[#allocation46 + $0x68] sm:$0xf]
          %v4050 = vld [vmem:[#allocation46 + $0x6c] sm:$0xf]
          %v4051 = vld [vmem:[#allocation46 + $0x70] sm:$0xf]
          %v4052 = vld [vmem:[#allocation46 + $0x74] sm:$0xf]
          %v4053 = vld [vmem:[#allocation46 + $0x78] sm:$0xf]
          %v4054 = vld [vmem:[#allocation46 + $0x7c] sm:$0xf]
          %v4055 = vld [vmem:[#allocation48] sm:$0x1]
          %v4057 = vlaneseq
          %v4058 = vshrl.u32 %v4057, 7
          %v4059 = vsub.s32 0, %v4058
          %v4060 = vrot.slane %v4055, %v4059
          %v4094 = vunpack.c.l.b16 %v4023
          %v4095 = vunpack.c.l.b16 %v4024
          %v4096 = vunpack.c.l.b16 %v4025
          %v4097 = vunpack.c.l.b16 %v4026
          %v4098 = vunpack.c.l.b16 %v4027
          %v4099 = vunpack.c.l.b16 %v4028
          %v4100 = vunpack.c.l.b16 %v4029
          %v4101 = vunpack.c.l.b16 %v4030
          %v4102 = vunpack.c.l.b16 %v4031
          %v4103 = vunpack.c.l.b16 %v4032
          %v4104 = vunpack.c.l.b16 %v4033
          %v4105 = vunpack.c.l.b16 %v4034
          %v4106 = vunpack.c.l.b16 %v4035
          %v4107 = vunpack.c.l.b16 %v4036
          %v4108 = vunpack.c.l.b16 %v4037
          %v4109 = vunpack.c.l.b16 %v4038
          %v4110 = vunpack.c.l.b16 %v4039
          %v4111 = vunpack.c.l.b16 %v4040
          %v4112 = vunpack.c.l.b16 %v4041
          %v4113 = vunpack.c.l.b16 %v4042
          %v4114 = vunpack.c.l.b16 %v4043
          %v4115 = vunpack.c.l.b16 %v4044
          %v4116 = vunpack.c.l.b16 %v4045
          %v4117 = vunpack.c.l.b16 %v4046
          %v4118 = vunpack.c.l.b16 %v4047
          %v4119 = vunpack.c.l.b16 %v4048
          %v4120 = vunpack.c.l.b16 %v4049
          %v4121 = vunpack.c.l.b16 %v4050
          %v4122 = vunpack.c.l.b16 %v4051
          %v4123 = vunpack.c.l.b16 %v4052
          %v4124 = vunpack.c.l.b16 %v4053
          %v4125 = vunpack.c.l.b16 %v4054
          %v4126 = vpack.c.b16 %v4095, %v4094
          %v4127 = vpack.c.b16 %v4097, %v4096
          %v4128 = vpack.c.b16 %v4099, %v4098
          %v4129 = vpack.c.b16 %v4101, %v4100
          %v4130 = vpack.c.b16 %v4103, %v4102
          %v4131 = vpack.c.b16 %v4105, %v4104
          %v4132 = vpack.c.b16 %v4107, %v4106
          %v4133 = vpack.c.b16 %v4109, %v4108
          %v4134 = vpack.c.b16 %v4111, %v4110
          %v4135 = vpack.c.b16 %v4113, %v4112
          %v4136 = vpack.c.b16 %v4115, %v4114
          %v4137 = vpack.c.b16 %v4117, %v4116
          %v4138 = vpack.c.b16 %v4119, %v4118
          %v4139 = vpack.c.b16 %v4121, %v4120
          %v4140 = vpack.c.b16 %v4123, %v4122
          %v4141 = vpack.c.b16 %v4125, %v4124
          %4158 = vmatprep.subr.bf16.mxu0 0
          %4159 = vmatpush1.bf16.msra.mxu0 %v4126
          %4160 = vmatprep.subr.bf16.mxu0 0
          %4161 = vmatpush1.bf16.msra.mxu0 %v4127
          %4162 = vmatprep.subr.bf16.mxu0 0
          %4163 = vmatpush1.bf16.msra.mxu0 %v4128
          %4164 = vmatprep.subr.bf16.mxu0 0
          %4165 = vmatpush1.bf16.msra.mxu0 %v4129
          %4166 = vmatprep.subr.bf16.mxu0 0
          %4167 = vmatpush1.bf16.msra.mxu0 %v4130
          %4168 = vmatprep.subr.bf16.mxu0 0
          %4169 = vmatpush1.bf16.msra.mxu0 %v4131
          %4170 = vmatprep.subr.bf16.mxu0 0
          %4171 = vmatpush1.bf16.msra.mxu0 %v4132
          %4172 = vmatprep.subr.bf16.mxu0 0
          %4173 = vmatpush1.bf16.msra.mxu0 %v4133
          %4174 = vmatprep.subr.bf16.mxu0 0
          %4175 = vmatpush1.bf16.msra.mxu0 %v4134
          %4176 = vmatprep.subr.bf16.mxu0 0
          %4177 = vmatpush1.bf16.msra.mxu0 %v4135
          %4178 = vmatprep.subr.bf16.mxu0 0
          %4179 = vmatpush1.bf16.msra.mxu0 %v4136
          %4180 = vmatprep.subr.bf16.mxu0 0
          %4181 = vmatpush1.bf16.msra.mxu0 %v4137
          %4182 = vmatprep.subr.bf16.mxu0 0
          %4183 = vmatpush1.bf16.msra.mxu0 %v4138
          %4184 = vmatprep.subr.bf16.mxu0 0
          %4185 = vmatpush1.bf16.msra.mxu0 %v4139
          %4186 = vmatprep.subr.bf16.mxu0 0
          %4187 = vmatpush1.bf16.msra.mxu0 %v4140
          %4188 = vmatprep.subr.bf16.mxu0 0
          %4189 = vmatpush1.bf16.msra.mxu0 %v4141
          %4190 = vmatprep.mubr.bf16.mxu0 %v4022
          %4191 = vmatmul.mubr.bf16.gmra.mrb[0].mxu0 %v4021
          %v4192 = vpop.f32.mrb[0].mxu0
          %v4193 = vadd.f32 %v4060, %v4192
          %v4194 = vpop.f32.mrb[0].mxu0
          %v4195 = vpop.f32.mrb[0].mxu0
          %v4196 = vpop.f32.mrb[0].mxu0
          %4197 = vdwg.mxu0
          %v4198 = vmul.f32 %v4193, 0.5
          %v4199 = vmul.f32 %v4193, 0.044715
          %v4200 = vmul.f32 %v4199, %v4193
          %v4201 = vmul.f32 %v4200, %v4193
          %v4202 = vadd.f32 %v4193, %v4201
          %v4203 = vmul.f32 %v4202, 0.7978846
          %v4204 = vtanh.pop %v4203
          %v4205 = vadd.f32 %v4204, 1.0
          %v4206 = vmul.f32 %v4198, %v4205
          %v4207 = vpack.c.bf16 %v4206, %v4206
          %v4208 = vld [vmem:[#allocation49] sm:$0xf]
          %v4209 = vld [vmem:[#allocation49 + $0x4] sm:$0xf]
          %v4210 = vld [vmem:[#allocation49 + $0x8] sm:$0xf]
          %v4211 = vld [vmem:[#allocation49 + $0xc] sm:$0xf]
          %v4212 = vld [vmem:[#allocation49 + $0x10] sm:$0xf]
          %v4213 = vld [vmem:[#allocation49 + $0x14] sm:$0xf]
          %v4214 = vld [vmem:[#allocation49 + $0x18] sm:$0xf]
          %v4215 = vld [vmem:[#allocation49 + $0x1c] sm:$0xf]
          %v4216 = vld [vmem:[#allocation49 + $0x20] sm:$0xf]
          %v4217 = vld [vmem:[#allocation49 + $0x24] sm:$0xf]
          %v4218 = vld [vmem:[#allocation49 + $0x28] sm:$0xf]
          %v4219 = vld [vmem:[#allocation49 + $0x2c] sm:$0xf]
          %v4220 = vld [vmem:[#allocation49 + $0x30] sm:$0xf]
          %v4221 = vld [vmem:[#allocation49 + $0x34] sm:$0xf]
          %v4222 = vld [vmem:[#allocation49 + $0x38] sm:$0xf]
          %v4223 = vld [vmem:[#allocation49 + $0x3c] sm:$0xf]
          %v4224 = vld [vmem:[#allocation3] sm:$0x1]
          %v4226 = vlaneseq
          %v4227 = vshrl.u32 %v4226, 7
          %v4228 = vsub.s32 0, %v4227
          %v4229 = vrot.slane %v4224, %v4228
          %v4247 = vunpack.c.l.b16 %v4208
          %v4248 = vunpack.c.l.b16 %v4209
          %v4249 = vunpack.c.l.b16 %v4210
          %v4250 = vunpack.c.l.b16 %v4211
          %v4251 = vunpack.c.l.b16 %v4212
          %v4252 = vunpack.c.l.b16 %v4213
          %v4253 = vunpack.c.l.b16 %v4214
          %v4254 = vunpack.c.l.b16 %v4215
          %v4255 = vunpack.c.l.b16 %v4216
          %v4256 = vunpack.c.l.b16 %v4217
          %v4257 = vunpack.c.l.b16 %v4218
          %v4258 = vunpack.c.l.b16 %v4219
          %v4259 = vunpack.c.l.b16 %v4220
          %v4260 = vunpack.c.l.b16 %v4221
          %v4261 = vunpack.c.l.b16 %v4222
          %v4262 = vunpack.c.l.b16 %v4223
          %v4263 = vpack.c.b16 %v4248, %v4247
          %v4264 = vpack.c.b16 %v4250, %v4249
          %v4265 = vpack.c.b16 %v4252, %v4251
          %v4266 = vpack.c.b16 %v4254, %v4253
          %v4267 = vpack.c.b16 %v4256, %v4255
          %v4268 = vpack.c.b16 %v4258, %v4257
          %v4269 = vpack.c.b16 %v4260, %v4259
          %v4270 = vpack.c.b16 %v4262, %v4261
          %4279 = vmatprep.subr.bf16.mxu0 0
          %4280 = vmatpush1.bf16.msra.mxu0 %v4263
          %4281 = vmatprep.subr.bf16.mxu0 0
          %4282 = vmatpush1.bf16.msra.mxu0 %v4264
          %4283 = vmatprep.subr.bf16.mxu0 0
          %4284 = vmatpush1.bf16.msra.mxu0 %v4265
          %4285 = vmatprep.subr.bf16.mxu0 0
          %4286 = vmatpush1.bf16.msra.mxu0 %v4266
          %4287 = vmatprep.subr.bf16.mxu0 0
          %4288 = vmatpush1.bf16.msra.mxu0 %v4267
          %4289 = vmatprep.subr.bf16.mxu0 0
          %4290 = vmatpush1.bf16.msra.mxu0 %v4268
          %4291 = vmatprep.subr.bf16.mxu0 0
          %4292 = vmatpush1.bf16.msra.mxu0 %v4269
          %4293 = vmatprep.subr.bf16.mxu0 0
          %4294 = vmatpush1.bf16.msra.mxu0 %v4270
          %4295 = vmatprep.subr.bf16.mxu0 0
          %4296 = vmatpush1.bf16.msra.mxu0 0
          %4297 = vmatprep.subr.bf16.mxu0 0
          %4298 = vmatpush1.bf16.msra.mxu0 0
          %4299 = vmatprep.subr.bf16.mxu0 0
          %4300 = vmatpush1.bf16.msra.mxu0 0
          %4301 = vmatprep.subr.bf16.mxu0 0
          %4302 = vmatpush1.bf16.msra.mxu0 0
          %4303 = vmatprep.subr.bf16.mxu0 0
          %4304 = vmatpush1.bf16.msra.mxu0 0
          %4305 = vmatprep.subr.bf16.mxu0 0
          %4306 = vmatpush1.bf16.msra.mxu0 0
          %4307 = vmatprep.subr.bf16.mxu0 0
          %4308 = vmatpush1.bf16.msra.mxu0 0
          %4309 = vmatprep.subr.bf16.mxu0 0
          %4310 = vmatpush1.bf16.msra.mxu0 0
          %4311 = vmatprep.mubr.bf16.mxu0 0
          %4312 = vmatmul.mubr.bf16.gmra.mrb[0].mxu0 %v4207
          %v4313 = vpop.f32.mrb[0].mxu0
          %v4314 = vadd.f32 %v4229, %v4313
          %v4315 = vpop.f32.mrb[0].mxu0
          %v4316 = vpop.f32.mrb[0].mxu0
          %v4317 = vpop.f32.mrb[0].mxu0
          %4318 = vdwg.mxu0
          %vm4319 = vcmask 1024
          %4320 = vst.msk [vmem:[#allocation52] sm:$0x3] %vm4319, %v4314
        $region272: #{forward.3} parent=143 // pred_fallthru
          _
        // Predicated region
        $region273: #{forward.3} parent=143 // pred_check
          %p4321 = pneg %p855
        $region274: #{forward.3} parent=143 // pred_check_branch
          %4323 = sbr.rel (%p4321) target = $region276
        $region275: #{forward.3} parent=143 // pred_region
          %s4325 = ssub.s32 32, 32
          %4326 = vsyncadd [#allocation6], %s4325
          %s4327 = smul.addr %s113, 32
          %s4328 = scalar_lea.hbm %s63, %s4327
          %s4330 = sshll.u32 [#allocation51], 4
          %s4331 = int_to_ptr.vmem [resolvable:$true] %s4330
          %4333 = dma.vmem_to_hbm [thread:$0]  %s4331, 32, %s4328, [#allocation6]
        $region276: #{forward.3} parent=143 // pred_fallthru
          _
        // Predicated region
        $region277: #{forward.3} parent=143 // pred_check
          %p4334 = pneg %p881
        $region278: #{forward.3} parent=143 // pred_check_branch
          %4336 = sbr.rel (%p4334) target = $region280
        $region279: #{forward.3} parent=143 // pred_region
          %s4338 = ssub.s32 32, 32
          %4339 = vsyncadd [#allocation53], %s4338
          %s4340 = smul.addr %s113, 32
          %s4341 = scalar_lea.hbm %s65, %s4340
          %s4343 = sshll.u32 [#allocation52], 4
          %s4344 = int_to_ptr.vmem [resolvable:$true] %s4343
          %4346 = dma.vmem_to_hbm [thread:$0]  %s4344, 32, %s4341, [#allocation53]
        $region280: #{forward.3} parent=143 // pred_fallthru
          _
        // Predicated region
        $region281: #{forward.3} parent=143 // pred_check
          %p4347 = pneg %p855
        $region282: #{forward.3} parent=143 // pred_check_branch
          %4349 = sbr.rel (%p4347) target = $region284
        $region283: #{forward.3} parent=143 // pred_region
          %4350 = dma.done [#allocation6], 32
        $region284: #{forward.3} parent=143 // pred_fallthru
          _
        // Predicated region
        $region285: #{forward.3} parent=143 // pred_check
          %p4351 = pneg %p881
        $region286: #{forward.3} parent=143 // pred_check_branch
          %4353 = sbr.rel (%p4351) target = $region288
        $region287: #{forward.3} parent=143 // pred_region
          %4354 = dma.done [#allocation53], 32
        $region288: #{forward.3} parent=143 // pred_fallthru
          _
      $region144: #{forward.3} parent=5 // pred_fallthru
        _
      %p4355 = scmp.le.s32.totalorder 2, %s104
      // Predicated region
      $region289: #{forward.3} parent=5 // pred_check
        %p4356 = pneg %p4355
      $region290: #{forward.3} parent=5 // pred_check_branch
        %4358 = sbr.rel (%p4356) target = $region292
      $region291: #{forward.3} parent=5 // pred_region
        %s4359 = ssub.s32 %s104, 2
      $region292: #{forward.3} parent=5 // pred_fallthru
        _
    $region6: #{forward.3} parent=1 // loop_footer
      %s108 = sadd.s32 1, %s104
    $region7: #{forward.3} parent=1 // loop_footer_branch
      %103 = sbr.rel target = $region3
    $region8: #{forward.3} parent=1 // loop_exit
      _
    %4360 = vsyncpa [#allocation5], 1
    %s4361 = scalar_lea.sflag [#allocation5], 1
    %4362 = vsyncpa %s4361, 1
    %4363 = vsyncpa [#allocation8], 1
    %s4364 = scalar_lea.sflag [#allocation8], 1
    %4365 = vsyncpa %s4364, 1
    %4366 = vsyncpa [#allocation11], 1
    %s4367 = scalar_lea.sflag [#allocation11], 1
    %4368 = vsyncpa %s4367, 1
    %4369 = vsyncpa [#allocation14], 1
    %s4370 = scalar_lea.sflag [#allocation14], 1
    %4371 = vsyncpa %s4370, 1
    %4372 = vsyncpa [#allocation17], 1
    %s4373 = scalar_lea.sflag [#allocation17], 1
    %4374 = vsyncpa %s4373, 1
    %4375 = vsyncpa [#allocation20], 1
    %s4376 = scalar_lea.sflag [#allocation20], 1
    %4377 = vsyncpa %s4376, 1
    %4378 = vsyncpa [#allocation23], 1
    %s4379 = scalar_lea.sflag [#allocation23], 1
    %4380 = vsyncpa %s4379, 1
    %4381 = vsyncpa [#allocation26], 1
    %4382 = vsyncpa [#allocation29], 1
    %4383 = vsyncpa [#allocation32], 1
    %4384 = vsyncpa [#allocation35], 1
    %4385 = vsyncpa [#allocation38], 1
    %4386 = vsyncpa [#allocation41], 1
    %4387 = vsyncpa [#allocation44], 1
    %4388 = vsyncpa [#allocation47], 1
    %4389 = vsyncpa [#allocation50], 1
    %4390 = vsyncpa [#allocation6], 1
    %s4391 = scalar_lea.sflag [#allocation6], 1
    %4392 = vsyncpa %s4391, 1
    %4393 = vsyncpa [#allocation53], 1

</llo_original>
